<compile_context>
chip_gen: v5e
topology: v5e:2x2
jax: 0.10.0
libtpu: 0.0.40
codegen_flags: <defaults>
</compile_context>

<pallas_src>
import jax
import jax.numpy as jnp
from jax.experimental import pallas as pl
from jax.experimental.pallas import tpu as pltpu

NEG_SLOPE = 0.3   # LeakyReLU(0.3)
BN_EPS = 1e-5

# fc1 streaming configuration (single config valid on v5e / v6e / v7x).
FC1_TN = 512                     # output-column slab width  (1024 = 2 slabs)
FC1_TK = 16000                   # reduction chunk (multiple of 128, divides 32000)
FC1_VMEM_LIMIT = 48 * 1024 * 1024  # 2 x 15.6 MiB W buffers + small operands < 48 MiB
                                   # (<= v7x 64 MiB per-TC physical VMEM, with headroom)


# ---------------------------------------------------------------------------
# In-kernel math helpers
# ---------------------------------------------------------------------------
def _leaky_relu(x):
    return jnp.where(x >= 0, x, NEG_SLOPE * x)


def _mish(x):
    # x * tanh(softplus(x)); softplus thresholded like PyTorch (threshold=20).
    sp = jnp.where(x > 20.0, x, jnp.log(1.0 + jnp.exp(jnp.minimum(x, 20.0))))
    return x * jnp.tanh(sp)


def _conv_block(xb, w_ref, b_ref, s_ref, t_ref):
    """Conv1d(K=3, stride=1) + BN(eval) + LeakyReLU(0.3) + MaxPool1d(4, stride=1).

    xb:    (Cin, Lin) array (single batch element)
    w_ref: (K, Cout, Cin) ref
    b_ref, s_ref, t_ref: (Cout, 1) refs (conv bias, BN scale, BN shift)
    """
    cin, lin = xb.shape
    k_sz = w_ref.shape[0]
    lc = lin - k_sz + 1
    acc = None
    # NOTE: the shifted slices below (conv taps and 4-tap pool) are lane-unaligned
    # and may relayout; the whole conv stack is a few us vs. the ~62 MiB fc1 weight
    # stream, so it is intentionally left simple and exact.
    # TODO(synk): if the conv stack ever matters (e.g. on v7x with quantized fc1),
    # move the tap/pool shifts onto the XLU via pltpu.roll + final crop.
    for k in range(k_sz):
        wk = w_ref[k]                 # (Cout, Cin)
        xs = xb[:, k:k + lc]          # (Cin, lc)
        if cin == 1:
            contrib = wk * xs         # broadcast outer product (Cout,1)*(1,lc)
        else:
            contrib = jnp.dot(wk, xs, preferred_element_type=jnp.float32)
        acc = contrib if acc is None else acc + contrib
    acc = acc + b_ref[...]                 # conv bias
    acc = acc * s_ref[...] + t_ref[...]    # folded batch norm (eval)
    acc = _leaky_relu(acc)
    lp = lc - 3                            # MaxPool1d(kernel_size=4, stride=1)
    pooled = jnp.maximum(
        jnp.maximum(acc[:, 0:lp], acc[:, 1:lp + 1]),
        jnp.maximum(acc[:, 2:lp + 2], acc[:, 3:lp + 3]),
    )
    return pooled


# ---------------------------------------------------------------------------
# Kernel 1: fused conv stack  (conv1->bn1->lrelu->pool->conv2->...->conv3->...)
#   Fully VMEM-resident, L on the lane axis, each tap as a (Cout,Cin)@(Cin,L) dot.
#   Output is emitted in bf16 so fc1 consumes it directly without a per-step cast.
# ---------------------------------------------------------------------------
def conv_stack_kernel(x_ref,
                      w1, b1, s1, t1,
                      w2, b2, s2, t2,
                      w3, b3, s3, t3,
                      out_ref):
    batch = x_ref.shape[0]
    for b in range(batch):            # B is tiny; unrolled Python loop
        h = x_ref[b]                  # (1, L0)
        h = _conv_block(h, w1, b1, s1, t1)   # (8,  L0-5)
        h = _conv_block(h, w2, b2, s2, t2)   # (16, L0-10)
        h = _conv_block(h, w3, b3, s3, t3)   # (32, L0-15)
        out_ref[b] = h.astype(out_ref.dtype)


def _full_spec(shape):
    nd = len(shape)
    return pl.BlockSpec(shape, lambda i, nd=nd: (0,) * nd)


def conv_stack(x, conv_args):
    batch = x.shape[0]
    l_out = x.shape[2] - 15
    args = [x] + list(conv_args)
    out_shape = jax.ShapeDtypeStruct((batch, 32, l_out), jnp.bfloat16)
    return pl.pallas_call(
        conv_stack_kernel,
        out_shape=out_shape,
        grid=(1,),
        in_specs=[_full_spec(a.shape) for a in args],
        out_specs=_full_spec(out_shape.shape),
    )(*args)


# ---------------------------------------------------------------------------
# Kernel 2: fc1 stream   h1 = Mish( (B,32000) @ W1^T (32000,1024) + b1 )
#   grid = (N-slabs, K-chunks);  N axis is "parallel" (megacore split on v7x),
#   K axis is the reduction ("arbitrary", innermost).
#   W1^T streams in bf16 from a SLAB-MAJOR (N_SLABS, 32000, TN) layout so every
#   (tk, tn) weight chunk is one contiguous DMA.  Accumulation goes straight into
#   the f32 output block, which stays VMEM-resident across the K axis.
# ---------------------------------------------------------------------------
def fc1_stream_kernel(x_ref, w1t_ref, b1_ref, h1_ref):
    k = pl.program_id(1)

    @pl.when(k == 0)
    def _():
        h1_ref[...] = jnp.zeros_like(h1_ref)

    # bf16 activations @ bf16 weights, f32 accumulation on the MXU.
    h1_ref[...] += jnp.dot(x_ref[...], w1t_ref[...],
                           preferred_element_type=jnp.float32)

    @pl.when(k == pl.num_programs(1) - 1)
    def _():
        h1_ref[...] = _mish(h1_ref[...] + b1_ref[...])


def fc1_stream(feats, w1t_slabs, b1, *, tk=FC1_TK):
    # NOTE: throughput is HBM-bound on the 62.5 MiB bf16 weight; if serving many
    # requests, stack them to B = 64-256 (multiple of 8) per call — these BlockSpecs
    # generalize over `batch` unchanged.
    batch, kdim = feats.shape
    n_slabs, kdim_w, tn = w1t_slabs.shape
    h1_dim = n_slabs * tn
    assert kdim == kdim_w
    assert kdim % tk == 0 and tk % 128 == 0
    assert tn % 128 == 0

    cost = pl.CostEstimate(
        flops=2 * batch * kdim * h1_dim,
        transcendentals=3 * batch * h1_dim,                    # Mish: exp/log/tanh
        bytes_accessed=(kdim * h1_dim * 2                      # bf16 W1^T stream
                        + batch * kdim * 2                     # bf16 activations
                        + batch * h1_dim * 4 + h1_dim * 4),    # f32 output + bias
    )

    return pl.pallas_call(
        fc1_stream_kernel,
        out_shape=jax.ShapeDtypeStruct((batch, h1_dim), jnp.float32),
        grid_spec=pltpu.PrefetchScalarGridSpec(
            num_scalar_prefetch=0,
            grid=(n_slabs, kdim // tk),
            in_specs=[
                # activations chunk (bf16): depends only on k
                pl.BlockSpec((batch, tk), lambda n, k: (0, k)),
                # slab-major W1^T chunk (bf16): contiguous (tk, tn) slice of slab n
                pl.BlockSpec((None, tk, tn), lambda n, k: (n, k, 0)),
                # bias slab
                pl.BlockSpec((1, tn), lambda n, k: (0, n)),
            ],
            # output block index constant over k -> VMEM-resident accumulator
            out_specs=pl.BlockSpec((batch, tn), lambda n, k: (0, n)),
        ),
        compiler_params=pltpu.CompilerParams(
            dimension_semantics=("parallel", "arbitrary"),
            vmem_limit_bytes=FC1_VMEM_LIMIT,
        ),
        cost_estimate=cost,
    )(feats, w1t_slabs, b1)


# ---------------------------------------------------------------------------
# Kernel 3: tiny tail   mish'd h1 -> Linear(1024,256) -> Mish -> Linear(256,1)
# ---------------------------------------------------------------------------
def tail_kernel(h1_ref, w2t_ref, b2_ref, w3t_ref, b3_ref, out_ref):
    h2 = _mish(jnp.dot(h1_ref[...], w2t_ref[...],
                       preferred_element_type=jnp.float32) + b2_ref[...])
    out_ref[...] = (jnp.dot(h2, w3t_ref[...],
                            preferred_element_type=jnp.float32) + b3_ref[...])


def tail_mlp(h1, w2t, b2, w3t, b3):
    batch = h1.shape[0]
    args = [h1, w2t, b2, w3t, b3]
    out_shape = jax.ShapeDtypeStruct((batch, 1), jnp.float32)
    return pl.pallas_call(
        tail_kernel,
        out_shape=out_shape,
        grid=(1,),
        in_specs=[_full_spec(a.shape) for a in args],
        out_specs=_full_spec(out_shape.shape),
    )(*args)


# ---------------------------------------------------------------------------
# Parameters (deterministic, in-script; shapes from EmotionCNN.__init__)
# ---------------------------------------------------------------------------
def init_params(key):
    ks = jax.random.split(key, 32)

    def uni(k, shape, fan_in):
        bound = 1.0 / (fan_in ** 0.5)
        return jax.random.uniform(k, shape, jnp.float32, -bound, bound)

    p = {}
    p['w1'], p['b1'] = uni(ks[0], (8, 1, 3), 3), uni(ks[1], (8,), 3)
    p['w2'], p['b2'] = uni(ks[2], (16, 8, 3), 24), uni(ks[3], (16,), 24)
    p['w3'], p['b3'] = uni(ks[4], (32, 16, 3), 48), uni(ks[5], (32,), 48)
    for i, c in zip((1, 2, 3), (8, 16, 32)):
        base = 5 + 4 * i
        p[f'g{i}'] = 1.0 + 0.1 * jax.random.normal(ks[base], (c,), jnp.float32)
        p[f'beta{i}'] = 0.1 * jax.random.normal(ks[base + 1], (c,), jnp.float32)
        p[f'mean{i}'] = 0.1 * jax.random.normal(ks[base + 2], (c,), jnp.float32)
        p[f'var{i}'] = jnp.abs(
            1.0 + 0.1 * jax.random.normal(ks[base + 3], (c,), jnp.float32))
    p['fw1'], p['fb1'] = uni(ks[24], (1024, 32000), 32000), uni(ks[25], (1024,), 32000)
    p['fw2'], p['fb2'] = uni(ks[26], (256, 1024), 1024), uni(ks[27], (256,), 1024)
    p['fw3'], p['fb3'] = uni(ks[28], (1, 256), 256), uni(ks[29], (1,), 256)
    return p


def _fold_bn(gamma, beta, mean, var):
    scale = gamma / jnp.sqrt(var + BN_EPS)
    shift = beta - mean * scale
    return scale[:, None], shift[:, None]


def prepare_inference_params(p):
    """One-time, outside the forward: fold BN, relayout conv weights, and build the
    slab-major bf16 fc1 weight (single transpose + reshape; no per-call .T)."""
    s1, t1 = _fold_bn(p['g1'], p['beta1'], p['mean1'], p['var1'])
    s2, t2 = _fold_bn(p['g2'], p['beta2'], p['mean2'], p['var2'])
    s3, t3 = _fold_bn(p['g3'], p['beta3'], p['mean3'], p['var3'])

    h1_dim, kdim = p['fw1'].shape          # (1024, 32000)
    n_slabs = h1_dim // FC1_TN
    # (1024, 32000) -> W1^T (32000, 1024) -> slab-major (n_slabs, 32000, FC1_TN) bf16.
    # slab n, row k, col j  ==  W1^T[k, n*FC1_TN + j]  (verified vs. reference dot).
    w1t_slabs = jnp.transpose(
        p['fw1'].T.reshape(kdim, n_slabs, FC1_TN), (1, 0, 2)
    ).astype(jnp.bfloat16)

    # TODO(synk): optional int8 (v5e/v6e) / fp8-e4m3 (v7x) weight quantization with
    # per-output-channel scales would halve the dominant HBM stream again; left out
    # pending accuracy re-validation.
    prep = {
        'conv_args': (
            jnp.transpose(p['w1'], (2, 0, 1)), p['b1'][:, None], s1, t1,
            jnp.transpose(p['w2'], (2, 0, 1)), p['b2'][:, None], s2, t2,
            jnp.transpose(p['w3'], (2, 0, 1)), p['b3'][:, None], s3, t3,
        ),
        'fw1_slabs': w1t_slabs,                           # (2, 32000, 512) bf16
        'fb1': p['fb1'][None, :],                         # (1, 1024) f32
        'fw2_t': jnp.asarray(p['fw2'].T, jnp.float32),    # (1024, 256)
        'fb2': p['fb2'][None, :],
        'fw3_t': jnp.asarray(p['fw3'].T, jnp.float32),    # (256, 1)
        'fb3': p['fb3'][None, :],
    }
    return prep


def emotion_cnn_forward(x, prep):
    conv_out = conv_stack(x, prep['conv_args'])      # (B, 32, L-15) bf16
    feats = conv_out.reshape(x.shape[0], -1)         # nn.Flatten (channel-major), bf16
    # TODO(synk): Dropout layers are identity (eval mode); no RNG mask applied.
    h1 = fc1_stream(feats, prep['fw1_slabs'], prep['fb1'])      # (B, 1024), mish'd
    return tail_mlp(h1, prep['fw2_t'], prep['fb2'],
                    prep['fw3_t'], prep['fb3'])                 # (B, 1)


# ---------------------------------------------------------------------------
# Pure-JAX reference (same eval-mode semantics, f32 weights) for correctness
# ---------------------------------------------------------------------------
def reference_forward(x, p):
    hi = jax.lax.Precision.HIGHEST

    def block(h, w, b, gamma, beta, mean, var):
        cout, cin, ksz = w.shape
        lc = h.shape[2] - ksz + 1
        out = jnp.zeros((h.shape[0], cout, lc), jnp.float32)
        for k in range(ksz):
            out = out + jnp.einsum('bcl,oc->bol', h[:, :, k:k + lc], w[:, :, k],
                                   precision=hi)
        out = out + b[None, :, None]
        scale = gamma / jnp.sqrt(var + BN_EPS)
        shift = beta - mean * scale
        out = out * scale[None, :, None] + shift[None, :, None]
        out = jnp.where(out >= 0, out, NEG_SLOPE * out)
        lp = lc - 3
        return jnp.maximum(
            jnp.maximum(out[:, :, 0:lp], out[:, :, 1:lp + 1]),
            jnp.maximum(out[:, :, 2:lp + 2], out[:, :, 3:lp + 3]))

    h = block(x, p['w1'], p['b1'], p['g1'], p['beta1'], p['mean1'], p['var1'])
    h = block(h, p['w2'], p['b2'], p['g2'], p['beta2'], p['mean2'], p['var2'])
    h = block(h, p['w3'], p['b3'], p['g3'], p['beta3'], p['mean3'], p['var3'])
    feats = h.reshape(h.shape[0], -1)
    h1 = _mish(jnp.dot(feats, p['fw1'].T, precision=hi) + p['fb1'])
    h2 = _mish(jnp.dot(h1, p['fw2'].T, precision=hi) + p['fb2'])
    return jnp.dot(h2, p['fw3'].T, precision=hi) + p['fb3']


if __name__ == "__main__":
    key = jax.random.PRNGKey(0)
    pkey, xkey = jax.random.split(key)
    params = init_params(pkey)
    prep = prepare_inference_params(params)   # one-time weight prep (slab-major bf16)

    # Smallest input consistent with Linear(32000, ...): B=2, C=1, L=1015
    x = jax.random.normal(xkey, (2, 1, 1015), jnp.float32)

    out = emotion_cnn_forward(x, prep)
    out = jax.block_until_ready(out)

    ref = reference_forward(x, params)
    assert out.shape == (2, 1), out.shape
    assert bool(jnp.all(jnp.isfinite(out)))
    assert bool(jnp.allclose(out, ref, rtol=5e-2, atol=5e-2)), (out, ref)
    print("KERNEL_OK")
</pallas_src>

<mosaic_0001>
module attributes {stable_mosaic.version = 11 : i64} {
  func.func @conv_stack_kernel(%arg0: i32, %arg1: memref<2x1x1015xf32, #tpu.memory_space<vmem>>, %arg2: memref<3x8x1xf32, #tpu.memory_space<vmem>>, %arg3: memref<8x1xf32, #tpu.memory_space<vmem>>, %arg4: memref<8x1xf32, #tpu.memory_space<vmem>>, %arg5: memref<8x1xf32, #tpu.memory_space<vmem>>, %arg6: memref<3x16x8xf32, #tpu.memory_space<vmem>>, %arg7: memref<16x1xf32, #tpu.memory_space<vmem>>, %arg8: memref<16x1xf32, #tpu.memory_space<vmem>>, %arg9: memref<16x1xf32, #tpu.memory_space<vmem>>, %arg10: memref<3x32x16xf32, #tpu.memory_space<vmem>>, %arg11: memref<32x1xf32, #tpu.memory_space<vmem>>, %arg12: memref<32x1xf32, #tpu.memory_space<vmem>>, %arg13: memref<32x1xf32, #tpu.memory_space<vmem>>, %arg14: memref<2x32x1000xbf16, #tpu.memory_space<vmem>>) attributes {dimension_semantics = [#tpu.dimension_semantics<arbitrary>], iteration_bounds = array<i64: 1>, scalar_prefetch = 0 : i64, scratch_operands = 0 : i64, tpu.core_type = #tpu.core_type<tc>, window_params = [{pipeline_mode = #tpu.pipeline_mode<synchronous>, transform_indices = @transform_0, window_bounds = array<i64: 2, 1, 1015>}, {pipeline_mode = #tpu.pipeline_mode<synchronous>, transform_indices = @transform_1, window_bounds = array<i64: 3, 8, 1>}, {pipeline_mode = #tpu.pipeline_mode<synchronous>, transform_indices = @transform_2, window_bounds = array<i64: 8, 1>}, {pipeline_mode = #tpu.pipeline_mode<synchronous>, transform_indices = @transform_3, window_bounds = array<i64: 8, 1>}, {pipeline_mode = #tpu.pipeline_mode<synchronous>, transform_indices = @transform_4, window_bounds = array<i64: 8, 1>}, {pipeline_mode = #tpu.pipeline_mode<synchronous>, transform_indices = @transform_5, window_bounds = array<i64: 3, 16, 8>}, {pipeline_mode = #tpu.pipeline_mode<synchronous>, transform_indices = @transform_6, window_bounds = array<i64: 16, 1>}, {pipeline_mode = #tpu.pipeline_mode<synchronous>, transform_indices = @transform_7, window_bounds = array<i64: 16, 1>}, {pipeline_mode = #tpu.pipeline_mode<synchronous>, transform_indices = @transform_8, window_bounds = array<i64: 16, 1>}, {pipeline_mode = #tpu.pipeline_mode<synchronous>, transform_indices = @transform_9, window_bounds = array<i64: 3, 32, 16>}, {pipeline_mode = #tpu.pipeline_mode<synchronous>, transform_indices = @transform_10, window_bounds = array<i64: 32, 1>}, {pipeline_mode = #tpu.pipeline_mode<synchronous>, transform_indices = @transform_11, window_bounds = array<i64: 32, 1>}, {pipeline_mode = #tpu.pipeline_mode<synchronous>, transform_indices = @transform_12, window_bounds = array<i64: 32, 1>}, {pipeline_mode = #tpu.pipeline_mode<synchronous>, transform_indices = @transform_13, window_bounds = array<i64: 2, 32, 1000>}]} {
    %c0 = arith.constant 0 : index
    %c0_0 = arith.constant 0 : index
    %c0_1 = arith.constant 0 : index
    %0 = vector.load %arg1[%c0, %c0_0, %c0_1] : memref<2x1x1015xf32, #tpu.memory_space<vmem>>, vector<1x1x1015xf32>
    %1 = vector.shape_cast %0 : vector<1x1x1015xf32> to vector<1x1015xf32>
    %c0_2 = arith.constant 0 : index
    %c0_3 = arith.constant 0 : index
    %c0_4 = arith.constant 0 : index
    %2 = vector.load %arg2[%c0_2, %c0_3, %c0_4] : memref<3x8x1xf32, #tpu.memory_space<vmem>>, vector<1x8x1xf32>
    %3 = vector.shape_cast %2 : vector<1x8x1xf32> to vector<8x1xf32>
    %4 = vector.extract_strided_slice %1 {offsets = [0, 0], sizes = [1, 1013], strides = [1, 1]} : vector<1x1015xf32> to vector<1x1013xf32>
    %5 = vector.broadcast %3 : vector<8x1xf32> to vector<8x1013xf32>
    %6 = vector.broadcast %4 : vector<1x1013xf32> to vector<8x1013xf32>
    %7 = arith.mulf %5, %6 : vector<8x1013xf32>
    %c1 = arith.constant 1 : index
    %c0_5 = arith.constant 0 : index
    %c0_6 = arith.constant 0 : index
    %8 = vector.load %arg2[%c1, %c0_5, %c0_6] : memref<3x8x1xf32, #tpu.memory_space<vmem>>, vector<1x8x1xf32>
    %9 = vector.shape_cast %8 : vector<1x8x1xf32> to vector<8x1xf32>
    %10 = vector.extract_strided_slice %1 {offsets = [0, 1], sizes = [1, 1013], strides = [1, 1]} : vector<1x1015xf32> to vector<1x1013xf32>
    %11 = vector.broadcast %9 : vector<8x1xf32> to vector<8x1013xf32>
    %12 = vector.broadcast %10 : vector<1x1013xf32> to vector<8x1013xf32>
    %13 = arith.mulf %11, %12 : vector<8x1013xf32>
    %14 = arith.addf %7, %13 : vector<8x1013xf32>
    %c2 = arith.constant 2 : index
    %c0_7 = arith.constant 0 : index
    %c0_8 = arith.constant 0 : index
    %15 = vector.load %arg2[%c2, %c0_7, %c0_8] : memref<3x8x1xf32, #tpu.memory_space<vmem>>, vector<1x8x1xf32>
    %16 = vector.shape_cast %15 : vector<1x8x1xf32> to vector<8x1xf32>
    %17 = vector.extract_strided_slice %1 {offsets = [0, 2], sizes = [1, 1013], strides = [1, 1]} : vector<1x1015xf32> to vector<1x1013xf32>
    %18 = vector.broadcast %16 : vector<8x1xf32> to vector<8x1013xf32>
    %19 = vector.broadcast %17 : vector<1x1013xf32> to vector<8x1013xf32>
    %20 = arith.mulf %18, %19 : vector<8x1013xf32>
    %21 = arith.addf %14, %20 : vector<8x1013xf32>
    %c0_9 = arith.constant 0 : index
    %c0_10 = arith.constant 0 : index
    %22 = vector.load %arg3[%c0_9, %c0_10] : memref<8x1xf32, #tpu.memory_space<vmem>>, vector<8x1xf32>
    %23 = vector.broadcast %22 : vector<8x1xf32> to vector<8x1013xf32>
    %24 = arith.addf %21, %23 : vector<8x1013xf32>
    %c0_11 = arith.constant 0 : index
    %c0_12 = arith.constant 0 : index
    %25 = vector.load %arg4[%c0_11, %c0_12] : memref<8x1xf32, #tpu.memory_space<vmem>>, vector<8x1xf32>
    %26 = vector.broadcast %25 : vector<8x1xf32> to vector<8x1013xf32>
    %27 = arith.mulf %24, %26 : vector<8x1013xf32>
    %c0_13 = arith.constant 0 : index
    %c0_14 = arith.constant 0 : index
    %28 = vector.load %arg5[%c0_13, %c0_14] : memref<8x1xf32, #tpu.memory_space<vmem>>, vector<8x1xf32>
    %29 = vector.broadcast %28 : vector<8x1xf32> to vector<8x1013xf32>
    %30 = arith.addf %27, %29 : vector<8x1013xf32>
    %cst = arith.constant 0.000000e+00 : f32
    %31 = vector.broadcast %cst : f32 to vector<8x1013xf32>
    %32 = arith.cmpf oge, %30, %31 : vector<8x1013xf32>
    %cst_15 = arith.constant 3.000000e-01 : f32
    %33 = vector.broadcast %cst_15 : f32 to vector<8x1013xf32>
    %34 = arith.mulf %33, %30 : vector<8x1013xf32>
    %35 = arith.select %32, %30, %34 : vector<8x1013xi1>, vector<8x1013xf32>
    %36 = vector.extract_strided_slice %35 {offsets = [0, 0], sizes = [8, 1010], strides = [1, 1]} : vector<8x1013xf32> to vector<8x1010xf32>
    %37 = vector.extract_strided_slice %35 {offsets = [0, 1], sizes = [8, 1010], strides = [1, 1]} : vector<8x1013xf32> to vector<8x1010xf32>
    %38 = arith.maximumf %36, %37 : vector<8x1010xf32>
    %39 = vector.extract_strided_slice %35 {offsets = [0, 2], sizes = [8, 1010], strides = [1, 1]} : vector<8x1013xf32> to vector<8x1010xf32>
    %40 = vector.extract_strided_slice %35 {offsets = [0, 3], sizes = [8, 1010], strides = [1, 1]} : vector<8x1013xf32> to vector<8x1010xf32>
    %41 = arith.maximumf %39, %40 : vector<8x1010xf32>
    %42 = arith.maximumf %38, %41 : vector<8x1010xf32>
    %c0_16 = arith.constant 0 : index
    %c0_17 = arith.constant 0 : index
    %c0_18 = arith.constant 0 : index
    %43 = vector.load %arg6[%c0_16, %c0_17, %c0_18] : memref<3x16x8xf32, #tpu.memory_space<vmem>>, vector<1x16x8xf32>
    %44 = vector.shape_cast %43 : vector<1x16x8xf32> to vector<16x8xf32>
    %45 = vector.extract_strided_slice %42 {offsets = [0, 0], sizes = [8, 1008], strides = [1, 1]} : vector<8x1010xf32> to vector<8x1008xf32>
    %cst_19 = arith.constant dense<0.000000e+00> : vector<16x1008xf32>
    %46 = tpu.matmul %44, %45, %cst_19 {dimension_numbers = #tpu.dot_dimension_numbers<[1], [0], [0], [1], [0, 0, 1, 1], [], []>} : vector<16x8xf32>, vector<8x1008xf32>, vector<16x1008xf32> -> vector<16x1008xf32>
    %c1_20 = arith.constant 1 : index
    %c0_21 = arith.constant 0 : index
    %c0_22 = arith.constant 0 : index
    %47 = vector.load %arg6[%c1_20, %c0_21, %c0_22] : memref<3x16x8xf32, #tpu.memory_space<vmem>>, vector<1x16x8xf32>
    %48 = vector.shape_cast %47 : vector<1x16x8xf32> to vector<16x8xf32>
    %49 = vector.extract_strided_slice %42 {offsets = [0, 1], sizes = [8, 1008], strides = [1, 1]} : vector<8x1010xf32> to vector<8x1008xf32>
    %cst_23 = arith.constant dense<0.000000e+00> : vector<16x1008xf32>
    %50 = tpu.matmul %48, %49, %cst_23 {dimension_numbers = #tpu.dot_dimension_numbers<[1], [0], [0], [1], [0, 0, 1, 1], [], []>} : vector<16x8xf32>, vector<8x1008xf32>, vector<16x1008xf32> -> vector<16x1008xf32>
    %51 = arith.addf %46, %50 : vector<16x1008xf32>
    %c2_24 = arith.constant 2 : index
    %c0_25 = arith.constant 0 : index
    %c0_26 = arith.constant 0 : index
    %52 = vector.load %arg6[%c2_24, %c0_25, %c0_26] : memref<3x16x8xf32, #tpu.memory_space<vmem>>, vector<1x16x8xf32>
    %53 = vector.shape_cast %52 : vector<1x16x8xf32> to vector<16x8xf32>
    %54 = vector.extract_strided_slice %42 {offsets = [0, 2], sizes = [8, 1008], strides = [1, 1]} : vector<8x1010xf32> to vector<8x1008xf32>
    %cst_27 = arith.constant dense<0.000000e+00> : vector<16x1008xf32>
    %55 = tpu.matmul %53, %54, %cst_27 {dimension_numbers = #tpu.dot_dimension_numbers<[1], [0], [0], [1], [0, 0, 1, 1], [], []>} : vector<16x8xf32>, vector<8x1008xf32>, vector<16x1008xf32> -> vector<16x1008xf32>
    %56 = arith.addf %51, %55 : vector<16x1008xf32>
    %c0_28 = arith.constant 0 : index
    %c0_29 = arith.constant 0 : index
    %57 = vector.load %arg7[%c0_28, %c0_29] : memref<16x1xf32, #tpu.memory_space<vmem>>, vector<16x1xf32>
    %58 = vector.broadcast %57 : vector<16x1xf32> to vector<16x1008xf32>
    %59 = arith.addf %56, %58 : vector<16x1008xf32>
    %c0_30 = arith.constant 0 : index
    %c0_31 = arith.constant 0 : index
    %60 = vector.load %arg8[%c0_30, %c0_31] : memref<16x1xf32, #tpu.memory_space<vmem>>, vector<16x1xf32>
    %61 = vector.broadcast %60 : vector<16x1xf32> to vector<16x1008xf32>
    %62 = arith.mulf %59, %61 : vector<16x1008xf32>
    %c0_32 = arith.constant 0 : index
    %c0_33 = arith.constant 0 : index
    %63 = vector.load %arg9[%c0_32, %c0_33] : memref<16x1xf32, #tpu.memory_space<vmem>>, vector<16x1xf32>
    %64 = vector.broadcast %63 : vector<16x1xf32> to vector<16x1008xf32>
    %65 = arith.addf %62, %64 : vector<16x1008xf32>
    %cst_34 = arith.constant 0.000000e+00 : f32
    %66 = vector.broadcast %cst_34 : f32 to vector<16x1008xf32>
    %67 = arith.cmpf oge, %65, %66 : vector<16x1008xf32>
    %cst_35 = arith.constant 3.000000e-01 : f32
    %68 = vector.broadcast %cst_35 : f32 to vector<16x1008xf32>
    %69 = arith.mulf %68, %65 : vector<16x1008xf32>
    %70 = arith.select %67, %65, %69 : vector<16x1008xi1>, vector<16x1008xf32>
    %71 = vector.extract_strided_slice %70 {offsets = [0, 0], sizes = [16, 1005], strides = [1, 1]} : vector<16x1008xf32> to vector<16x1005xf32>
    %72 = vector.extract_strided_slice %70 {offsets = [0, 1], sizes = [16, 1005], strides = [1, 1]} : vector<16x1008xf32> to vector<16x1005xf32>
    %73 = arith.maximumf %71, %72 : vector<16x1005xf32>
    %74 = vector.extract_strided_slice %70 {offsets = [0, 2], sizes = [16, 1005], strides = [1, 1]} : vector<16x1008xf32> to vector<16x1005xf32>
    %75 = vector.extract_strided_slice %70 {offsets = [0, 3], sizes = [16, 1005], strides = [1, 1]} : vector<16x1008xf32> to vector<16x1005xf32>
    %76 = arith.maximumf %74, %75 : vector<16x1005xf32>
    %77 = arith.maximumf %73, %76 : vector<16x1005xf32>
    %c0_36 = arith.constant 0 : index
    %c0_37 = arith.constant 0 : index
    %c0_38 = arith.constant 0 : index
    %78 = vector.load %arg10[%c0_36, %c0_37, %c0_38] : memref<3x32x16xf32, #tpu.memory_space<vmem>>, vector<1x32x16xf32>
    %79 = vector.shape_cast %78 : vector<1x32x16xf32> to vector<32x16xf32>
    %80 = vector.extract_strided_slice %77 {offsets = [0, 0], sizes = [16, 1003], strides = [1, 1]} : vector<16x1005xf32> to vector<16x1003xf32>
    %cst_39 = arith.constant dense<0.000000e+00> : vector<32x1003xf32>
    %81 = tpu.matmul %79, %80, %cst_39 {dimension_numbers = #tpu.dot_dimension_numbers<[1], [0], [0], [1], [0, 0, 1, 1], [], []>} : vector<32x16xf32>, vector<16x1003xf32>, vector<32x1003xf32> -> vector<32x1003xf32>
    %c1_40 = arith.constant 1 : index
    %c0_41 = arith.constant 0 : index
    %c0_42 = arith.constant 0 : index
    %82 = vector.load %arg10[%c1_40, %c0_41, %c0_42] : memref<3x32x16xf32, #tpu.memory_space<vmem>>, vector<1x32x16xf32>
    %83 = vector.shape_cast %82 : vector<1x32x16xf32> to vector<32x16xf32>
    %84 = vector.extract_strided_slice %77 {offsets = [0, 1], sizes = [16, 1003], strides = [1, 1]} : vector<16x1005xf32> to vector<16x1003xf32>
    %cst_43 = arith.constant dense<0.000000e+00> : vector<32x1003xf32>
    %85 = tpu.matmul %83, %84, %cst_43 {dimension_numbers = #tpu.dot_dimension_numbers<[1], [0], [0], [1], [0, 0, 1, 1], [], []>} : vector<32x16xf32>, vector<16x1003xf32>, vector<32x1003xf32> -> vector<32x1003xf32>
    %86 = arith.addf %81, %85 : vector<32x1003xf32>
    %c2_44 = arith.constant 2 : index
    %c0_45 = arith.constant 0 : index
    %c0_46 = arith.constant 0 : index
    %87 = vector.load %arg10[%c2_44, %c0_45, %c0_46] : memref<3x32x16xf32, #tpu.memory_space<vmem>>, vector<1x32x16xf32>
    %88 = vector.shape_cast %87 : vector<1x32x16xf32> to vector<32x16xf32>
    %89 = vector.extract_strided_slice %77 {offsets = [0, 2], sizes = [16, 1003], strides = [1, 1]} : vector<16x1005xf32> to vector<16x1003xf32>
    %cst_47 = arith.constant dense<0.000000e+00> : vector<32x1003xf32>
    %90 = tpu.matmul %88, %89, %cst_47 {dimension_numbers = #tpu.dot_dimension_numbers<[1], [0], [0], [1], [0, 0, 1, 1], [], []>} : vector<32x16xf32>, vector<16x1003xf32>, vector<32x1003xf32> -> vector<32x1003xf32>
    %91 = arith.addf %86, %90 : vector<32x1003xf32>
    %c0_48 = arith.constant 0 : index
    %c0_49 = arith.constant 0 : index
    %92 = vector.load %arg11[%c0_48, %c0_49] : memref<32x1xf32, #tpu.memory_space<vmem>>, vector<32x1xf32>
    %93 = vector.broadcast %92 : vector<32x1xf32> to vector<32x1003xf32>
    %94 = arith.addf %91, %93 : vector<32x1003xf32>
    %c0_50 = arith.constant 0 : index
    %c0_51 = arith.constant 0 : index
    %95 = vector.load %arg12[%c0_50, %c0_51] : memref<32x1xf32, #tpu.memory_space<vmem>>, vector<32x1xf32>
    %96 = vector.broadcast %95 : vector<32x1xf32> to vector<32x1003xf32>
    %97 = arith.mulf %94, %96 : vector<32x1003xf32>
    %c0_52 = arith.constant 0 : index
    %c0_53 = arith.constant 0 : index
    %98 = vector.load %arg13[%c0_52, %c0_53] : memref<32x1xf32, #tpu.memory_space<vmem>>, vector<32x1xf32>
    %99 = vector.broadcast %98 : vector<32x1xf32> to vector<32x1003xf32>
    %100 = arith.addf %97, %99 : vector<32x1003xf32>
    %cst_54 = arith.constant 0.000000e+00 : f32
    %101 = vector.broadcast %cst_54 : f32 to vector<32x1003xf32>
    %102 = arith.cmpf oge, %100, %101 : vector<32x1003xf32>
    %cst_55 = arith.constant 3.000000e-01 : f32
    %103 = vector.broadcast %cst_55 : f32 to vector<32x1003xf32>
    %104 = arith.mulf %103, %100 : vector<32x1003xf32>
    %105 = arith.select %102, %100, %104 : vector<32x1003xi1>, vector<32x1003xf32>
    %106 = vector.extract_strided_slice %105 {offsets = [0, 0], sizes = [32, 1000], strides = [1, 1]} : vector<32x1003xf32> to vector<32x1000xf32>
    %107 = vector.extract_strided_slice %105 {offsets = [0, 1], sizes = [32, 1000], strides = [1, 1]} : vector<32x1003xf32> to vector<32x1000xf32>
    %108 = arith.maximumf %106, %107 : vector<32x1000xf32>
    %109 = vector.extract_strided_slice %105 {offsets = [0, 2], sizes = [32, 1000], strides = [1, 1]} : vector<32x1003xf32> to vector<32x1000xf32>
    %110 = vector.extract_strided_slice %105 {offsets = [0, 3], sizes = [32, 1000], strides = [1, 1]} : vector<32x1003xf32> to vector<32x1000xf32>
    %111 = arith.maximumf %109, %110 : vector<32x1000xf32>
    %112 = arith.maximumf %108, %111 : vector<32x1000xf32>
    %113 = arith.truncf %112 : vector<32x1000xf32> to vector<32x1000xbf16>
    %c0_56 = arith.constant 0 : index
    %c0_57 = arith.constant 0 : index
    %c0_58 = arith.constant 0 : index
    %114 = vector.load %arg14[%c0_56, %c0_57, %c0_58] : memref<2x32x1000xbf16, #tpu.memory_space<vmem>>, vector<1x32x1000xbf16>
    %115 = vector.shape_cast %114 : vector<1x32x1000xbf16> to vector<32x1000xbf16>
    %116 = vector.shape_cast %113 : vector<32x1000xbf16> to vector<1x32x1000xbf16>
    tpu.vector_store %arg14[%c0_56, %c0_57, %c0_58], %116 {strides = array<i32>} : memref<2x32x1000xbf16, #tpu.memory_space<vmem>>, vector<1x32x1000xbf16>,
    %c1_59 = arith.constant 1 : index
    %c0_60 = arith.constant 0 : index
    %c0_61 = arith.constant 0 : index
    %117 = vector.load %arg1[%c1_59, %c0_60, %c0_61] : memref<2x1x1015xf32, #tpu.memory_space<vmem>>, vector<1x1x1015xf32>
    %118 = vector.shape_cast %117 : vector<1x1x1015xf32> to vector<1x1015xf32>
    %c0_62 = arith.constant 0 : index
    %c0_63 = arith.constant 0 : index
    %c0_64 = arith.constant 0 : index
    %119 = vector.load %arg2[%c0_62, %c0_63, %c0_64] : memref<3x8x1xf32, #tpu.memory_space<vmem>>, vector<1x8x1xf32>
    %120 = vector.shape_cast %119 : vector<1x8x1xf32> to vector<8x1xf32>
    %121 = vector.extract_strided_slice %118 {offsets = [0, 0], sizes = [1, 1013], strides = [1, 1]} : vector<1x1015xf32> to vector<1x1013xf32>
    %122 = vector.broadcast %120 : vector<8x1xf32> to vector<8x1013xf32>
    %123 = vector.broadcast %121 : vector<1x1013xf32> to vector<8x1013xf32>
    %124 = arith.mulf %122, %123 : vector<8x1013xf32>
    %c1_65 = arith.constant 1 : index
    %c0_66 = arith.constant 0 : index
    %c0_67 = arith.constant 0 : index
    %125 = vector.load %arg2[%c1_65, %c0_66, %c0_67] : memref<3x8x1xf32, #tpu.memory_space<vmem>>, vector<1x8x1xf32>
    %126 = vector.shape_cast %125 : vector<1x8x1xf32> to vector<8x1xf32>
    %127 = vector.extract_strided_slice %118 {offsets = [0, 1], sizes = [1, 1013], strides = [1, 1]} : vector<1x1015xf32> to vector<1x1013xf32>
    %128 = vector.broadcast %126 : vector<8x1xf32> to vector<8x1013xf32>
    %129 = vector.broadcast %127 : vector<1x1013xf32> to vector<8x1013xf32>
    %130 = arith.mulf %128, %129 : vector<8x1013xf32>
    %131 = arith.addf %124, %130 : vector<8x1013xf32>
    %c2_68 = arith.constant 2 : index
    %c0_69 = arith.constant 0 : index
    %c0_70 = arith.constant 0 : index
    %132 = vector.load %arg2[%c2_68, %c0_69, %c0_70] : memref<3x8x1xf32, #tpu.memory_space<vmem>>, vector<1x8x1xf32>
    %133 = vector.shape_cast %132 : vector<1x8x1xf32> to vector<8x1xf32>
    %134 = vector.extract_strided_slice %118 {offsets = [0, 2], sizes = [1, 1013], strides = [1, 1]} : vector<1x1015xf32> to vector<1x1013xf32>
    %135 = vector.broadcast %133 : vector<8x1xf32> to vector<8x1013xf32>
    %136 = vector.broadcast %134 : vector<1x1013xf32> to vector<8x1013xf32>
    %137 = arith.mulf %135, %136 : vector<8x1013xf32>
    %138 = arith.addf %131, %137 : vector<8x1013xf32>
    %c0_71 = arith.constant 0 : index
    %c0_72 = arith.constant 0 : index
    %139 = vector.load %arg3[%c0_71, %c0_72] : memref<8x1xf32, #tpu.memory_space<vmem>>, vector<8x1xf32>
    %140 = vector.broadcast %139 : vector<8x1xf32> to vector<8x1013xf32>
    %141 = arith.addf %138, %140 : vector<8x1013xf32>
    %c0_73 = arith.constant 0 : index
    %c0_74 = arith.constant 0 : index
    %142 = vector.load %arg4[%c0_73, %c0_74] : memref<8x1xf32, #tpu.memory_space<vmem>>, vector<8x1xf32>
    %143 = vector.broadcast %142 : vector<8x1xf32> to vector<8x1013xf32>
    %144 = arith.mulf %141, %143 : vector<8x1013xf32>
    %c0_75 = arith.constant 0 : index
    %c0_76 = arith.constant 0 : index
    %145 = vector.load %arg5[%c0_75, %c0_76] : memref<8x1xf32, #tpu.memory_space<vmem>>, vector<8x1xf32>
    %146 = vector.broadcast %145 : vector<8x1xf32> to vector<8x1013xf32>
    %147 = arith.addf %144, %146 : vector<8x1013xf32>
    %cst_77 = arith.constant 0.000000e+00 : f32
    %148 = vector.broadcast %cst_77 : f32 to vector<8x1013xf32>
    %149 = arith.cmpf oge, %147, %148 : vector<8x1013xf32>
    %cst_78 = arith.constant 3.000000e-01 : f32
    %150 = vector.broadcast %cst_78 : f32 to vector<8x1013xf32>
    %151 = arith.mulf %150, %147 : vector<8x1013xf32>
    %152 = arith.select %149, %147, %151 : vector<8x1013xi1>, vector<8x1013xf32>
    %153 = vector.extract_strided_slice %152 {offsets = [0, 0], sizes = [8, 1010], strides = [1, 1]} : vector<8x1013xf32> to vector<8x1010xf32>
    %154 = vector.extract_strided_slice %152 {offsets = [0, 1], sizes = [8, 1010], strides = [1, 1]} : vector<8x1013xf32> to vector<8x1010xf32>
    %155 = arith.maximumf %153, %154 : vector<8x1010xf32>
    %156 = vector.extract_strided_slice %152 {offsets = [0, 2], sizes = [8, 1010], strides = [1, 1]} : vector<8x1013xf32> to vector<8x1010xf32>
    %157 = vector.extract_strided_slice %152 {offsets = [0, 3], sizes = [8, 1010], strides = [1, 1]} : vector<8x1013xf32> to vector<8x1010xf32>
    %158 = arith.maximumf %156, %157 : vector<8x1010xf32>
    %159 = arith.maximumf %155, %158 : vector<8x1010xf32>
    %c0_79 = arith.constant 0 : index
    %c0_80 = arith.constant 0 : index
    %c0_81 = arith.constant 0 : index
    %160 = vector.load %arg6[%c0_79, %c0_80, %c0_81] : memref<3x16x8xf32, #tpu.memory_space<vmem>>, vector<1x16x8xf32>
    %161 = vector.shape_cast %160 : vector<1x16x8xf32> to vector<16x8xf32>
    %162 = vector.extract_strided_slice %159 {offsets = [0, 0], sizes = [8, 1008], strides = [1, 1]} : vector<8x1010xf32> to vector<8x1008xf32>
    %cst_82 = arith.constant dense<0.000000e+00> : vector<16x1008xf32>
    %163 = tpu.matmul %161, %162, %cst_82 {dimension_numbers = #tpu.dot_dimension_numbers<[1], [0], [0], [1], [0, 0, 1, 1], [], []>} : vector<16x8xf32>, vector<8x1008xf32>, vector<16x1008xf32> -> vector<16x1008xf32>
    %c1_83 = arith.constant 1 : index
    %c0_84 = arith.constant 0 : index
    %c0_85 = arith.constant 0 : index
    %164 = vector.load %arg6[%c1_83, %c0_84, %c0_85] : memref<3x16x8xf32, #tpu.memory_space<vmem>>, vector<1x16x8xf32>
    %165 = vector.shape_cast %164 : vector<1x16x8xf32> to vector<16x8xf32>
    %166 = vector.extract_strided_slice %159 {offsets = [0, 1], sizes = [8, 1008], strides = [1, 1]} : vector<8x1010xf32> to vector<8x1008xf32>
    %cst_86 = arith.constant dense<0.000000e+00> : vector<16x1008xf32>
    %167 = tpu.matmul %165, %166, %cst_86 {dimension_numbers = #tpu.dot_dimension_numbers<[1], [0], [0], [1], [0, 0, 1, 1], [], []>} : vector<16x8xf32>, vector<8x1008xf32>, vector<16x1008xf32> -> vector<16x1008xf32>
    %168 = arith.addf %163, %167 : vector<16x1008xf32>
    %c2_87 = arith.constant 2 : index
    %c0_88 = arith.constant 0 : index
    %c0_89 = arith.constant 0 : index
    %169 = vector.load %arg6[%c2_87, %c0_88, %c0_89] : memref<3x16x8xf32, #tpu.memory_space<vmem>>, vector<1x16x8xf32>
    %170 = vector.shape_cast %169 : vector<1x16x8xf32> to vector<16x8xf32>
    %171 = vector.extract_strided_slice %159 {offsets = [0, 2], sizes = [8, 1008], strides = [1, 1]} : vector<8x1010xf32> to vector<8x1008xf32>
    %cst_90 = arith.constant dense<0.000000e+00> : vector<16x1008xf32>
    %172 = tpu.matmul %170, %171, %cst_90 {dimension_numbers = #tpu.dot_dimension_numbers<[1], [0], [0], [1], [0, 0, 1, 1], [], []>} : vector<16x8xf32>, vector<8x1008xf32>, vector<16x1008xf32> -> vector<16x1008xf32>
    %173 = arith.addf %168, %172 : vector<16x1008xf32>
    %c0_91 = arith.constant 0 : index
    %c0_92 = arith.constant 0 : index
    %174 = vector.load %arg7[%c0_91, %c0_92] : memref<16x1xf32, #tpu.memory_space<vmem>>, vector<16x1xf32>
    %175 = vector.broadcast %174 : vector<16x1xf32> to vector<16x1008xf32>
    %176 = arith.addf %173, %175 : vector<16x1008xf32>
    %c0_93 = arith.constant 0 : index
    %c0_94 = arith.constant 0 : index
    %177 = vector.load %arg8[%c0_93, %c0_94] : memref<16x1xf32, #tpu.memory_space<vmem>>, vector<16x1xf32>
    %178 = vector.broadcast %177 : vector<16x1xf32> to vector<16x1008xf32>
    %179 = arith.mulf %176, %178 : vector<16x1008xf32>
    %c0_95 = arith.constant 0 : index
    %c0_96 = arith.constant 0 : index
    %180 = vector.load %arg9[%c0_95, %c0_96] : memref<16x1xf32, #tpu.memory_space<vmem>>, vector<16x1xf32>
    %181 = vector.broadcast %180 : vector<16x1xf32> to vector<16x1008xf32>
    %182 = arith.addf %179, %181 : vector<16x1008xf32>
    %cst_97 = arith.constant 0.000000e+00 : f32
    %183 = vector.broadcast %cst_97 : f32 to vector<16x1008xf32>
    %184 = arith.cmpf oge, %182, %183 : vector<16x1008xf32>
    %cst_98 = arith.constant 3.000000e-01 : f32
    %185 = vector.broadcast %cst_98 : f32 to vector<16x1008xf32>
    %186 = arith.mulf %185, %182 : vector<16x1008xf32>
    %187 = arith.select %184, %182, %186 : vector<16x1008xi1>, vector<16x1008xf32>
    %188 = vector.extract_strided_slice %187 {offsets = [0, 0], sizes = [16, 1005], strides = [1, 1]} : vector<16x1008xf32> to vector<16x1005xf32>
    %189 = vector.extract_strided_slice %187 {offsets = [0, 1], sizes = [16, 1005], strides = [1, 1]} : vector<16x1008xf32> to vector<16x1005xf32>
    %190 = arith.maximumf %188, %189 : vector<16x1005xf32>
    %191 = vector.extract_strided_slice %187 {offsets = [0, 2], sizes = [16, 1005], strides = [1, 1]} : vector<16x1008xf32> to vector<16x1005xf32>
    %192 = vector.extract_strided_slice %187 {offsets = [0, 3], sizes = [16, 1005], strides = [1, 1]} : vector<16x1008xf32> to vector<16x1005xf32>
    %193 = arith.maximumf %191, %192 : vector<16x1005xf32>
    %194 = arith.maximumf %190, %193 : vector<16x1005xf32>
    %c0_99 = arith.constant 0 : index
    %c0_100 = arith.constant 0 : index
    %c0_101 = arith.constant 0 : index
    %195 = vector.load %arg10[%c0_99, %c0_100, %c0_101] : memref<3x32x16xf32, #tpu.memory_space<vmem>>, vector<1x32x16xf32>
    %196 = vector.shape_cast %195 : vector<1x32x16xf32> to vector<32x16xf32>
    %197 = vector.extract_strided_slice %194 {offsets = [0, 0], sizes = [16, 1003], strides = [1, 1]} : vector<16x1005xf32> to vector<16x1003xf32>
    %cst_102 = arith.constant dense<0.000000e+00> : vector<32x1003xf32>
    %198 = tpu.matmul %196, %197, %cst_102 {dimension_numbers = #tpu.dot_dimension_numbers<[1], [0], [0], [1], [0, 0, 1, 1], [], []>} : vector<32x16xf32>, vector<16x1003xf32>, vector<32x1003xf32> -> vector<32x1003xf32>
    %c1_103 = arith.constant 1 : index
    %c0_104 = arith.constant 0 : index
    %c0_105 = arith.constant 0 : index
    %199 = vector.load %arg10[%c1_103, %c0_104, %c0_105] : memref<3x32x16xf32, #tpu.memory_space<vmem>>, vector<1x32x16xf32>
    %200 = vector.shape_cast %199 : vector<1x32x16xf32> to vector<32x16xf32>
    %201 = vector.extract_strided_slice %194 {offsets = [0, 1], sizes = [16, 1003], strides = [1, 1]} : vector<16x1005xf32> to vector<16x1003xf32>
    %cst_106 = arith.constant dense<0.000000e+00> : vector<32x1003xf32>
    %202 = tpu.matmul %200, %201, %cst_106 {dimension_numbers = #tpu.dot_dimension_numbers<[1], [0], [0], [1], [0, 0, 1, 1], [], []>} : vector<32x16xf32>, vector<16x1003xf32>, vector<32x1003xf32> -> vector<32x1003xf32>
    %203 = arith.addf %198, %202 : vector<32x1003xf32>
    %c2_107 = arith.constant 2 : index
    %c0_108 = arith.constant 0 : index
    %c0_109 = arith.constant 0 : index
    %204 = vector.load %arg10[%c2_107, %c0_108, %c0_109] : memref<3x32x16xf32, #tpu.memory_space<vmem>>, vector<1x32x16xf32>
    %205 = vector.shape_cast %204 : vector<1x32x16xf32> to vector<32x16xf32>
    %206 = vector.extract_strided_slice %194 {offsets = [0, 2], sizes = [16, 1003], strides = [1, 1]} : vector<16x1005xf32> to vector<16x1003xf32>
    %cst_110 = arith.constant dense<0.000000e+00> : vector<32x1003xf32>
    %207 = tpu.matmul %205, %206, %cst_110 {dimension_numbers = #tpu.dot_dimension_numbers<[1], [0], [0], [1], [0, 0, 1, 1], [], []>} : vector<32x16xf32>, vector<16x1003xf32>, vector<32x1003xf32> -> vector<32x1003xf32>
    %208 = arith.addf %203, %207 : vector<32x1003xf32>
    %c0_111 = arith.constant 0 : index
    %c0_112 = arith.constant 0 : index
    %209 = vector.load %arg11[%c0_111, %c0_112] : memref<32x1xf32, #tpu.memory_space<vmem>>, vector<32x1xf32>
    %210 = vector.broadcast %209 : vector<32x1xf32> to vector<32x1003xf32>
    %211 = arith.addf %208, %210 : vector<32x1003xf32>
    %c0_113 = arith.constant 0 : index
    %c0_114 = arith.constant 0 : index
    %212 = vector.load %arg12[%c0_113, %c0_114] : memref<32x1xf32, #tpu.memory_space<vmem>>, vector<32x1xf32>
    %213 = vector.broadcast %212 : vector<32x1xf32> to vector<32x1003xf32>
    %214 = arith.mulf %211, %213 : vector<32x1003xf32>
    %c0_115 = arith.constant 0 : index
    %c0_116 = arith.constant 0 : index
    %215 = vector.load %arg13[%c0_115, %c0_116] : memref<32x1xf32, #tpu.memory_space<vmem>>, vector<32x1xf32>
    %216 = vector.broadcast %215 : vector<32x1xf32> to vector<32x1003xf32>
    %217 = arith.addf %214, %216 : vector<32x1003xf32>
    %cst_117 = arith.constant 0.000000e+00 : f32
    %218 = vector.broadcast %cst_117 : f32 to vector<32x1003xf32>
    %219 = arith.cmpf oge, %217, %218 : vector<32x1003xf32>
    %cst_118 = arith.constant 3.000000e-01 : f32
    %220 = vector.broadcast %cst_118 : f32 to vector<32x1003xf32>
    %221 = arith.mulf %220, %217 : vector<32x1003xf32>
    %222 = arith.select %219, %217, %221 : vector<32x1003xi1>, vector<32x1003xf32>
    %223 = vector.extract_strided_slice %222 {offsets = [0, 0], sizes = [32, 1000], strides = [1, 1]} : vector<32x1003xf32> to vector<32x1000xf32>
    %224 = vector.extract_strided_slice %222 {offsets = [0, 1], sizes = [32, 1000], strides = [1, 1]} : vector<32x1003xf32> to vector<32x1000xf32>
    %225 = arith.maximumf %223, %224 : vector<32x1000xf32>
    %226 = vector.extract_strided_slice %222 {offsets = [0, 2], sizes = [32, 1000], strides = [1, 1]} : vector<32x1003xf32> to vector<32x1000xf32>
    %227 = vector.extract_strided_slice %222 {offsets = [0, 3], sizes = [32, 1000], strides = [1, 1]} : vector<32x1003xf32> to vector<32x1000xf32>
    %228 = arith.maximumf %226, %227 : vector<32x1000xf32>
    %229 = arith.maximumf %225, %228 : vector<32x1000xf32>
    %230 = arith.truncf %229 : vector<32x1000xf32> to vector<32x1000xbf16>
    %c1_119 = arith.constant 1 : index
    %c0_120 = arith.constant 0 : index
    %c0_121 = arith.constant 0 : index
    %231 = vector.load %arg14[%c1_119, %c0_120, %c0_121] : memref<2x32x1000xbf16, #tpu.memory_space<vmem>>, vector<1x32x1000xbf16>
    %232 = vector.shape_cast %231 : vector<1x32x1000xbf16> to vector<32x1000xbf16>
    %233 = vector.shape_cast %230 : vector<32x1000xbf16> to vector<1x32x1000xbf16>
    tpu.vector_store %arg14[%c1_119, %c0_120, %c0_121], %233 {strides = array<i32>} : memref<2x32x1000xbf16, #tpu.memory_space<vmem>>, vector<1x32x1000xbf16>,
    return
  }
  func.func @transform_0(%arg0: i32) -> (i32, i32, i32) {
    %c0_i32 = arith.constant 0 : i32
    %c0_i32_0 = arith.constant 0 : i32
    %c0_i32_1 = arith.constant 0 : i32
    %c0_i32_2 = arith.constant 0 : i32
    return %c0_i32, %c0_i32_0, %c0_i32_1 : i32, i32, i32
  }
  func.func @transform_1(%arg0: i32) -> (i32, i32, i32) {
    %c0_i32 = arith.constant 0 : i32
    %c0_i32_0 = arith.constant 0 : i32
    %c0_i32_1 = arith.constant 0 : i32
    %c0_i32_2 = arith.constant 0 : i32
    return %c0_i32, %c0_i32_0, %c0_i32_1 : i32, i32, i32
  }
  func.func @transform_2(%arg0: i32) -> (i32, i32) {
    %c0_i32 = arith.constant 0 : i32
    %c0_i32_0 = arith.constant 0 : i32
    %c0_i32_1 = arith.constant 0 : i32
    return %c0_i32, %c0_i32_0 : i32, i32
  }
  func.func @transform_3(%arg0: i32) -> (i32, i32) {
    %c0_i32 = arith.constant 0 : i32
    %c0_i32_0 = arith.constant 0 : i32
    %c0_i32_1 = arith.constant 0 : i32
    return %c0_i32, %c0_i32_0 : i32, i32
  }
  func.func @transform_4(%arg0: i32) -> (i32, i32) {
    %c0_i32 = arith.constant 0 : i32
    %c0_i32_0 = arith.constant 0 : i32
    %c0_i32_1 = arith.constant 0 : i32
    return %c0_i32, %c0_i32_0 : i32, i32
  }
  func.func @transform_5(%arg0: i32) -> (i32, i32, i32) {
    %c0_i32 = arith.constant 0 : i32
    %c0_i32_0 = arith.constant 0 : i32
    %c0_i32_1 = arith.constant 0 : i32
    %c0_i32_2 = arith.constant 0 : i32
    return %c0_i32, %c0_i32_0, %c0_i32_1 : i32, i32, i32
  }
  func.func @transform_6(%arg0: i32) -> (i32, i32) {
    %c0_i32 = arith.constant 0 : i32
    %c0_i32_0 = arith.constant 0 : i32
    %c0_i32_1 = arith.constant 0 : i32
    return %c0_i32, %c0_i32_0 : i32, i32
  }
  func.func @transform_7(%arg0: i32) -> (i32, i32) {
    %c0_i32 = arith.constant 0 : i32
    %c0_i32_0 = arith.constant 0 : i32
    %c0_i32_1 = arith.constant 0 : i32
    return %c0_i32, %c0_i32_0 : i32, i32
  }
  func.func @transform_8(%arg0: i32) -> (i32, i32) {
    %c0_i32 = arith.constant 0 : i32
    %c0_i32_0 = arith.constant 0 : i32
    %c0_i32_1 = arith.constant 0 : i32
    return %c0_i32, %c0_i32_0 : i32, i32
  }
  func.func @transform_9(%arg0: i32) -> (i32, i32, i32) {
    %c0_i32 = arith.constant 0 : i32
    %c0_i32_0 = arith.constant 0 : i32
    %c0_i32_1 = arith.constant 0 : i32
    %c0_i32_2 = arith.constant 0 : i32
    return %c0_i32, %c0_i32_0, %c0_i32_1 : i32, i32, i32
  }
  func.func @transform_10(%arg0: i32) -> (i32, i32) {
    %c0_i32 = arith.constant 0 : i32
    %c0_i32_0 = arith.constant 0 : i32
    %c0_i32_1 = arith.constant 0 : i32
    return %c0_i32, %c0_i32_0 : i32, i32
  }
  func.func @transform_11(%arg0: i32) -> (i32, i32) {
    %c0_i32 = arith.constant 0 : i32
    %c0_i32_0 = arith.constant 0 : i32
    %c0_i32_1 = arith.constant 0 : i32
    return %c0_i32, %c0_i32_0 : i32, i32
  }
  func.func @transform_12(%arg0: i32) -> (i32, i32) {
    %c0_i32 = arith.constant 0 : i32
    %c0_i32_0 = arith.constant 0 : i32
    %c0_i32_1 = arith.constant 0 : i32
    return %c0_i32, %c0_i32_0 : i32, i32
  }
  func.func @transform_13(%arg0: i32) -> (i32, i32, i32) {
    %c0_i32 = arith.constant 0 : i32
    %c0_i32_0 = arith.constant 0 : i32
    %c0_i32_1 = arith.constant 0 : i32
    %c0_i32_2 = arith.constant 0 : i32
    return %c0_i32, %c0_i32_0, %c0_i32_1 : i32, i32, i32
  }
}

</mosaic_0001>

<llo_original>
// kernel: tpu_custom_call.1
$region0: #{tpu_custom_call.1}
  #allocation0 [shape = 'u32[]', space=smem, size = 0x4, offset = 0x4, fixed_abs, tag = 'smem constant byte address 0x4 - core index']
  #allocation1 [shape = 'u32[72,128]{1,0:T(1,128)}', space=vmem, size = 0x9000, scoped, tag = 'internal scratch']
  %s0 = inlined_call_operand.vmem [shape: f32[2,1,1015], index: 0, kind: input, shape index: {}]
  %s1 = inlined_call_operand.vmem [shape: f32[3,8,1], index: 1, kind: input, shape index: {}]
  %s2 = inlined_call_operand.vmem [shape: f32[8,1], index: 2, kind: input, shape index: {}]
  %s3 = inlined_call_operand.vmem [shape: f32[8,1], index: 3, kind: input, shape index: {}]
  %s4 = inlined_call_operand.vmem [shape: f32[8,1], index: 4, kind: input, shape index: {}]
  %s5 = inlined_call_operand.vmem [shape: f32[3,16,8], index: 5, kind: input, shape index: {}]
  %s6 = inlined_call_operand.vmem [shape: f32[16,1], index: 6, kind: input, shape index: {}]
  %s7 = inlined_call_operand.vmem [shape: f32[16,1], index: 7, kind: input, shape index: {}]
  %s8 = inlined_call_operand.vmem [shape: f32[16,1], index: 8, kind: input, shape index: {}]
  %s9 = inlined_call_operand.vmem [shape: f32[3,32,16], index: 9, kind: input, shape index: {}]
  %s10 = inlined_call_operand.vmem [shape: f32[32,1], index: 10, kind: input, shape index: {}]
  %s11 = inlined_call_operand.vmem [shape: f32[32,1], index: 11, kind: input, shape index: {}]
  %s12 = inlined_call_operand.vmem [shape: f32[32,1], index: 12, kind: input, shape index: {}]
  %s13 = inlined_call_operand.hbm [shape: bf16[2,32,1000], index: 13, kind: output, shape index: {}]
  %s14 = sld [smem:[#allocation0]]
  $region62: #{tpu_custom_call.1} parent=0
    _
  %s16 = ssub.s32 1, %s14
  %s17 = scalar_select 0, %s16, %s14
  $region1: #{tpu_custom_call.1} parent=0
    #allocation2 [shape = 'u8[131072]{0}', space=vmem, size = 0x20000, scoped, tag = 'output window, operand 0, single buffered']
    #allocation3 [shape = 's32[1]{0}', space=sflag, size = 0x4, scoped, tag = 'scoped memory for tpu_custom_call.1']
    %18 = vsyncpa [#allocation3], 0
    // Predicated region
    $region2: #{tpu_custom_call.1} parent=1 // pred_check
      _
    $region3: #{tpu_custom_call.1} parent=1 // pred_check_branch
      %20 = sbr.rel (0) target = $region5
    $region4: #{tpu_custom_call.1} parent=1 // pred_region
      _
    $region5: #{tpu_custom_call.1} parent=1 // pred_fallthru
      _
    // Predicated region
    $region6: #{tpu_custom_call.1} parent=1 // pred_check
      _
    $region7: #{tpu_custom_call.1} parent=1 // pred_check_branch
      %22 = sbr.rel (0) target = $region9
    $region8: #{tpu_custom_call.1} parent=1 // pred_region
      _
    $region9: #{tpu_custom_call.1} parent=1 // pred_fallthru
      _
    // Predicated region
    $region10: #{tpu_custom_call.1} parent=1 // pred_check
      _
    $region11: #{tpu_custom_call.1} parent=1 // pred_check_branch
      %24 = sbr.rel (0) target = $region13
    $region12: #{tpu_custom_call.1} parent=1 // pred_region
      _
    $region13: #{tpu_custom_call.1} parent=1 // pred_fallthru
      _
    // Predicated region
    $region14: #{tpu_custom_call.1} parent=1 // pred_check
      _
    $region15: #{tpu_custom_call.1} parent=1 // pred_check_branch
      %26 = sbr.rel (0) target = $region17
    $region16: #{tpu_custom_call.1} parent=1 // pred_region
      _
    $region17: #{tpu_custom_call.1} parent=1 // pred_fallthru
      _
    // Predicated region
    $region18: #{tpu_custom_call.1} parent=1 // pred_check
      _
    $region19: #{tpu_custom_call.1} parent=1 // pred_check_branch
      %28 = sbr.rel (0) target = $region21
    $region20: #{tpu_custom_call.1} parent=1 // pred_region
      _
    $region21: #{tpu_custom_call.1} parent=1 // pred_fallthru
      _
    // Predicated region
    $region22: #{tpu_custom_call.1} parent=1 // pred_check
      _
    $region23: #{tpu_custom_call.1} parent=1 // pred_check_branch
      %30 = sbr.rel (0) target = $region25
    $region24: #{tpu_custom_call.1} parent=1 // pred_region
      _
    $region25: #{tpu_custom_call.1} parent=1 // pred_fallthru
      _
    // Predicated region
    $region26: #{tpu_custom_call.1} parent=1 // pred_check
      _
    $region27: #{tpu_custom_call.1} parent=1 // pred_check_branch
      %32 = sbr.rel (0) target = $region29
    $region28: #{tpu_custom_call.1} parent=1 // pred_region
      _
    $region29: #{tpu_custom_call.1} parent=1 // pred_fallthru
      _
    // Predicated region
    $region30: #{tpu_custom_call.1} parent=1 // pred_check
      _
    $region31: #{tpu_custom_call.1} parent=1 // pred_check_branch
      %34 = sbr.rel (0) target = $region33
    $region32: #{tpu_custom_call.1} parent=1 // pred_region
      _
    $region33: #{tpu_custom_call.1} parent=1 // pred_fallthru
      _
    // Predicated region
    $region34: #{tpu_custom_call.1} parent=1 // pred_check
      _
    $region35: #{tpu_custom_call.1} parent=1 // pred_check_branch
      %36 = sbr.rel (0) target = $region37
    $region36: #{tpu_custom_call.1} parent=1 // pred_region
      _
    $region37: #{tpu_custom_call.1} parent=1 // pred_fallthru
      _
    // Predicated region
    $region38: #{tpu_custom_call.1} parent=1 // pred_check
      _
    $region39: #{tpu_custom_call.1} parent=1 // pred_check_branch
      %38 = sbr.rel (0) target = $region41
    $region40: #{tpu_custom_call.1} parent=1 // pred_region
      _
    $region41: #{tpu_custom_call.1} parent=1 // pred_fallthru
      _
    // Predicated region
    $region42: #{tpu_custom_call.1} parent=1 // pred_check
      _
    $region43: #{tpu_custom_call.1} parent=1 // pred_check_branch
      %40 = sbr.rel (0) target = $region45
    $region44: #{tpu_custom_call.1} parent=1 // pred_region
      _
    $region45: #{tpu_custom_call.1} parent=1 // pred_fallthru
      _
    // Predicated region
    $region46: #{tpu_custom_call.1} parent=1 // pred_check
      _
    $region47: #{tpu_custom_call.1} parent=1 // pred_check_branch
      %42 = sbr.rel (0) target = $region49
    $region48: #{tpu_custom_call.1} parent=1 // pred_region
      _
    $region49: #{tpu_custom_call.1} parent=1 // pred_fallthru
      _
    // Predicated region
    $region50: #{tpu_custom_call.1} parent=1 // pred_check
      _
    $region51: #{tpu_custom_call.1} parent=1 // pred_check_branch
      %44 = sbr.rel (0) target = $region53
    $region52: #{tpu_custom_call.1} parent=1 // pred_region
      _
    $region53: #{tpu_custom_call.1} parent=1 // pred_fallthru
      _
    %v45 = vld [vmem:[%s0] sm:$0xff]
    %v46 = vld [vmem:[%s1] sm:$0xff]
    %48 = vset.pattern.permute.xlu0 0
    %49 = vperm.xlu0 %48, %v46
    %v50 = vpop.permute.xlu0 %49
    %v53 = vperm.slane %v45, 0
    %v54 = vperm.slane %v45, 1
    %v55 = vperm.slane %v45, 2
    %v56 = vperm.slane %v45, 3
    %v57 = vperm.slane %v45, 4
    %v58 = vperm.slane %v45, 5
    %v59 = vperm.slane %v45, 6
    %v60 = vperm.slane %v45, 7
    %v69 = vmul.f32 %v50, %v53
    %v70 = vmul.f32 %v50, %v54
    %v71 = vmul.f32 %v50, %v55
    %v72 = vmul.f32 %v50, %v56
    %v73 = vmul.f32 %v50, %v57
    %v74 = vmul.f32 %v50, %v58
    %v75 = vmul.f32 %v50, %v59
    %v76 = vmul.f32 %v50, %v60
    %s77 = scalar_lea.vmem %s1, 8
    %v78 = vld [vmem:[%s77] sm:$0xff]
    %80 = vset.pattern.permute.xlu0 0
    %81 = vperm.xlu0 %80, %v78
    %v82 = vpop.permute.xlu0 %81
    %v84 = vmul.f32 %v82, %v53
    %v85 = vmul.f32 %v82, %v54
    %v86 = vmul.f32 %v82, %v55
    %v87 = vmul.f32 %v82, %v56
    %v88 = vmul.f32 %v82, %v57
    %v89 = vmul.f32 %v82, %v58
    %v90 = vmul.f32 %v82, %v59
    %v91 = vmul.f32 %v82, %v60
    %100 = vrot.lane.b32.xlu0 %v84, 127
    %v101 = vpop.permute.xlu0 %100
    %102 = vrot.lane.b32.xlu0 %v85, 127
    %v103 = vpop.permute.xlu0 %102
    %104 = vrot.lane.b32.xlu0 %v86, 127
    %v105 = vpop.permute.xlu0 %104
    %106 = vrot.lane.b32.xlu0 %v87, 127
    %v107 = vpop.permute.xlu0 %106
    %108 = vrot.lane.b32.xlu0 %v88, 127
    %v109 = vpop.permute.xlu0 %108
    %110 = vrot.lane.b32.xlu0 %v89, 127
    %v111 = vpop.permute.xlu0 %110
    %112 = vrot.lane.b32.xlu0 %v90, 127
    %v113 = vpop.permute.xlu0 %112
    %114 = vrot.lane.b32.xlu0 %v91, 127
    %v115 = vpop.permute.xlu0 %114
    %vm116 = vcmask 1039360
    %v117 = vsel %vm116, %v101, %v103
    %v118 = vsel %vm116, %v103, %v105
    %v119 = vsel %vm116, %v105, %v107
    %v120 = vsel %vm116, %v107, %v109
    %v121 = vsel %vm116, %v109, %v111
    %v122 = vsel %vm116, %v111, %v113
    %v123 = vsel %vm116, %v113, %v115
    %v132 = vadd.f32 %v69, %v117
    %v133 = vadd.f32 %v70, %v118
    %v134 = vadd.f32 %v71, %v119
    %v135 = vadd.f32 %v72, %v120
    %v136 = vadd.f32 %v73, %v121
    %v137 = vadd.f32 %v74, %v122
    %v138 = vadd.f32 %v75, %v123
    %v139 = vadd.f32 %v76, %v115
    %s140 = scalar_lea.vmem %s1, 16
    %v141 = vld [vmem:[%s140] sm:$0xff]
    %143 = vset.pattern.permute.xlu0 0
    %144 = vperm.xlu0 %143, %v141
    %v145 = vpop.permute.xlu0 %144
    %v147 = vmul.f32 %v145, %v53
    %v148 = vmul.f32 %v145, %v54
    %v149 = vmul.f32 %v145, %v55
    %v150 = vmul.f32 %v145, %v56
    %v151 = vmul.f32 %v145, %v57
    %v152 = vmul.f32 %v145, %v58
    %v153 = vmul.f32 %v145, %v59
    %v154 = vmul.f32 %v145, %v60
    %163 = vrot.lane.b32.xlu0 %v147, 126
    %v164 = vpop.permute.xlu0 %163
    %165 = vrot.lane.b32.xlu0 %v148, 126
    %v166 = vpop.permute.xlu0 %165
    %167 = vrot.lane.b32.xlu0 %v149, 126
    %v168 = vpop.permute.xlu0 %167
    %169 = vrot.lane.b32.xlu0 %v150, 126
    %v170 = vpop.permute.xlu0 %169
    %171 = vrot.lane.b32.xlu0 %v151, 126
    %v172 = vpop.permute.xlu0 %171
    %173 = vrot.lane.b32.xlu0 %v152, 126
    %v174 = vpop.permute.xlu0 %173
    %175 = vrot.lane.b32.xlu0 %v153, 126
    %v176 = vpop.permute.xlu0 %175
    %177 = vrot.lane.b32.xlu0 %v154, 126
    %v178 = vpop.permute.xlu0 %177
    %vm179 = vcmask 1031168
    %v180 = vsel %vm179, %v164, %v166
    %v181 = vsel %vm179, %v166, %v168
    %v182 = vsel %vm179, %v168, %v170
    %v183 = vsel %vm179, %v170, %v172
    %v184 = vsel %vm179, %v172, %v174
    %v185 = vsel %vm179, %v174, %v176
    %v186 = vsel %vm179, %v176, %v178
    %v195 = vadd.f32 %v132, %v180
    %v196 = vadd.f32 %v133, %v181
    %v197 = vadd.f32 %v134, %v182
    %v198 = vadd.f32 %v135, %v183
    %v199 = vadd.f32 %v136, %v184
    %v200 = vadd.f32 %v137, %v185
    %v201 = vadd.f32 %v138, %v186
    %v202 = vadd.f32 %v139, %v178
    %v203 = vld [vmem:[%s2] sm:$0xff]
    %205 = vset.pattern.permute.xlu0 0
    %206 = vperm.xlu0 %205, %v203
    %v207 = vpop.permute.xlu0 %206
    %v209 = vadd.f32 %v195, %v207
    %v210 = vadd.f32 %v196, %v207
    %v211 = vadd.f32 %v197, %v207
    %v212 = vadd.f32 %v198, %v207
    %v213 = vadd.f32 %v199, %v207
    %v214 = vadd.f32 %v200, %v207
    %v215 = vadd.f32 %v201, %v207
    %v216 = vadd.f32 %v202, %v207
    %v217 = vld [vmem:[%s3] sm:$0xff]
    %219 = vset.pattern.permute.xlu0 0
    %220 = vperm.xlu0 %219, %v217
    %v221 = vpop.permute.xlu0 %220
    %v223 = vmul.f32 %v209, %v221
    %v224 = vmul.f32 %v210, %v221
    %v225 = vmul.f32 %v211, %v221
    %v226 = vmul.f32 %v212, %v221
    %v227 = vmul.f32 %v213, %v221
    %v228 = vmul.f32 %v214, %v221
    %v229 = vmul.f32 %v215, %v221
    %v230 = vmul.f32 %v216, %v221
    %v231 = vld [vmem:[%s4] sm:$0xff]
    %233 = vset.pattern.permute.xlu0 0
    %234 = vperm.xlu0 %233, %v231
    %v235 = vpop.permute.xlu0 %234
    %v237 = vadd.f32 %v223, %v235
    %v238 = vadd.f32 %v224, %v235
    %v239 = vadd.f32 %v225, %v235
    %v240 = vadd.f32 %v226, %v235
    %v241 = vadd.f32 %v227, %v235
    %v242 = vadd.f32 %v228, %v235
    %v243 = vadd.f32 %v229, %v235
    %v244 = vadd.f32 %v230, %v235
    %vm245 = vcmp.ge.f32.partialorder %v237, 0.0
    %vm246 = vcmp.ge.f32.partialorder %v238, 0.0
    %vm247 = vcmp.ge.f32.partialorder %v239, 0.0
    %vm248 = vcmp.ge.f32.partialorder %v240, 0.0
    %vm249 = vcmp.ge.f32.partialorder %v241, 0.0
    %vm250 = vcmp.ge.f32.partialorder %v242, 0.0
    %vm251 = vcmp.ge.f32.partialorder %v243, 0.0
    %vm252 = vcmp.ge.f32.partialorder %v244, 0.0
    %v253 = vmul.f32 %v237, 0.3
    %v254 = vmul.f32 %v238, 0.3
    %v255 = vmul.f32 %v239, 0.3
    %v256 = vmul.f32 %v240, 0.3
    %v257 = vmul.f32 %v241, 0.3
    %v258 = vmul.f32 %v242, 0.3
    %v259 = vmul.f32 %v243, 0.3
    %v260 = vmul.f32 %v244, 0.3
    %v261 = vsel %vm245, %v237, %v253
    %v262 = vsel %vm246, %v238, %v254
    %v263 = vsel %vm247, %v239, %v255
    %v264 = vsel %vm248, %v240, %v256
    %v265 = vsel %vm249, %v241, %v257
    %v266 = vsel %vm250, %v242, %v258
    %v267 = vsel %vm251, %v243, %v259
    %v268 = vsel %vm252, %v244, %v260
    %277 = vrot.lane.b32.xlu0 %v261, 127
    %v278 = vpop.permute.xlu0 %277
    %279 = vrot.lane.b32.xlu0 %v262, 127
    %v280 = vpop.permute.xlu0 %279
    %281 = vrot.lane.b32.xlu0 %v263, 127
    %v282 = vpop.permute.xlu0 %281
    %283 = vrot.lane.b32.xlu0 %v264, 127
    %v284 = vpop.permute.xlu0 %283
    %285 = vrot.lane.b32.xlu0 %v265, 127
    %v286 = vpop.permute.xlu0 %285
    %287 = vrot.lane.b32.xlu0 %v266, 127
    %v288 = vpop.permute.xlu0 %287
    %289 = vrot.lane.b32.xlu0 %v267, 127
    %v290 = vpop.permute.xlu0 %289
    %291 = vrot.lane.b32.xlu0 %v268, 127
    %v292 = vpop.permute.xlu0 %291
    %v293 = vsel %vm116, %v278, %v280
    %v294 = vsel %vm116, %v280, %v282
    %v295 = vsel %vm116, %v282, %v284
    %v296 = vsel %vm116, %v284, %v286
    %v297 = vsel %vm116, %v286, %v288
    %v298 = vsel %vm116, %v288, %v290
    %v299 = vsel %vm116, %v290, %v292
    %v308 = vmax.f32 %v261, %v293
    %v309 = vmax.f32 %v262, %v294
    %v310 = vmax.f32 %v263, %v295
    %v311 = vmax.f32 %v264, %v296
    %v312 = vmax.f32 %v265, %v297
    %v313 = vmax.f32 %v266, %v298
    %v314 = vmax.f32 %v267, %v299
    %v315 = vmax.f32 %v268, %v292
    %324 = vrot.lane.b32.xlu0 %v308, 126
    %v325 = vpop.permute.xlu0 %324
    %326 = vrot.lane.b32.xlu0 %v309, 126
    %v327 = vpop.permute.xlu0 %326
    %328 = vrot.lane.b32.xlu0 %v310, 126
    %v329 = vpop.permute.xlu0 %328
    %330 = vrot.lane.b32.xlu0 %v311, 126
    %v331 = vpop.permute.xlu0 %330
    %332 = vrot.lane.b32.xlu0 %v312, 126
    %v333 = vpop.permute.xlu0 %332
    %334 = vrot.lane.b32.xlu0 %v313, 126
    %v335 = vpop.permute.xlu0 %334
    %336 = vrot.lane.b32.xlu0 %v314, 126
    %v337 = vpop.permute.xlu0 %336
    %338 = vrot.lane.b32.xlu0 %v315, 126
    %v339 = vpop.permute.xlu0 %338
    %v340 = vsel %vm179, %v325, %v327
    %v341 = vsel %vm179, %v327, %v329
    %v342 = vsel %vm179, %v329, %v331
    %v343 = vsel %vm179, %v331, %v333
    %v344 = vsel %vm179, %v333, %v335
    %v345 = vsel %vm179, %v335, %v337
    %v346 = vsel %vm179, %v337, %v339
    %v355 = vmax.f32 %v308, %v340
    %v356 = vmax.f32 %v309, %v341
    %v357 = vmax.f32 %v310, %v342
    %v358 = vmax.f32 %v311, %v343
    %v359 = vmax.f32 %v312, %v344
    %v360 = vmax.f32 %v313, %v345
    %v361 = vmax.f32 %v314, %v346
    %v362 = vmax.f32 %v315, %v339
    %v363 = vld [vmem:[%s5] sm:$0xff]
    %v364 = vld [vmem:[%s5 + $0x8] sm:$0xff]
    %s365 = scalar_lea.vmem %s5, 16
    %v366 = vld [vmem:[%s365] sm:$0xff]
    %v367 = vld [vmem:[%s365 + $0x8] sm:$0xff]
    %376 = vrot.lane.b32.xlu0 %v355, 127
    %v377 = vpop.permute.xlu0 %376
    %378 = vrot.lane.b32.xlu0 %v356, 127
    %v379 = vpop.permute.xlu0 %378
    %380 = vrot.lane.b32.xlu0 %v357, 127
    %v381 = vpop.permute.xlu0 %380
    %382 = vrot.lane.b32.xlu0 %v358, 127
    %v383 = vpop.permute.xlu0 %382
    %384 = vrot.lane.b32.xlu0 %v359, 127
    %v385 = vpop.permute.xlu0 %384
    %386 = vrot.lane.b32.xlu0 %v360, 127
    %v387 = vpop.permute.xlu0 %386
    %388 = vrot.lane.b32.xlu0 %v361, 127
    %v389 = vpop.permute.xlu0 %388
    %390 = vrot.lane.b32.xlu0 %v362, 127
    %v391 = vpop.permute.xlu0 %390
    %v392 = vsel %vm116, %v377, %v379
    %v393 = vsel %vm116, %v379, %v381
    %v394 = vsel %vm116, %v381, %v383
    %v395 = vsel %vm116, %v383, %v385
    %v396 = vsel %vm116, %v385, %v387
    %v397 = vsel %vm116, %v387, %v389
    %v398 = vsel %vm116, %v389, %v391
    %vm407 = vcmask 64512
    %v409 = vsel %vm407, %v366, 0
    %v412 = vsel %vm407, %v367, 0
    %414 = vmatpush.msra.mxu0 0.0
    %415 = vmatpush.msra.mxu0 0.0
    %416 = vmatpush.msra.mxu0 0.0
    %417 = vmatpush.msra.mxu0 0.0
    %418 = vmatpush.msra.mxu0 0.0
    %419 = vmatpush.msra.mxu0 0.0
    %420 = vmatpush.msra.mxu0 0.0
    %421 = vmatpush.msra.mxu0 0.0
    %422 = vmatpush.msra.mxu0 0.0
    %423 = vmatpush.msra.mxu0 0.0
    %424 = vmatpush.msra.mxu0 0.0
    %425 = vmatpush.msra.mxu0 0.0
    %426 = vmatpush.msra.mxu0 0.0
    %427 = vmatpush.msra.mxu0 0.0
    %428 = vmatpush.msra.mxu0 0.0
    %429 = vmatpush.msra.mxu0 %v392
    %430 = vmatmul.f32.gmra.mxu0 %v409
    %v431 = vpop.f32.mrf.mxu0
    %v432 = vadd.f32 0.0, %v431
    %433 = vmatmul.f32.gmra.mxu0 %v412
    %v434 = vpop.f32.mrf.mxu0
    %v435 = vadd.f32 0.0, %v434
    %436 = vdwg.mxu0
    %437 = vmatpush.msra.mxu0 0.0
    %438 = vmatpush.msra.mxu0 0.0
    %439 = vmatpush.msra.mxu0 0.0
    %440 = vmatpush.msra.mxu0 0.0
    %441 = vmatpush.msra.mxu0 0.0
    %442 = vmatpush.msra.mxu0 0.0
    %443 = vmatpush.msra.mxu0 0.0
    %444 = vmatpush.msra.mxu0 0.0
    %445 = vmatpush.msra.mxu0 0.0
    %446 = vmatpush.msra.mxu0 0.0
    %447 = vmatpush.msra.mxu0 0.0
    %448 = vmatpush.msra.mxu0 0.0
    %449 = vmatpush.msra.mxu0 0.0
    %450 = vmatpush.msra.mxu0 0.0
    %451 = vmatpush.msra.mxu0 0.0
    %452 = vmatpush.msra.mxu0 %v393
    %453 = vmatmul.f32.gmra.mxu0 %v409
    %v454 = vpop.f32.mrf.mxu0
    %v455 = vadd.f32 0.0, %v454
    %456 = vmatmul.f32.gmra.mxu0 %v412
    %v457 = vpop.f32.mrf.mxu0
    %v458 = vadd.f32 0.0, %v457
    %459 = vdwg.mxu0
    %460 = vmatpush.msra.mxu0 0.0
    %461 = vmatpush.msra.mxu0 0.0
    %462 = vmatpush.msra.mxu0 0.0
    %463 = vmatpush.msra.mxu0 0.0
    %464 = vmatpush.msra.mxu0 0.0
    %465 = vmatpush.msra.mxu0 0.0
    %466 = vmatpush.msra.mxu0 0.0
    %467 = vmatpush.msra.mxu0 0.0
    %468 = vmatpush.msra.mxu0 0.0
    %469 = vmatpush.msra.mxu0 0.0
    %470 = vmatpush.msra.mxu0 0.0
    %471 = vmatpush.msra.mxu0 0.0
    %472 = vmatpush.msra.mxu0 0.0
    %473 = vmatpush.msra.mxu0 0.0
    %474 = vmatpush.msra.mxu0 0.0
    %475 = vmatpush.msra.mxu0 %v394
    %476 = vmatmul.f32.gmra.mxu0 %v409
    %v477 = vpop.f32.mrf.mxu0
    %v478 = vadd.f32 0.0, %v477
    %479 = vmatmul.f32.gmra.mxu0 %v412
    %v480 = vpop.f32.mrf.mxu0
    %v481 = vadd.f32 0.0, %v480
    %482 = vdwg.mxu0
    %483 = vmatpush.msra.mxu0 0.0
    %484 = vmatpush.msra.mxu0 0.0
    %485 = vmatpush.msra.mxu0 0.0
    %486 = vmatpush.msra.mxu0 0.0
    %487 = vmatpush.msra.mxu0 0.0
    %488 = vmatpush.msra.mxu0 0.0
    %489 = vmatpush.msra.mxu0 0.0
    %490 = vmatpush.msra.mxu0 0.0
    %491 = vmatpush.msra.mxu0 0.0
    %492 = vmatpush.msra.mxu0 0.0
    %493 = vmatpush.msra.mxu0 0.0
    %494 = vmatpush.msra.mxu0 0.0
    %495 = vmatpush.msra.mxu0 0.0
    %496 = vmatpush.msra.mxu0 0.0
    %497 = vmatpush.msra.mxu0 0.0
    %498 = vmatpush.msra.mxu0 %v395
    %499 = vmatmul.f32.gmra.mxu0 %v409
    %v500 = vpop.f32.mrf.mxu0
    %v501 = vadd.f32 0.0, %v500
    %502 = vmatmul.f32.gmra.mxu0 %v412
    %v503 = vpop.f32.mrf.mxu0
    %v504 = vadd.f32 0.0, %v503
    %505 = vdwg.mxu0
    %506 = vmatpush.msra.mxu0 0.0
    %507 = vmatpush.msra.mxu0 0.0
    %508 = vmatpush.msra.mxu0 0.0
    %509 = vmatpush.msra.mxu0 0.0
    %510 = vmatpush.msra.mxu0 0.0
    %511 = vmatpush.msra.mxu0 0.0
    %512 = vmatpush.msra.mxu0 0.0
    %513 = vmatpush.msra.mxu0 0.0
    %514 = vmatpush.msra.mxu0 0.0
    %515 = vmatpush.msra.mxu0 0.0
    %516 = vmatpush.msra.mxu0 0.0
    %517 = vmatpush.msra.mxu0 0.0
    %518 = vmatpush.msra.mxu0 0.0
    %519 = vmatpush.msra.mxu0 0.0
    %520 = vmatpush.msra.mxu0 0.0
    %521 = vmatpush.msra.mxu0 %v396
    %522 = vmatmul.f32.gmra.mxu0 %v409
    %v523 = vpop.f32.mrf.mxu0
    %v524 = vadd.f32 0.0, %v523
    %525 = vmatmul.f32.gmra.mxu0 %v412
    %v526 = vpop.f32.mrf.mxu0
    %v527 = vadd.f32 0.0, %v526
    %528 = vdwg.mxu0
    %529 = vmatpush.msra.mxu0 0.0
    %530 = vmatpush.msra.mxu0 0.0
    %531 = vmatpush.msra.mxu0 0.0
    %532 = vmatpush.msra.mxu0 0.0
    %533 = vmatpush.msra.mxu0 0.0
    %534 = vmatpush.msra.mxu0 0.0
    %535 = vmatpush.msra.mxu0 0.0
    %536 = vmatpush.msra.mxu0 0.0
    %537 = vmatpush.msra.mxu0 0.0
    %538 = vmatpush.msra.mxu0 0.0
    %539 = vmatpush.msra.mxu0 0.0
    %540 = vmatpush.msra.mxu0 0.0
    %541 = vmatpush.msra.mxu0 0.0
    %542 = vmatpush.msra.mxu0 0.0
    %543 = vmatpush.msra.mxu0 0.0
    %544 = vmatpush.msra.mxu0 %v397
    %545 = vmatmul.f32.gmra.mxu0 %v409
    %v546 = vpop.f32.mrf.mxu0
    %v547 = vadd.f32 0.0, %v546
    %548 = vmatmul.f32.gmra.mxu0 %v412
    %v549 = vpop.f32.mrf.mxu0
    %v550 = vadd.f32 0.0, %v549
    %551 = vdwg.mxu0
    %552 = vmatpush.msra.mxu0 0.0
    %553 = vmatpush.msra.mxu0 0.0
    %554 = vmatpush.msra.mxu0 0.0
    %555 = vmatpush.msra.mxu0 0.0
    %556 = vmatpush.msra.mxu0 0.0
    %557 = vmatpush.msra.mxu0 0.0
    %558 = vmatpush.msra.mxu0 0.0
    %559 = vmatpush.msra.mxu0 0.0
    %560 = vmatpush.msra.mxu0 0.0
    %561 = vmatpush.msra.mxu0 0.0
    %562 = vmatpush.msra.mxu0 0.0
    %563 = vmatpush.msra.mxu0 0.0
    %564 = vmatpush.msra.mxu0 0.0
    %565 = vmatpush.msra.mxu0 0.0
    %566 = vmatpush.msra.mxu0 0.0
    %567 = vmatpush.msra.mxu0 %v398
    %568 = vmatmul.f32.gmra.mxu0 %v409
    %v569 = vpop.f32.mrf.mxu0
    %v570 = vadd.f32 0.0, %v569
    %571 = vmatmul.f32.gmra.mxu0 %v412
    %v572 = vpop.f32.mrf.mxu0
    %v573 = vadd.f32 0.0, %v572
    %574 = vdwg.mxu0
    %575 = vmatpush.msra.mxu0 0.0
    %576 = vmatpush.msra.mxu0 0.0
    %577 = vmatpush.msra.mxu0 0.0
    %578 = vmatpush.msra.mxu0 0.0
    %579 = vmatpush.msra.mxu0 0.0
    %580 = vmatpush.msra.mxu0 0.0
    %581 = vmatpush.msra.mxu0 0.0
    %582 = vmatpush.msra.mxu0 0.0
    %583 = vmatpush.msra.mxu0 0.0
    %584 = vmatpush.msra.mxu0 0.0
    %585 = vmatpush.msra.mxu0 0.0
    %586 = vmatpush.msra.mxu0 0.0
    %587 = vmatpush.msra.mxu0 0.0
    %588 = vmatpush.msra.mxu0 0.0
    %589 = vmatpush.msra.mxu0 0.0
    %590 = vmatpush.msra.mxu0 %v391
    %591 = vmatmul.f32.gmra.mxu0 %v409
    %v592 = vpop.f32.mrf.mxu0
    %v593 = vadd.f32 0.0, %v592
    %594 = vmatmul.f32.gmra.mxu0 %v412
    %v595 = vpop.f32.mrf.mxu0
    %v596 = vadd.f32 0.0, %v595
    %597 = vdwg.mxu0
    %v599 = vsel %vm407, %v363, 0
    %v602 = vsel %vm407, %v364, 0
    %604 = vmatpush.msra.mxu0 0.0
    %605 = vmatpush.msra.mxu0 0.0
    %606 = vmatpush.msra.mxu0 0.0
    %607 = vmatpush.msra.mxu0 0.0
    %608 = vmatpush.msra.mxu0 0.0
    %609 = vmatpush.msra.mxu0 0.0
    %610 = vmatpush.msra.mxu0 0.0
    %611 = vmatpush.msra.mxu0 0.0
    %612 = vmatpush.msra.mxu0 0.0
    %613 = vmatpush.msra.mxu0 0.0
    %614 = vmatpush.msra.mxu0 0.0
    %615 = vmatpush.msra.mxu0 0.0
    %616 = vmatpush.msra.mxu0 0.0
    %617 = vmatpush.msra.mxu0 0.0
    %618 = vmatpush.msra.mxu0 0.0
    %619 = vmatpush.msra.mxu0 %v355
    %620 = vmatmul.f32.gmra.mxu0 %v599
    %v621 = vpop.f32.mrf.mxu0
    %v622 = vadd.f32 %v432, %v621
    %623 = vmatmul.f32.gmra.mxu0 %v602
    %v624 = vpop.f32.mrf.mxu0
    %v625 = vadd.f32 %v435, %v624
    %626 = vdwg.mxu0
    %627 = vmatpush.msra.mxu0 0.0
    %628 = vmatpush.msra.mxu0 0.0
    %629 = vmatpush.msra.mxu0 0.0
    %630 = vmatpush.msra.mxu0 0.0
    %631 = vmatpush.msra.mxu0 0.0
    %632 = vmatpush.msra.mxu0 0.0
    %633 = vmatpush.msra.mxu0 0.0
    %634 = vmatpush.msra.mxu0 0.0
    %635 = vmatpush.msra.mxu0 0.0
    %636 = vmatpush.msra.mxu0 0.0
    %637 = vmatpush.msra.mxu0 0.0
    %638 = vmatpush.msra.mxu0 0.0
    %639 = vmatpush.msra.mxu0 0.0
    %640 = vmatpush.msra.mxu0 0.0
    %641 = vmatpush.msra.mxu0 0.0
    %642 = vmatpush.msra.mxu0 %v356
    %643 = vmatmul.f32.gmra.mxu0 %v599
    %v644 = vpop.f32.mrf.mxu0
    %v645 = vadd.f32 %v455, %v644
    %646 = vmatmul.f32.gmra.mxu0 %v602
    %v647 = vpop.f32.mrf.mxu0
    %v648 = vadd.f32 %v458, %v647
    %649 = vdwg.mxu0
    %650 = vmatpush.msra.mxu0 0.0
    %651 = vmatpush.msra.mxu0 0.0
    %652 = vmatpush.msra.mxu0 0.0
    %653 = vmatpush.msra.mxu0 0.0
    %654 = vmatpush.msra.mxu0 0.0
    %655 = vmatpush.msra.mxu0 0.0
    %656 = vmatpush.msra.mxu0 0.0
    %657 = vmatpush.msra.mxu0 0.0
    %658 = vmatpush.msra.mxu0 0.0
    %659 = vmatpush.msra.mxu0 0.0
    %660 = vmatpush.msra.mxu0 0.0
    %661 = vmatpush.msra.mxu0 0.0
    %662 = vmatpush.msra.mxu0 0.0
    %663 = vmatpush.msra.mxu0 0.0
    %664 = vmatpush.msra.mxu0 0.0
    %665 = vmatpush.msra.mxu0 %v357
    %666 = vmatmul.f32.gmra.mxu0 %v599
    %v667 = vpop.f32.mrf.mxu0
    %v668 = vadd.f32 %v478, %v667
    %669 = vmatmul.f32.gmra.mxu0 %v602
    %v670 = vpop.f32.mrf.mxu0
    %v671 = vadd.f32 %v481, %v670
    %672 = vdwg.mxu0
    %673 = vmatpush.msra.mxu0 0.0
    %674 = vmatpush.msra.mxu0 0.0
    %675 = vmatpush.msra.mxu0 0.0
    %676 = vmatpush.msra.mxu0 0.0
    %677 = vmatpush.msra.mxu0 0.0
    %678 = vmatpush.msra.mxu0 0.0
    %679 = vmatpush.msra.mxu0 0.0
    %680 = vmatpush.msra.mxu0 0.0
    %681 = vmatpush.msra.mxu0 0.0
    %682 = vmatpush.msra.mxu0 0.0
    %683 = vmatpush.msra.mxu0 0.0
    %684 = vmatpush.msra.mxu0 0.0
    %685 = vmatpush.msra.mxu0 0.0
    %686 = vmatpush.msra.mxu0 0.0
    %687 = vmatpush.msra.mxu0 0.0
    %688 = vmatpush.msra.mxu0 %v358
    %689 = vmatmul.f32.gmra.mxu0 %v599
    %v690 = vpop.f32.mrf.mxu0
    %v691 = vadd.f32 %v501, %v690
    %692 = vmatmul.f32.gmra.mxu0 %v602
    %v693 = vpop.f32.mrf.mxu0
    %v694 = vadd.f32 %v504, %v693
    %695 = vdwg.mxu0
    %696 = vmatpush.msra.mxu0 0.0
    %697 = vmatpush.msra.mxu0 0.0
    %698 = vmatpush.msra.mxu0 0.0
    %699 = vmatpush.msra.mxu0 0.0
    %700 = vmatpush.msra.mxu0 0.0
    %701 = vmatpush.msra.mxu0 0.0
    %702 = vmatpush.msra.mxu0 0.0
    %703 = vmatpush.msra.mxu0 0.0
    %704 = vmatpush.msra.mxu0 0.0
    %705 = vmatpush.msra.mxu0 0.0
    %706 = vmatpush.msra.mxu0 0.0
    %707 = vmatpush.msra.mxu0 0.0
    %708 = vmatpush.msra.mxu0 0.0
    %709 = vmatpush.msra.mxu0 0.0
    %710 = vmatpush.msra.mxu0 0.0
    %711 = vmatpush.msra.mxu0 %v359
    %712 = vmatmul.f32.gmra.mxu0 %v599
    %v713 = vpop.f32.mrf.mxu0
    %v714 = vadd.f32 %v524, %v713
    %715 = vmatmul.f32.gmra.mxu0 %v602
    %v716 = vpop.f32.mrf.mxu0
    %v717 = vadd.f32 %v527, %v716
    %718 = vdwg.mxu0
    %719 = vmatpush.msra.mxu0 0.0
    %720 = vmatpush.msra.mxu0 0.0
    %721 = vmatpush.msra.mxu0 0.0
    %722 = vmatpush.msra.mxu0 0.0
    %723 = vmatpush.msra.mxu0 0.0
    %724 = vmatpush.msra.mxu0 0.0
    %725 = vmatpush.msra.mxu0 0.0
    %726 = vmatpush.msra.mxu0 0.0
    %727 = vmatpush.msra.mxu0 0.0
    %728 = vmatpush.msra.mxu0 0.0
    %729 = vmatpush.msra.mxu0 0.0
    %730 = vmatpush.msra.mxu0 0.0
    %731 = vmatpush.msra.mxu0 0.0
    %732 = vmatpush.msra.mxu0 0.0
    %733 = vmatpush.msra.mxu0 0.0
    %734 = vmatpush.msra.mxu0 %v360
    %735 = vmatmul.f32.gmra.mxu0 %v599
    %v736 = vpop.f32.mrf.mxu0
    %v737 = vadd.f32 %v547, %v736
    %738 = vmatmul.f32.gmra.mxu0 %v602
    %v739 = vpop.f32.mrf.mxu0
    %v740 = vadd.f32 %v550, %v739
    %741 = vdwg.mxu0
    %742 = vmatpush.msra.mxu0 0.0
    %743 = vmatpush.msra.mxu0 0.0
    %744 = vmatpush.msra.mxu0 0.0
    %745 = vmatpush.msra.mxu0 0.0
    %746 = vmatpush.msra.mxu0 0.0
    %747 = vmatpush.msra.mxu0 0.0
    %748 = vmatpush.msra.mxu0 0.0
    %749 = vmatpush.msra.mxu0 0.0
    %750 = vmatpush.msra.mxu0 0.0
    %751 = vmatpush.msra.mxu0 0.0
    %752 = vmatpush.msra.mxu0 0.0
    %753 = vmatpush.msra.mxu0 0.0
    %754 = vmatpush.msra.mxu0 0.0
    %755 = vmatpush.msra.mxu0 0.0
    %756 = vmatpush.msra.mxu0 0.0
    %757 = vmatpush.msra.mxu0 %v361
    %758 = vmatmul.f32.gmra.mxu0 %v599
    %v759 = vpop.f32.mrf.mxu0
    %v760 = vadd.f32 %v570, %v759
    %761 = vmatmul.f32.gmra.mxu0 %v602
    %v762 = vpop.f32.mrf.mxu0
    %v763 = vadd.f32 %v573, %v762
    %764 = vdwg.mxu0
    %765 = vmatpush.msra.mxu0 0.0
    %766 = vmatpush.msra.mxu0 0.0
    %767 = vmatpush.msra.mxu0 0.0
    %768 = vmatpush.msra.mxu0 0.0
    %769 = vmatpush.msra.mxu0 0.0
    %770 = vmatpush.msra.mxu0 0.0
    %771 = vmatpush.msra.mxu0 0.0
    %772 = vmatpush.msra.mxu0 0.0
    %773 = vmatpush.msra.mxu0 0.0
    %774 = vmatpush.msra.mxu0 0.0
    %775 = vmatpush.msra.mxu0 0.0
    %776 = vmatpush.msra.mxu0 0.0
    %777 = vmatpush.msra.mxu0 0.0
    %778 = vmatpush.msra.mxu0 0.0
    %779 = vmatpush.msra.mxu0 0.0
    %780 = vmatpush.msra.mxu0 %v362
    %781 = vmatmul.f32.gmra.mxu0 %v599
    %v782 = vpop.f32.mrf.mxu0
    %v783 = vadd.f32 %v593, %v782
    %784 = vmatmul.f32.gmra.mxu0 %v602
    %v785 = vpop.f32.mrf.mxu0
    %v786 = vadd.f32 %v596, %v785
    %787 = vdwg.mxu0
    %s788 = scalar_lea.vmem %s5, 32
    %v789 = vld [vmem:[%s788] sm:$0xff]
    %v790 = vld [vmem:[%s788 + $0x8] sm:$0xff]
    %791 = vrot.lane.b32.xlu0 %v355, 126
    %v792 = vpop.permute.xlu0 %791
    %793 = vrot.lane.b32.xlu0 %v356, 126
    %v794 = vpop.permute.xlu0 %793
    %795 = vrot.lane.b32.xlu0 %v357, 126
    %v796 = vpop.permute.xlu0 %795
    %797 = vrot.lane.b32.xlu0 %v358, 126
    %v798 = vpop.permute.xlu0 %797
    %799 = vrot.lane.b32.xlu0 %v359, 126
    %v800 = vpop.permute.xlu0 %799
    %801 = vrot.lane.b32.xlu0 %v360, 126
    %v802 = vpop.permute.xlu0 %801
    %803 = vrot.lane.b32.xlu0 %v361, 126
    %v804 = vpop.permute.xlu0 %803
    %805 = vrot.lane.b32.xlu0 %v362, 126
    %v806 = vpop.permute.xlu0 %805
    %v807 = vsel %vm179, %v792, %v794
    %v808 = vsel %vm179, %v794, %v796
    %v809 = vsel %vm179, %v796, %v798
    %v810 = vsel %vm179, %v798, %v800
    %v811 = vsel %vm179, %v800, %v802
    %v812 = vsel %vm179, %v802, %v804
    %v813 = vsel %vm179, %v804, %v806
    %v823 = vsel %vm407, %v789, 0
    %v826 = vsel %vm407, %v790, 0
    %828 = vmatpush.msra.mxu0 0.0
    %829 = vmatpush.msra.mxu0 0.0
    %830 = vmatpush.msra.mxu0 0.0
    %831 = vmatpush.msra.mxu0 0.0
    %832 = vmatpush.msra.mxu0 0.0
    %833 = vmatpush.msra.mxu0 0.0
    %834 = vmatpush.msra.mxu0 0.0
    %835 = vmatpush.msra.mxu0 0.0
    %836 = vmatpush.msra.mxu0 0.0
    %837 = vmatpush.msra.mxu0 0.0
    %838 = vmatpush.msra.mxu0 0.0
    %839 = vmatpush.msra.mxu0 0.0
    %840 = vmatpush.msra.mxu0 0.0
    %841 = vmatpush.msra.mxu0 0.0
    %842 = vmatpush.msra.mxu0 0.0
    %843 = vmatpush.msra.mxu0 %v807
    %844 = vmatmul.f32.gmra.mxu0 %v823
    %v845 = vpop.f32.mrf.mxu0
    %v846 = vadd.f32 0.0, %v845
    %847 = vmatmul.f32.gmra.mxu0 %v826
    %v848 = vpop.f32.mrf.mxu0
    %v849 = vadd.f32 0.0, %v848
    %850 = vdwg.mxu0
    %851 = vmatpush.msra.mxu0 0.0
    %852 = vmatpush.msra.mxu0 0.0
    %853 = vmatpush.msra.mxu0 0.0
    %854 = vmatpush.msra.mxu0 0.0
    %855 = vmatpush.msra.mxu0 0.0
    %856 = vmatpush.msra.mxu0 0.0
    %857 = vmatpush.msra.mxu0 0.0
    %858 = vmatpush.msra.mxu0 0.0
    %859 = vmatpush.msra.mxu0 0.0
    %860 = vmatpush.msra.mxu0 0.0
    %861 = vmatpush.msra.mxu0 0.0
    %862 = vmatpush.msra.mxu0 0.0
    %863 = vmatpush.msra.mxu0 0.0
    %864 = vmatpush.msra.mxu0 0.0
    %865 = vmatpush.msra.mxu0 0.0
    %866 = vmatpush.msra.mxu0 %v808
    %867 = vmatmul.f32.gmra.mxu0 %v823
    %v868 = vpop.f32.mrf.mxu0
    %v869 = vadd.f32 0.0, %v868
    %870 = vmatmul.f32.gmra.mxu0 %v826
    %v871 = vpop.f32.mrf.mxu0
    %v872 = vadd.f32 0.0, %v871
    %873 = vdwg.mxu0
    %874 = vmatpush.msra.mxu0 0.0
    %875 = vmatpush.msra.mxu0 0.0
    %876 = vmatpush.msra.mxu0 0.0
    %877 = vmatpush.msra.mxu0 0.0
    %878 = vmatpush.msra.mxu0 0.0
    %879 = vmatpush.msra.mxu0 0.0
    %880 = vmatpush.msra.mxu0 0.0
    %881 = vmatpush.msra.mxu0 0.0
    %882 = vmatpush.msra.mxu0 0.0
    %883 = vmatpush.msra.mxu0 0.0
    %884 = vmatpush.msra.mxu0 0.0
    %885 = vmatpush.msra.mxu0 0.0
    %886 = vmatpush.msra.mxu0 0.0
    %887 = vmatpush.msra.mxu0 0.0
    %888 = vmatpush.msra.mxu0 0.0
    %889 = vmatpush.msra.mxu0 %v809
    %890 = vmatmul.f32.gmra.mxu0 %v823
    %v891 = vpop.f32.mrf.mxu0
    %v892 = vadd.f32 0.0, %v891
    %893 = vmatmul.f32.gmra.mxu0 %v826
    %v894 = vpop.f32.mrf.mxu0
    %v895 = vadd.f32 0.0, %v894
    %896 = vdwg.mxu0
    %897 = vmatpush.msra.mxu0 0.0
    %898 = vmatpush.msra.mxu0 0.0
    %899 = vmatpush.msra.mxu0 0.0
    %900 = vmatpush.msra.mxu0 0.0
    %901 = vmatpush.msra.mxu0 0.0
    %902 = vmatpush.msra.mxu0 0.0
    %903 = vmatpush.msra.mxu0 0.0
    %904 = vmatpush.msra.mxu0 0.0
    %905 = vmatpush.msra.mxu0 0.0
    %906 = vmatpush.msra.mxu0 0.0
    %907 = vmatpush.msra.mxu0 0.0
    %908 = vmatpush.msra.mxu0 0.0
    %909 = vmatpush.msra.mxu0 0.0
    %910 = vmatpush.msra.mxu0 0.0
    %911 = vmatpush.msra.mxu0 0.0
    %912 = vmatpush.msra.mxu0 %v810
    %913 = vmatmul.f32.gmra.mxu0 %v823
    %v914 = vpop.f32.mrf.mxu0
    %v915 = vadd.f32 0.0, %v914
    %916 = vmatmul.f32.gmra.mxu0 %v826
    %v917 = vpop.f32.mrf.mxu0
    %v918 = vadd.f32 0.0, %v917
    %919 = vdwg.mxu0
    %920 = vmatpush.msra.mxu0 0.0
    %921 = vmatpush.msra.mxu0 0.0
    %922 = vmatpush.msra.mxu0 0.0
    %923 = vmatpush.msra.mxu0 0.0
    %924 = vmatpush.msra.mxu0 0.0
    %925 = vmatpush.msra.mxu0 0.0
    %926 = vmatpush.msra.mxu0 0.0
    %927 = vmatpush.msra.mxu0 0.0
    %928 = vmatpush.msra.mxu0 0.0
    %929 = vmatpush.msra.mxu0 0.0
    %930 = vmatpush.msra.mxu0 0.0
    %931 = vmatpush.msra.mxu0 0.0
    %932 = vmatpush.msra.mxu0 0.0
    %933 = vmatpush.msra.mxu0 0.0
    %934 = vmatpush.msra.mxu0 0.0
    %935 = vmatpush.msra.mxu0 %v811
    %936 = vmatmul.f32.gmra.mxu0 %v823
    %v937 = vpop.f32.mrf.mxu0
    %v938 = vadd.f32 0.0, %v937
    %939 = vmatmul.f32.gmra.mxu0 %v826
    %v940 = vpop.f32.mrf.mxu0
    %v941 = vadd.f32 0.0, %v940
    %942 = vdwg.mxu0
    %943 = vmatpush.msra.mxu0 0.0
    %944 = vmatpush.msra.mxu0 0.0
    %945 = vmatpush.msra.mxu0 0.0
    %946 = vmatpush.msra.mxu0 0.0
    %947 = vmatpush.msra.mxu0 0.0
    %948 = vmatpush.msra.mxu0 0.0
    %949 = vmatpush.msra.mxu0 0.0
    %950 = vmatpush.msra.mxu0 0.0
    %951 = vmatpush.msra.mxu0 0.0
    %952 = vmatpush.msra.mxu0 0.0
    %953 = vmatpush.msra.mxu0 0.0
    %954 = vmatpush.msra.mxu0 0.0
    %955 = vmatpush.msra.mxu0 0.0
    %956 = vmatpush.msra.mxu0 0.0
    %957 = vmatpush.msra.mxu0 0.0
    %958 = vmatpush.msra.mxu0 %v812
    %959 = vmatmul.f32.gmra.mxu0 %v823
    %v960 = vpop.f32.mrf.mxu0
    %v961 = vadd.f32 0.0, %v960
    %962 = vmatmul.f32.gmra.mxu0 %v826
    %v963 = vpop.f32.mrf.mxu0
    %v964 = vadd.f32 0.0, %v963
    %965 = vdwg.mxu0
    %966 = vmatpush.msra.mxu0 0.0
    %967 = vmatpush.msra.mxu0 0.0
    %968 = vmatpush.msra.mxu0 0.0
    %969 = vmatpush.msra.mxu0 0.0
    %970 = vmatpush.msra.mxu0 0.0
    %971 = vmatpush.msra.mxu0 0.0
    %972 = vmatpush.msra.mxu0 0.0
    %973 = vmatpush.msra.mxu0 0.0
    %974 = vmatpush.msra.mxu0 0.0
    %975 = vmatpush.msra.mxu0 0.0
    %976 = vmatpush.msra.mxu0 0.0
    %977 = vmatpush.msra.mxu0 0.0
    %978 = vmatpush.msra.mxu0 0.0
    %979 = vmatpush.msra.mxu0 0.0
    %980 = vmatpush.msra.mxu0 0.0
    %981 = vmatpush.msra.mxu0 %v813
    %982 = vmatmul.f32.gmra.mxu0 %v823
    %v983 = vpop.f32.mrf.mxu0
    %v984 = vadd.f32 0.0, %v983
    %985 = vmatmul.f32.gmra.mxu0 %v826
    %v986 = vpop.f32.mrf.mxu0
    %v987 = vadd.f32 0.0, %v986
    %988 = vdwg.mxu0
    %989 = vmatpush.msra.mxu0 0.0
    %990 = vmatpush.msra.mxu0 0.0
    %991 = vmatpush.msra.mxu0 0.0
    %992 = vmatpush.msra.mxu0 0.0
    %993 = vmatpush.msra.mxu0 0.0
    %994 = vmatpush.msra.mxu0 0.0
    %995 = vmatpush.msra.mxu0 0.0
    %996 = vmatpush.msra.mxu0 0.0
    %997 = vmatpush.msra.mxu0 0.0
    %998 = vmatpush.msra.mxu0 0.0
    %999 = vmatpush.msra.mxu0 0.0
    %1000 = vmatpush.msra.mxu0 0.0
    %1001 = vmatpush.msra.mxu0 0.0
    %1002 = vmatpush.msra.mxu0 0.0
    %1003 = vmatpush.msra.mxu0 0.0
    %1004 = vmatpush.msra.mxu0 %v806
    %1005 = vmatmul.f32.gmra.mxu0 %v823
    %v1006 = vpop.f32.mrf.mxu0
    %v1007 = vadd.f32 0.0, %v1006
    %1008 = vmatmul.f32.gmra.mxu0 %v826
    %v1009 = vpop.f32.mrf.mxu0
    %v1010 = vadd.f32 0.0, %v1009
    %1011 = vdwg.mxu0
    %v1012 = vadd.f32 %v622, %v846
    %v1013 = vadd.f32 %v645, %v869
    %v1014 = vadd.f32 %v668, %v892
    %v1015 = vadd.f32 %v691, %v915
    %v1016 = vadd.f32 %v714, %v938
    %v1017 = vadd.f32 %v737, %v961
    %v1018 = vadd.f32 %v760, %v984
    %v1019 = vadd.f32 %v783, %v1007
    %v1020 = vadd.f32 %v625, %v849
    %v1021 = vadd.f32 %v648, %v872
    %v1022 = vadd.f32 %v671, %v895
    %v1023 = vadd.f32 %v694, %v918
    %v1024 = vadd.f32 %v717, %v941
    %v1025 = vadd.f32 %v740, %v964
    %v1026 = vadd.f32 %v763, %v987
    %v1027 = vadd.f32 %v786, %v1010
    %v1028 = vld [vmem:[%s6] sm:$0xff]
    %v1029 = vld [vmem:[%s6 + $0x8] sm:$0xff]
    %1031 = vset.pattern.permute.xlu0 0
    %1032 = vperm.xlu0 %1031, %v1028
    %v1033 = vpop.permute.xlu0 %1032
    %1036 = vset.pattern.permute.xlu0 0
    %1037 = vperm.xlu0 %1036, %v1029
    %v1038 = vpop.permute.xlu0 %1037
    %v1040 = vadd.f32 %v1012, %v1033
    %v1041 = vadd.f32 %v1013, %v1033
    %v1042 = vadd.f32 %v1014, %v1033
    %v1043 = vadd.f32 %v1015, %v1033
    %v1044 = vadd.f32 %v1016, %v1033
    %v1045 = vadd.f32 %v1017, %v1033
    %v1046 = vadd.f32 %v1018, %v1033
    %v1047 = vadd.f32 %v1019, %v1033
    %v1048 = vadd.f32 %v1020, %v1038
    %v1049 = vadd.f32 %v1021, %v1038
    %v1050 = vadd.f32 %v1022, %v1038
    %v1051 = vadd.f32 %v1023, %v1038
    %v1052 = vadd.f32 %v1024, %v1038
    %v1053 = vadd.f32 %v1025, %v1038
    %v1054 = vadd.f32 %v1026, %v1038
    %v1055 = vadd.f32 %v1027, %v1038
    %v1056 = vld [vmem:[%s7] sm:$0xff]
    %v1057 = vld [vmem:[%s7 + $0x8] sm:$0xff]
    %1059 = vset.pattern.permute.xlu0 0
    %1060 = vperm.xlu0 %1059, %v1056
    %v1061 = vpop.permute.xlu0 %1060
    %1064 = vset.pattern.permute.xlu0 0
    %1065 = vperm.xlu0 %1064, %v1057
    %v1066 = vpop.permute.xlu0 %1065
    %v1068 = vmul.f32 %v1040, %v1061
    %v1069 = vmul.f32 %v1041, %v1061
    %v1070 = vmul.f32 %v1042, %v1061
    %v1071 = vmul.f32 %v1043, %v1061
    %v1072 = vmul.f32 %v1044, %v1061
    %v1073 = vmul.f32 %v1045, %v1061
    %v1074 = vmul.f32 %v1046, %v1061
    %v1075 = vmul.f32 %v1047, %v1061
    %v1076 = vmul.f32 %v1048, %v1066
    %v1077 = vmul.f32 %v1049, %v1066
    %v1078 = vmul.f32 %v1050, %v1066
    %v1079 = vmul.f32 %v1051, %v1066
    %v1080 = vmul.f32 %v1052, %v1066
    %v1081 = vmul.f32 %v1053, %v1066
    %v1082 = vmul.f32 %v1054, %v1066
    %v1083 = vmul.f32 %v1055, %v1066
    %v1084 = vld [vmem:[%s8] sm:$0xff]
    %v1085 = vld [vmem:[%s8 + $0x8] sm:$0xff]
    %1087 = vset.pattern.permute.xlu0 0
    %1088 = vperm.xlu0 %1087, %v1084
    %v1089 = vpop.permute.xlu0 %1088
    %1092 = vset.pattern.permute.xlu0 0
    %1093 = vperm.xlu0 %1092, %v1085
    %v1094 = vpop.permute.xlu0 %1093
    %v1096 = vadd.f32 %v1068, %v1089
    %v1097 = vadd.f32 %v1069, %v1089
    %v1098 = vadd.f32 %v1070, %v1089
    %v1099 = vadd.f32 %v1071, %v1089
    %v1100 = vadd.f32 %v1072, %v1089
    %v1101 = vadd.f32 %v1073, %v1089
    %v1102 = vadd.f32 %v1074, %v1089
    %v1103 = vadd.f32 %v1075, %v1089
    %v1104 = vadd.f32 %v1076, %v1094
    %v1105 = vadd.f32 %v1077, %v1094
    %v1106 = vadd.f32 %v1078, %v1094
    %v1107 = vadd.f32 %v1079, %v1094
    %v1108 = vadd.f32 %v1080, %v1094
    %v1109 = vadd.f32 %v1081, %v1094
    %v1110 = vadd.f32 %v1082, %v1094
    %v1111 = vadd.f32 %v1083, %v1094
    %vm1112 = vcmp.ge.f32.partialorder %v1096, 0.0
    %vm1113 = vcmp.ge.f32.partialorder %v1097, 0.0
    %vm1114 = vcmp.ge.f32.partialorder %v1098, 0.0
    %vm1115 = vcmp.ge.f32.partialorder %v1099, 0.0
    %vm1116 = vcmp.ge.f32.partialorder %v1100, 0.0
    %vm1117 = vcmp.ge.f32.partialorder %v1101, 0.0
    %vm1118 = vcmp.ge.f32.partialorder %v1102, 0.0
    %vm1119 = vcmp.ge.f32.partialorder %v1103, 0.0
    %vm1120 = vcmp.ge.f32.partialorder %v1104, 0.0
    %vm1121 = vcmp.ge.f32.partialorder %v1105, 0.0
    %vm1122 = vcmp.ge.f32.partialorder %v1106, 0.0
    %vm1123 = vcmp.ge.f32.partialorder %v1107, 0.0
    %vm1124 = vcmp.ge.f32.partialorder %v1108, 0.0
    %vm1125 = vcmp.ge.f32.partialorder %v1109, 0.0
    %vm1126 = vcmp.ge.f32.partialorder %v1110, 0.0
    %vm1127 = vcmp.ge.f32.partialorder %v1111, 0.0
    %v1128 = vmul.f32 %v1096, 0.3
    %v1129 = vmul.f32 %v1097, 0.3
    %v1130 = vmul.f32 %v1098, 0.3
    %v1131 = vmul.f32 %v1099, 0.3
    %v1132 = vmul.f32 %v1100, 0.3
    %v1133 = vmul.f32 %v1101, 0.3
    %v1134 = vmul.f32 %v1102, 0.3
    %v1135 = vmul.f32 %v1103, 0.3
    %v1136 = vmul.f32 %v1104, 0.3
    %v1137 = vmul.f32 %v1105, 0.3
    %v1138 = vmul.f32 %v1106, 0.3
    %v1139 = vmul.f32 %v1107, 0.3
    %v1140 = vmul.f32 %v1108, 0.3
    %v1141 = vmul.f32 %v1109, 0.3
    %v1142 = vmul.f32 %v1110, 0.3
    %v1143 = vmul.f32 %v1111, 0.3
    %v1144 = vsel %vm1112, %v1096, %v1128
    %v1145 = vsel %vm1113, %v1097, %v1129
    %v1146 = vsel %vm1114, %v1098, %v1130
    %v1147 = vsel %vm1115, %v1099, %v1131
    %v1148 = vsel %vm1116, %v1100, %v1132
    %v1149 = vsel %vm1117, %v1101, %v1133
    %v1150 = vsel %vm1118, %v1102, %v1134
    %v1151 = vsel %vm1119, %v1103, %v1135
    %v1152 = vsel %vm1120, %v1104, %v1136
    %v1153 = vsel %vm1121, %v1105, %v1137
    %v1154 = vsel %vm1122, %v1106, %v1138
    %v1155 = vsel %vm1123, %v1107, %v1139
    %v1156 = vsel %vm1124, %v1108, %v1140
    %v1157 = vsel %vm1125, %v1109, %v1141
    %v1158 = vsel %vm1126, %v1110, %v1142
    %v1159 = vsel %vm1127, %v1111, %v1143
    %1176 = vrot.lane.b32.xlu0 %v1144, 127
    %v1177 = vpop.permute.xlu0 %1176
    %1178 = vrot.lane.b32.xlu0 %v1145, 127
    %v1179 = vpop.permute.xlu0 %1178
    %1180 = vrot.lane.b32.xlu0 %v1146, 127
    %v1181 = vpop.permute.xlu0 %1180
    %1182 = vrot.lane.b32.xlu0 %v1147, 127
    %v1183 = vpop.permute.xlu0 %1182
    %1184 = vrot.lane.b32.xlu0 %v1148, 127
    %v1185 = vpop.permute.xlu0 %1184
    %1186 = vrot.lane.b32.xlu0 %v1149, 127
    %v1187 = vpop.permute.xlu0 %1186
    %1188 = vrot.lane.b32.xlu0 %v1150, 127
    %v1189 = vpop.permute.xlu0 %1188
    %1190 = vrot.lane.b32.xlu0 %v1151, 127
    %v1191 = vpop.permute.xlu0 %1190
    %1192 = vrot.lane.b32.xlu0 %v1152, 127
    %v1193 = vpop.permute.xlu0 %1192
    %1194 = vrot.lane.b32.xlu0 %v1153, 127
    %v1195 = vpop.permute.xlu0 %1194
    %1196 = vrot.lane.b32.xlu0 %v1154, 127
    %v1197 = vpop.permute.xlu0 %1196
    %1198 = vrot.lane.b32.xlu0 %v1155, 127
    %v1199 = vpop.permute.xlu0 %1198
    %1200 = vrot.lane.b32.xlu0 %v1156, 127
    %v1201 = vpop.permute.xlu0 %1200
    %1202 = vrot.lane.b32.xlu0 %v1157, 127
    %v1203 = vpop.permute.xlu0 %1202
    %1204 = vrot.lane.b32.xlu0 %v1158, 127
    %v1205 = vpop.permute.xlu0 %1204
    %1206 = vrot.lane.b32.xlu0 %v1159, 127
    %v1207 = vpop.permute.xlu0 %1206
    %v1208 = vsel %vm116, %v1177, %v1179
    %v1209 = vsel %vm116, %v1179, %v1181
    %v1210 = vsel %vm116, %v1181, %v1183
    %v1211 = vsel %vm116, %v1183, %v1185
    %v1212 = vsel %vm116, %v1185, %v1187
    %v1213 = vsel %vm116, %v1187, %v1189
    %v1214 = vsel %vm116, %v1189, %v1191
    %v1215 = vsel %vm116, %v1193, %v1195
    %v1216 = vsel %vm116, %v1195, %v1197
    %v1217 = vsel %vm116, %v1197, %v1199
    %v1218 = vsel %vm116, %v1199, %v1201
    %v1219 = vsel %vm116, %v1201, %v1203
    %v1220 = vsel %vm116, %v1203, %v1205
    %v1221 = vsel %vm116, %v1205, %v1207
    %v1238 = vmax.f32 %v1144, %v1208
    %v1239 = vmax.f32 %v1145, %v1209
    %v1240 = vmax.f32 %v1146, %v1210
    %v1241 = vmax.f32 %v1147, %v1211
    %v1242 = vmax.f32 %v1148, %v1212
    %v1243 = vmax.f32 %v1149, %v1213
    %v1244 = vmax.f32 %v1150, %v1214
    %v1245 = vmax.f32 %v1151, %v1191
    %v1246 = vmax.f32 %v1152, %v1215
    %v1247 = vmax.f32 %v1153, %v1216
    %v1248 = vmax.f32 %v1154, %v1217
    %v1249 = vmax.f32 %v1155, %v1218
    %v1250 = vmax.f32 %v1156, %v1219
    %v1251 = vmax.f32 %v1157, %v1220
    %v1252 = vmax.f32 %v1158, %v1221
    %v1253 = vmax.f32 %v1159, %v1207
    %1270 = vrot.lane.b32.xlu0 %v1238, 126
    %v1271 = vpop.permute.xlu0 %1270
    %1272 = vrot.lane.b32.xlu0 %v1239, 126
    %v1273 = vpop.permute.xlu0 %1272
    %1274 = vrot.lane.b32.xlu0 %v1240, 126
    %v1275 = vpop.permute.xlu0 %1274
    %1276 = vrot.lane.b32.xlu0 %v1241, 126
    %v1277 = vpop.permute.xlu0 %1276
    %1278 = vrot.lane.b32.xlu0 %v1242, 126
    %v1279 = vpop.permute.xlu0 %1278
    %1280 = vrot.lane.b32.xlu0 %v1243, 126
    %v1281 = vpop.permute.xlu0 %1280
    %1282 = vrot.lane.b32.xlu0 %v1244, 126
    %v1283 = vpop.permute.xlu0 %1282
    %1284 = vrot.lane.b32.xlu0 %v1245, 126
    %v1285 = vpop.permute.xlu0 %1284
    %1286 = vrot.lane.b32.xlu0 %v1246, 126
    %v1287 = vpop.permute.xlu0 %1286
    %1288 = vrot.lane.b32.xlu0 %v1247, 126
    %v1289 = vpop.permute.xlu0 %1288
    %1290 = vrot.lane.b32.xlu0 %v1248, 126
    %v1291 = vpop.permute.xlu0 %1290
    %1292 = vrot.lane.b32.xlu0 %v1249, 126
    %v1293 = vpop.permute.xlu0 %1292
    %1294 = vrot.lane.b32.xlu0 %v1250, 126
    %v1295 = vpop.permute.xlu0 %1294
    %1296 = vrot.lane.b32.xlu0 %v1251, 126
    %v1297 = vpop.permute.xlu0 %1296
    %1298 = vrot.lane.b32.xlu0 %v1252, 126
    %v1299 = vpop.permute.xlu0 %1298
    %1300 = vrot.lane.b32.xlu0 %v1253, 126
    %v1301 = vpop.permute.xlu0 %1300
    %v1302 = vsel %vm179, %v1271, %v1273
    %v1303 = vsel %vm179, %v1273, %v1275
    %v1304 = vsel %vm179, %v1275, %v1277
    %v1305 = vsel %vm179, %v1277, %v1279
    %v1306 = vsel %vm179, %v1279, %v1281
    %v1307 = vsel %vm179, %v1281, %v1283
    %v1308 = vsel %vm179, %v1283, %v1285
    %v1309 = vsel %vm179, %v1287, %v1289
    %v1310 = vsel %vm179, %v1289, %v1291
    %v1311 = vsel %vm179, %v1291, %v1293
    %v1312 = vsel %vm179, %v1293, %v1295
    %v1313 = vsel %vm179, %v1295, %v1297
    %v1314 = vsel %vm179, %v1297, %v1299
    %v1315 = vsel %vm179, %v1299, %v1301
    %v1332 = vmax.f32 %v1238, %v1302
    %v1333 = vmax.f32 %v1239, %v1303
    %v1334 = vmax.f32 %v1240, %v1304
    %v1335 = vmax.f32 %v1241, %v1305
    %v1336 = vmax.f32 %v1242, %v1306
    %v1337 = vmax.f32 %v1243, %v1307
    %v1338 = vmax.f32 %v1244, %v1308
    %v1339 = vmax.f32 %v1245, %v1285
    %v1340 = vmax.f32 %v1246, %v1309
    %v1341 = vmax.f32 %v1247, %v1310
    %v1342 = vmax.f32 %v1248, %v1311
    %v1343 = vmax.f32 %v1249, %v1312
    %v1344 = vmax.f32 %v1250, %v1313
    %v1345 = vmax.f32 %v1251, %v1314
    %v1346 = vmax.f32 %v1252, %v1315
    %v1347 = vmax.f32 %v1253, %v1301
    %v1348 = vld [vmem:[%s9] sm:$0xff]
    %v1349 = vld [vmem:[%s9 + $0x8] sm:$0xff]
    %v1350 = vld [vmem:[%s9 + $0x10] sm:$0xff]
    %v1351 = vld [vmem:[%s9 + $0x18] sm:$0xff]
    %s1352 = scalar_lea.vmem %s9, 32
    %v1353 = vld [vmem:[%s1352] sm:$0xff]
    %v1354 = vld [vmem:[%s1352 + $0x8] sm:$0xff]
    %v1355 = vld [vmem:[%s1352 + $0x10] sm:$0xff]
    %v1356 = vld [vmem:[%s1352 + $0x18] sm:$0xff]
    %1373 = vrot.lane.b32.xlu0 %v1332, 127
    %v1374 = vpop.permute.xlu0 %1373
    %1375 = vrot.lane.b32.xlu0 %v1333, 127
    %v1376 = vpop.permute.xlu0 %1375
    %1377 = vrot.lane.b32.xlu0 %v1334, 127
    %v1378 = vpop.permute.xlu0 %1377
    %1379 = vrot.lane.b32.xlu0 %v1335, 127
    %v1380 = vpop.permute.xlu0 %1379
    %1381 = vrot.lane.b32.xlu0 %v1336, 127
    %v1382 = vpop.permute.xlu0 %1381
    %1383 = vrot.lane.b32.xlu0 %v1337, 127
    %v1384 = vpop.permute.xlu0 %1383
    %1385 = vrot.lane.b32.xlu0 %v1338, 127
    %v1386 = vpop.permute.xlu0 %1385
    %1387 = vrot.lane.b32.xlu0 %v1339, 127
    %v1388 = vpop.permute.xlu0 %1387
    %1389 = vrot.lane.b32.xlu0 %v1340, 127
    %v1390 = vpop.permute.xlu0 %1389
    %1391 = vrot.lane.b32.xlu0 %v1341, 127
    %v1392 = vpop.permute.xlu0 %1391
    %1393 = vrot.lane.b32.xlu0 %v1342, 127
    %v1394 = vpop.permute.xlu0 %1393
    %1395 = vrot.lane.b32.xlu0 %v1343, 127
    %v1396 = vpop.permute.xlu0 %1395
    %1397 = vrot.lane.b32.xlu0 %v1344, 127
    %v1398 = vpop.permute.xlu0 %1397
    %1399 = vrot.lane.b32.xlu0 %v1345, 127
    %v1400 = vpop.permute.xlu0 %1399
    %1401 = vrot.lane.b32.xlu0 %v1346, 127
    %v1402 = vpop.permute.xlu0 %1401
    %1403 = vrot.lane.b32.xlu0 %v1347, 127
    %v1404 = vpop.permute.xlu0 %1403
    %v1405 = vsel %vm116, %v1374, %v1376
    %v1406 = vsel %vm116, %v1376, %v1378
    %v1407 = vsel %vm116, %v1378, %v1380
    %v1408 = vsel %vm116, %v1380, %v1382
    %v1409 = vsel %vm116, %v1382, %v1384
    %v1410 = vsel %vm116, %v1384, %v1386
    %v1411 = vsel %vm116, %v1386, %v1388
    %v1412 = vsel %vm116, %v1390, %v1392
    %v1413 = vsel %vm116, %v1392, %v1394
    %v1414 = vsel %vm116, %v1394, %v1396
    %v1415 = vsel %vm116, %v1396, %v1398
    %v1416 = vsel %vm116, %v1398, %v1400
    %v1417 = vsel %vm116, %v1400, %v1402
    %v1418 = vsel %vm116, %v1402, %v1404
    %vm1435 = vcmask 130048
    %v1437 = vsel %vm1435, %v1353, 0
    %v1440 = vsel %vm1435, %v1354, 0
    %v1443 = vsel %vm1435, %v1355, 0
    %v1446 = vsel %vm1435, %v1356, 0
    %1448 = vmatpush.msra.mxu0 0.0
    %1449 = vmatpush.msra.mxu0 0.0
    %1450 = vmatpush.msra.mxu0 0.0
    %1451 = vmatpush.msra.mxu0 0.0
    %1452 = vmatpush.msra.mxu0 0.0
    %1453 = vmatpush.msra.mxu0 0.0
    %1454 = vmatpush.msra.mxu0 0.0
    %1455 = vmatpush.msra.mxu0 0.0
    %1456 = vmatpush.msra.mxu0 0.0
    %1457 = vmatpush.msra.mxu0 0.0
    %1458 = vmatpush.msra.mxu0 0.0
    %1459 = vmatpush.msra.mxu0 0.0
    %1460 = vmatpush.msra.mxu0 0.0
    %1461 = vmatpush.msra.mxu0 0.0
    %1462 = vmatpush.msra.mxu0 %v1412
    %1463 = vmatpush.msra.mxu0 %v1405
    %1464 = vmatmul.f32.gmra.mxu0 %v1437
    %v1465 = vpop.f32.mrf.mxu0
    %v1466 = vadd.f32 0.0, %v1465
    %1467 = vmatmul.f32.gmra.mxu0 %v1440
    %v1468 = vpop.f32.mrf.mxu0
    %v1469 = vadd.f32 0.0, %v1468
    %1470 = vmatmul.f32.gmra.mxu0 %v1443
    %v1471 = vpop.f32.mrf.mxu0
    %v1472 = vadd.f32 0.0, %v1471
    %1473 = vmatmul.f32.gmra.mxu0 %v1446
    %v1474 = vpop.f32.mrf.mxu0
    %v1475 = vadd.f32 0.0, %v1474
    %1476 = vdwg.mxu0
    %1477 = vmatpush.msra.mxu0 0.0
    %1478 = vmatpush.msra.mxu0 0.0
    %1479 = vmatpush.msra.mxu0 0.0
    %1480 = vmatpush.msra.mxu0 0.0
    %1481 = vmatpush.msra.mxu0 0.0
    %1482 = vmatpush.msra.mxu0 0.0
    %1483 = vmatpush.msra.mxu0 0.0
    %1484 = vmatpush.msra.mxu0 0.0
    %1485 = vmatpush.msra.mxu0 0.0
    %1486 = vmatpush.msra.mxu0 0.0
    %1487 = vmatpush.msra.mxu0 0.0
    %1488 = vmatpush.msra.mxu0 0.0
    %1489 = vmatpush.msra.mxu0 0.0
    %1490 = vmatpush.msra.mxu0 0.0
    %1491 = vmatpush.msra.mxu0 %v1413
    %1492 = vmatpush.msra.mxu0 %v1406
    %1493 = vmatmul.f32.gmra.mxu0 %v1437
    %v1494 = vpop.f32.mrf.mxu0
    %v1495 = vadd.f32 0.0, %v1494
    %1496 = vmatmul.f32.gmra.mxu0 %v1440
    %v1497 = vpop.f32.mrf.mxu0
    %v1498 = vadd.f32 0.0, %v1497
    %1499 = vmatmul.f32.gmra.mxu0 %v1443
    %v1500 = vpop.f32.mrf.mxu0
    %v1501 = vadd.f32 0.0, %v1500
    %1502 = vmatmul.f32.gmra.mxu0 %v1446
    %v1503 = vpop.f32.mrf.mxu0
    %v1504 = vadd.f32 0.0, %v1503
    %1505 = vdwg.mxu0
    %1506 = vmatpush.msra.mxu0 0.0
    %1507 = vmatpush.msra.mxu0 0.0
    %1508 = vmatpush.msra.mxu0 0.0
    %1509 = vmatpush.msra.mxu0 0.0
    %1510 = vmatpush.msra.mxu0 0.0
    %1511 = vmatpush.msra.mxu0 0.0
    %1512 = vmatpush.msra.mxu0 0.0
    %1513 = vmatpush.msra.mxu0 0.0
    %1514 = vmatpush.msra.mxu0 0.0
    %1515 = vmatpush.msra.mxu0 0.0
    %1516 = vmatpush.msra.mxu0 0.0
    %1517 = vmatpush.msra.mxu0 0.0
    %1518 = vmatpush.msra.mxu0 0.0
    %1519 = vmatpush.msra.mxu0 0.0
    %1520 = vmatpush.msra.mxu0 %v1414
    %1521 = vmatpush.msra.mxu0 %v1407
    %1522 = vmatmul.f32.gmra.mxu0 %v1437
    %v1523 = vpop.f32.mrf.mxu0
    %v1524 = vadd.f32 0.0, %v1523
    %1525 = vmatmul.f32.gmra.mxu0 %v1440
    %v1526 = vpop.f32.mrf.mxu0
    %v1527 = vadd.f32 0.0, %v1526
    %1528 = vmatmul.f32.gmra.mxu0 %v1443
    %v1529 = vpop.f32.mrf.mxu0
    %v1530 = vadd.f32 0.0, %v1529
    %1531 = vmatmul.f32.gmra.mxu0 %v1446
    %v1532 = vpop.f32.mrf.mxu0
    %v1533 = vadd.f32 0.0, %v1532
    %1534 = vdwg.mxu0
    %1535 = vmatpush.msra.mxu0 0.0
    %1536 = vmatpush.msra.mxu0 0.0
    %1537 = vmatpush.msra.mxu0 0.0
    %1538 = vmatpush.msra.mxu0 0.0
    %1539 = vmatpush.msra.mxu0 0.0
    %1540 = vmatpush.msra.mxu0 0.0
    %1541 = vmatpush.msra.mxu0 0.0
    %1542 = vmatpush.msra.mxu0 0.0
    %1543 = vmatpush.msra.mxu0 0.0
    %1544 = vmatpush.msra.mxu0 0.0
    %1545 = vmatpush.msra.mxu0 0.0
    %1546 = vmatpush.msra.mxu0 0.0
    %1547 = vmatpush.msra.mxu0 0.0
    %1548 = vmatpush.msra.mxu0 0.0
    %1549 = vmatpush.msra.mxu0 %v1415
    %1550 = vmatpush.msra.mxu0 %v1408
    %1551 = vmatmul.f32.gmra.mxu0 %v1437
    %v1552 = vpop.f32.mrf.mxu0
    %v1553 = vadd.f32 0.0, %v1552
    %1554 = vmatmul.f32.gmra.mxu0 %v1440
    %v1555 = vpop.f32.mrf.mxu0
    %v1556 = vadd.f32 0.0, %v1555
    %1557 = vmatmul.f32.gmra.mxu0 %v1443
    %v1558 = vpop.f32.mrf.mxu0
    %v1559 = vadd.f32 0.0, %v1558
    %1560 = vmatmul.f32.gmra.mxu0 %v1446
    %v1561 = vpop.f32.mrf.mxu0
    %v1562 = vadd.f32 0.0, %v1561
    %1563 = vdwg.mxu0
    %1564 = vmatpush.msra.mxu0 0.0
    %1565 = vmatpush.msra.mxu0 0.0
    %1566 = vmatpush.msra.mxu0 0.0
    %1567 = vmatpush.msra.mxu0 0.0
    %1568 = vmatpush.msra.mxu0 0.0
    %1569 = vmatpush.msra.mxu0 0.0
    %1570 = vmatpush.msra.mxu0 0.0
    %1571 = vmatpush.msra.mxu0 0.0
    %1572 = vmatpush.msra.mxu0 0.0
    %1573 = vmatpush.msra.mxu0 0.0
    %1574 = vmatpush.msra.mxu0 0.0
    %1575 = vmatpush.msra.mxu0 0.0
    %1576 = vmatpush.msra.mxu0 0.0
    %1577 = vmatpush.msra.mxu0 0.0
    %1578 = vmatpush.msra.mxu0 %v1416
    %1579 = vmatpush.msra.mxu0 %v1409
    %1580 = vmatmul.f32.gmra.mxu0 %v1437
    %v1581 = vpop.f32.mrf.mxu0
    %v1582 = vadd.f32 0.0, %v1581
    %1583 = vmatmul.f32.gmra.mxu0 %v1440
    %v1584 = vpop.f32.mrf.mxu0
    %v1585 = vadd.f32 0.0, %v1584
    %1586 = vmatmul.f32.gmra.mxu0 %v1443
    %v1587 = vpop.f32.mrf.mxu0
    %v1588 = vadd.f32 0.0, %v1587
    %1589 = vmatmul.f32.gmra.mxu0 %v1446
    %v1590 = vpop.f32.mrf.mxu0
    %v1591 = vadd.f32 0.0, %v1590
    %1592 = vdwg.mxu0
    %1593 = vmatpush.msra.mxu0 0.0
    %1594 = vmatpush.msra.mxu0 0.0
    %1595 = vmatpush.msra.mxu0 0.0
    %1596 = vmatpush.msra.mxu0 0.0
    %1597 = vmatpush.msra.mxu0 0.0
    %1598 = vmatpush.msra.mxu0 0.0
    %1599 = vmatpush.msra.mxu0 0.0
    %1600 = vmatpush.msra.mxu0 0.0
    %1601 = vmatpush.msra.mxu0 0.0
    %1602 = vmatpush.msra.mxu0 0.0
    %1603 = vmatpush.msra.mxu0 0.0
    %1604 = vmatpush.msra.mxu0 0.0
    %1605 = vmatpush.msra.mxu0 0.0
    %1606 = vmatpush.msra.mxu0 0.0
    %1607 = vmatpush.msra.mxu0 %v1417
    %1608 = vmatpush.msra.mxu0 %v1410
    %1609 = vmatmul.f32.gmra.mxu0 %v1437
    %v1610 = vpop.f32.mrf.mxu0
    %v1611 = vadd.f32 0.0, %v1610
    %1612 = vmatmul.f32.gmra.mxu0 %v1440
    %v1613 = vpop.f32.mrf.mxu0
    %v1614 = vadd.f32 0.0, %v1613
    %1615 = vmatmul.f32.gmra.mxu0 %v1443
    %v1616 = vpop.f32.mrf.mxu0
    %v1617 = vadd.f32 0.0, %v1616
    %1618 = vmatmul.f32.gmra.mxu0 %v1446
    %v1619 = vpop.f32.mrf.mxu0
    %v1620 = vadd.f32 0.0, %v1619
    %1621 = vdwg.mxu0
    %1622 = vmatpush.msra.mxu0 0.0
    %1623 = vmatpush.msra.mxu0 0.0
    %1624 = vmatpush.msra.mxu0 0.0
    %1625 = vmatpush.msra.mxu0 0.0
    %1626 = vmatpush.msra.mxu0 0.0
    %1627 = vmatpush.msra.mxu0 0.0
    %1628 = vmatpush.msra.mxu0 0.0
    %1629 = vmatpush.msra.mxu0 0.0
    %1630 = vmatpush.msra.mxu0 0.0
    %1631 = vmatpush.msra.mxu0 0.0
    %1632 = vmatpush.msra.mxu0 0.0
    %1633 = vmatpush.msra.mxu0 0.0
    %1634 = vmatpush.msra.mxu0 0.0
    %1635 = vmatpush.msra.mxu0 0.0
    %1636 = vmatpush.msra.mxu0 %v1418
    %1637 = vmatpush.msra.mxu0 %v1411
    %1638 = vmatmul.f32.gmra.mxu0 %v1437
    %v1639 = vpop.f32.mrf.mxu0
    %v1640 = vadd.f32 0.0, %v1639
    %1641 = vmatmul.f32.gmra.mxu0 %v1440
    %v1642 = vpop.f32.mrf.mxu0
    %v1643 = vadd.f32 0.0, %v1642
    %1644 = vmatmul.f32.gmra.mxu0 %v1443
    %v1645 = vpop.f32.mrf.mxu0
    %v1646 = vadd.f32 0.0, %v1645
    %1647 = vmatmul.f32.gmra.mxu0 %v1446
    %v1648 = vpop.f32.mrf.mxu0
    %v1649 = vadd.f32 0.0, %v1648
    %1650 = vdwg.mxu0
    %1651 = vmatpush.msra.mxu0 0.0
    %1652 = vmatpush.msra.mxu0 0.0
    %1653 = vmatpush.msra.mxu0 0.0
    %1654 = vmatpush.msra.mxu0 0.0
    %1655 = vmatpush.msra.mxu0 0.0
    %1656 = vmatpush.msra.mxu0 0.0
    %1657 = vmatpush.msra.mxu0 0.0
    %1658 = vmatpush.msra.mxu0 0.0
    %1659 = vmatpush.msra.mxu0 0.0
    %1660 = vmatpush.msra.mxu0 0.0
    %1661 = vmatpush.msra.mxu0 0.0
    %1662 = vmatpush.msra.mxu0 0.0
    %1663 = vmatpush.msra.mxu0 0.0
    %1664 = vmatpush.msra.mxu0 0.0
    %1665 = vmatpush.msra.mxu0 %v1404
    %1666 = vmatpush.msra.mxu0 %v1388
    %1667 = vmatmul.f32.gmra.mxu0 %v1437
    %v1668 = vpop.f32.mrf.mxu0
    %v1669 = vadd.f32 0.0, %v1668
    %1670 = vmatmul.f32.gmra.mxu0 %v1440
    %v1671 = vpop.f32.mrf.mxu0
    %v1672 = vadd.f32 0.0, %v1671
    %1673 = vmatmul.f32.gmra.mxu0 %v1443
    %v1674 = vpop.f32.mrf.mxu0
    %v1675 = vadd.f32 0.0, %v1674
    %1676 = vmatmul.f32.gmra.mxu0 %v1446
    %v1677 = vpop.f32.mrf.mxu0
    %v1678 = vadd.f32 0.0, %v1677
    %1679 = vdwg.mxu0
    %v1681 = vsel %vm1435, %v1348, 0
    %v1684 = vsel %vm1435, %v1349, 0
    %v1687 = vsel %vm1435, %v1350, 0
    %v1690 = vsel %vm1435, %v1351, 0
    %1692 = vmatpush.msra.mxu0 0.0
    %1693 = vmatpush.msra.mxu0 0.0
    %1694 = vmatpush.msra.mxu0 0.0
    %1695 = vmatpush.msra.mxu0 0.0
    %1696 = vmatpush.msra.mxu0 0.0
    %1697 = vmatpush.msra.mxu0 0.0
    %1698 = vmatpush.msra.mxu0 0.0
    %1699 = vmatpush.msra.mxu0 0.0
    %1700 = vmatpush.msra.mxu0 0.0
    %1701 = vmatpush.msra.mxu0 0.0
    %1702 = vmatpush.msra.mxu0 0.0
    %1703 = vmatpush.msra.mxu0 0.0
    %1704 = vmatpush.msra.mxu0 0.0
    %1705 = vmatpush.msra.mxu0 0.0
    %1706 = vmatpush.msra.mxu0 %v1340
    %1707 = vmatpush.msra.mxu0 %v1332
    %1708 = vmatmul.f32.gmra.mxu0 %v1681
    %v1709 = vpop.f32.mrf.mxu0
    %v1710 = vadd.f32 %v1466, %v1709
    %1711 = vmatmul.f32.gmra.mxu0 %v1684
    %v1712 = vpop.f32.mrf.mxu0
    %v1713 = vadd.f32 %v1469, %v1712
    %1714 = vmatmul.f32.gmra.mxu0 %v1687
    %v1715 = vpop.f32.mrf.mxu0
    %v1716 = vadd.f32 %v1472, %v1715
    %1717 = vmatmul.f32.gmra.mxu0 %v1690
    %v1718 = vpop.f32.mrf.mxu0
    %v1719 = vadd.f32 %v1475, %v1718
    %1720 = vdwg.mxu0
    %1721 = vmatpush.msra.mxu0 0.0
    %1722 = vmatpush.msra.mxu0 0.0
    %1723 = vmatpush.msra.mxu0 0.0
    %1724 = vmatpush.msra.mxu0 0.0
    %1725 = vmatpush.msra.mxu0 0.0
    %1726 = vmatpush.msra.mxu0 0.0
    %1727 = vmatpush.msra.mxu0 0.0
    %1728 = vmatpush.msra.mxu0 0.0
    %1729 = vmatpush.msra.mxu0 0.0
    %1730 = vmatpush.msra.mxu0 0.0
    %1731 = vmatpush.msra.mxu0 0.0
    %1732 = vmatpush.msra.mxu0 0.0
    %1733 = vmatpush.msra.mxu0 0.0
    %1734 = vmatpush.msra.mxu0 0.0
    %1735 = vmatpush.msra.mxu0 %v1341
    %1736 = vmatpush.msra.mxu0 %v1333
    %1737 = vmatmul.f32.gmra.mxu0 %v1681
    %v1738 = vpop.f32.mrf.mxu0
    %v1739 = vadd.f32 %v1495, %v1738
    %1740 = vmatmul.f32.gmra.mxu0 %v1684
    %v1741 = vpop.f32.mrf.mxu0
    %v1742 = vadd.f32 %v1498, %v1741
    %1743 = vmatmul.f32.gmra.mxu0 %v1687
    %v1744 = vpop.f32.mrf.mxu0
    %v1745 = vadd.f32 %v1501, %v1744
    %1746 = vmatmul.f32.gmra.mxu0 %v1690
    %v1747 = vpop.f32.mrf.mxu0
    %v1748 = vadd.f32 %v1504, %v1747
    %1749 = vdwg.mxu0
    %1750 = vmatpush.msra.mxu0 0.0
    %1751 = vmatpush.msra.mxu0 0.0
    %1752 = vmatpush.msra.mxu0 0.0
    %1753 = vmatpush.msra.mxu0 0.0
    %1754 = vmatpush.msra.mxu0 0.0
    %1755 = vmatpush.msra.mxu0 0.0
    %1756 = vmatpush.msra.mxu0 0.0
    %1757 = vmatpush.msra.mxu0 0.0
    %1758 = vmatpush.msra.mxu0 0.0
    %1759 = vmatpush.msra.mxu0 0.0
    %1760 = vmatpush.msra.mxu0 0.0
    %1761 = vmatpush.msra.mxu0 0.0
    %1762 = vmatpush.msra.mxu0 0.0
    %1763 = vmatpush.msra.mxu0 0.0
    %1764 = vmatpush.msra.mxu0 %v1342
    %1765 = vmatpush.msra.mxu0 %v1334
    %1766 = vmatmul.f32.gmra.mxu0 %v1681
    %v1767 = vpop.f32.mrf.mxu0
    %v1768 = vadd.f32 %v1524, %v1767
    %1769 = vmatmul.f32.gmra.mxu0 %v1684
    %v1770 = vpop.f32.mrf.mxu0
    %v1771 = vadd.f32 %v1527, %v1770
    %1772 = vmatmul.f32.gmra.mxu0 %v1687
    %v1773 = vpop.f32.mrf.mxu0
    %v1774 = vadd.f32 %v1530, %v1773
    %1775 = vmatmul.f32.gmra.mxu0 %v1690
    %v1776 = vpop.f32.mrf.mxu0
    %v1777 = vadd.f32 %v1533, %v1776
    %1778 = vdwg.mxu0
    %1779 = vmatpush.msra.mxu0 0.0
    %1780 = vmatpush.msra.mxu0 0.0
    %1781 = vmatpush.msra.mxu0 0.0
    %1782 = vmatpush.msra.mxu0 0.0
    %1783 = vmatpush.msra.mxu0 0.0
    %1784 = vmatpush.msra.mxu0 0.0
    %1785 = vmatpush.msra.mxu0 0.0
    %1786 = vmatpush.msra.mxu0 0.0
    %1787 = vmatpush.msra.mxu0 0.0
    %1788 = vmatpush.msra.mxu0 0.0
    %1789 = vmatpush.msra.mxu0 0.0
    %1790 = vmatpush.msra.mxu0 0.0
    %1791 = vmatpush.msra.mxu0 0.0
    %1792 = vmatpush.msra.mxu0 0.0
    %1793 = vmatpush.msra.mxu0 %v1343
    %1794 = vmatpush.msra.mxu0 %v1335
    %1795 = vmatmul.f32.gmra.mxu0 %v1681
    %v1796 = vpop.f32.mrf.mxu0
    %v1797 = vadd.f32 %v1553, %v1796
    %1798 = vmatmul.f32.gmra.mxu0 %v1684
    %v1799 = vpop.f32.mrf.mxu0
    %v1800 = vadd.f32 %v1556, %v1799
    %1801 = vmatmul.f32.gmra.mxu0 %v1687
    %v1802 = vpop.f32.mrf.mxu0
    %v1803 = vadd.f32 %v1559, %v1802
    %1804 = vmatmul.f32.gmra.mxu0 %v1690
    %v1805 = vpop.f32.mrf.mxu0
    %v1806 = vadd.f32 %v1562, %v1805
    %1807 = vdwg.mxu0
    %1808 = vmatpush.msra.mxu0 0.0
    %1809 = vmatpush.msra.mxu0 0.0
    %1810 = vmatpush.msra.mxu0 0.0
    %1811 = vmatpush.msra.mxu0 0.0
    %1812 = vmatpush.msra.mxu0 0.0
    %1813 = vmatpush.msra.mxu0 0.0
    %1814 = vmatpush.msra.mxu0 0.0
    %1815 = vmatpush.msra.mxu0 0.0
    %1816 = vmatpush.msra.mxu0 0.0
    %1817 = vmatpush.msra.mxu0 0.0
    %1818 = vmatpush.msra.mxu0 0.0
    %1819 = vmatpush.msra.mxu0 0.0
    %1820 = vmatpush.msra.mxu0 0.0
    %1821 = vmatpush.msra.mxu0 0.0
    %1822 = vmatpush.msra.mxu0 %v1344
    %1823 = vmatpush.msra.mxu0 %v1336
    %1824 = vmatmul.f32.gmra.mxu0 %v1681
    %v1825 = vpop.f32.mrf.mxu0
    %v1826 = vadd.f32 %v1582, %v1825
    %1827 = vmatmul.f32.gmra.mxu0 %v1684
    %v1828 = vpop.f32.mrf.mxu0
    %v1829 = vadd.f32 %v1585, %v1828
    %1830 = vmatmul.f32.gmra.mxu0 %v1687
    %v1831 = vpop.f32.mrf.mxu0
    %v1832 = vadd.f32 %v1588, %v1831
    %1833 = vmatmul.f32.gmra.mxu0 %v1690
    %v1834 = vpop.f32.mrf.mxu0
    %v1835 = vadd.f32 %v1591, %v1834
    %1836 = vdwg.mxu0
    %1837 = vmatpush.msra.mxu0 0.0
    %1838 = vmatpush.msra.mxu0 0.0
    %1839 = vmatpush.msra.mxu0 0.0
    %1840 = vmatpush.msra.mxu0 0.0
    %1841 = vmatpush.msra.mxu0 0.0
    %1842 = vmatpush.msra.mxu0 0.0
    %1843 = vmatpush.msra.mxu0 0.0
    %1844 = vmatpush.msra.mxu0 0.0
    %1845 = vmatpush.msra.mxu0 0.0
    %1846 = vmatpush.msra.mxu0 0.0
    %1847 = vmatpush.msra.mxu0 0.0
    %1848 = vmatpush.msra.mxu0 0.0
    %1849 = vmatpush.msra.mxu0 0.0
    %1850 = vmatpush.msra.mxu0 0.0
    %1851 = vmatpush.msra.mxu0 %v1345
    %1852 = vmatpush.msra.mxu0 %v1337
    %1853 = vmatmul.f32.gmra.mxu0 %v1681
    %v1854 = vpop.f32.mrf.mxu0
    %v1855 = vadd.f32 %v1611, %v1854
    %1856 = vmatmul.f32.gmra.mxu0 %v1684
    %v1857 = vpop.f32.mrf.mxu0
    %v1858 = vadd.f32 %v1614, %v1857
    %1859 = vmatmul.f32.gmra.mxu0 %v1687
    %v1860 = vpop.f32.mrf.mxu0
    %v1861 = vadd.f32 %v1617, %v1860
    %1862 = vmatmul.f32.gmra.mxu0 %v1690
    %v1863 = vpop.f32.mrf.mxu0
    %v1864 = vadd.f32 %v1620, %v1863
    %1865 = vdwg.mxu0
    %1866 = vmatpush.msra.mxu0 0.0
    %1867 = vmatpush.msra.mxu0 0.0
    %1868 = vmatpush.msra.mxu0 0.0
    %1869 = vmatpush.msra.mxu0 0.0
    %1870 = vmatpush.msra.mxu0 0.0
    %1871 = vmatpush.msra.mxu0 0.0
    %1872 = vmatpush.msra.mxu0 0.0
    %1873 = vmatpush.msra.mxu0 0.0
    %1874 = vmatpush.msra.mxu0 0.0
    %1875 = vmatpush.msra.mxu0 0.0
    %1876 = vmatpush.msra.mxu0 0.0
    %1877 = vmatpush.msra.mxu0 0.0
    %1878 = vmatpush.msra.mxu0 0.0
    %1879 = vmatpush.msra.mxu0 0.0
    %1880 = vmatpush.msra.mxu0 %v1346
    %1881 = vmatpush.msra.mxu0 %v1338
    %1882 = vmatmul.f32.gmra.mxu0 %v1681
    %v1883 = vpop.f32.mrf.mxu0
    %v1884 = vadd.f32 %v1640, %v1883
    %1885 = vmatmul.f32.gmra.mxu0 %v1684
    %v1886 = vpop.f32.mrf.mxu0
    %v1887 = vadd.f32 %v1643, %v1886
    %1888 = vmatmul.f32.gmra.mxu0 %v1687
    %v1889 = vpop.f32.mrf.mxu0
    %v1890 = vadd.f32 %v1646, %v1889
    %1891 = vmatmul.f32.gmra.mxu0 %v1690
    %v1892 = vpop.f32.mrf.mxu0
    %v1893 = vadd.f32 %v1649, %v1892
    %1894 = vdwg.mxu0
    %1895 = vmatpush.msra.mxu0 0.0
    %1896 = vmatpush.msra.mxu0 0.0
    %1897 = vmatpush.msra.mxu0 0.0
    %1898 = vmatpush.msra.mxu0 0.0
    %1899 = vmatpush.msra.mxu0 0.0
    %1900 = vmatpush.msra.mxu0 0.0
    %1901 = vmatpush.msra.mxu0 0.0
    %1902 = vmatpush.msra.mxu0 0.0
    %1903 = vmatpush.msra.mxu0 0.0
    %1904 = vmatpush.msra.mxu0 0.0
    %1905 = vmatpush.msra.mxu0 0.0
    %1906 = vmatpush.msra.mxu0 0.0
    %1907 = vmatpush.msra.mxu0 0.0
    %1908 = vmatpush.msra.mxu0 0.0
    %1909 = vmatpush.msra.mxu0 %v1347
    %1910 = vmatpush.msra.mxu0 %v1339
    %1911 = vmatmul.f32.gmra.mxu0 %v1681
    %v1912 = vpop.f32.mrf.mxu0
    %v1913 = vadd.f32 %v1669, %v1912
    %1914 = vmatmul.f32.gmra.mxu0 %v1684
    %v1915 = vpop.f32.mrf.mxu0
    %v1916 = vadd.f32 %v1672, %v1915
    %1917 = vmatmul.f32.gmra.mxu0 %v1687
    %v1918 = vpop.f32.mrf.mxu0
    %v1919 = vadd.f32 %v1675, %v1918
    %1920 = vmatmul.f32.gmra.mxu0 %v1690
    %v1921 = vpop.f32.mrf.mxu0
    %v1922 = vadd.f32 %v1678, %v1921
    %1923 = vdwg.mxu0
    %s1924 = scalar_lea.vmem %s9, 64
    %v1925 = vld [vmem:[%s1924] sm:$0xff]
    %v1926 = vld [vmem:[%s1924 + $0x8] sm:$0xff]
    %v1927 = vld [vmem:[%s1924 + $0x10] sm:$0xff]
    %v1928 = vld [vmem:[%s1924 + $0x18] sm:$0xff]
    %1929 = vrot.lane.b32.xlu0 %v1332, 126
    %v1930 = vpop.permute.xlu0 %1929
    %1931 = vrot.lane.b32.xlu0 %v1333, 126
    %v1932 = vpop.permute.xlu0 %1931
    %1933 = vrot.lane.b32.xlu0 %v1334, 126
    %v1934 = vpop.permute.xlu0 %1933
    %1935 = vrot.lane.b32.xlu0 %v1335, 126
    %v1936 = vpop.permute.xlu0 %1935
    %1937 = vrot.lane.b32.xlu0 %v1336, 126
    %v1938 = vpop.permute.xlu0 %1937
    %1939 = vrot.lane.b32.xlu0 %v1337, 126
    %v1940 = vpop.permute.xlu0 %1939
    %1941 = vrot.lane.b32.xlu0 %v1338, 126
    %v1942 = vpop.permute.xlu0 %1941
    %1943 = vrot.lane.b32.xlu0 %v1339, 126
    %v1944 = vpop.permute.xlu0 %1943
    %1945 = vrot.lane.b32.xlu0 %v1340, 126
    %v1946 = vpop.permute.xlu0 %1945
    %1947 = vrot.lane.b32.xlu0 %v1341, 126
    %v1948 = vpop.permute.xlu0 %1947
    %1949 = vrot.lane.b32.xlu0 %v1342, 126
    %v1950 = vpop.permute.xlu0 %1949
    %1951 = vrot.lane.b32.xlu0 %v1343, 126
    %v1952 = vpop.permute.xlu0 %1951
    %1953 = vrot.lane.b32.xlu0 %v1344, 126
    %v1954 = vpop.permute.xlu0 %1953
    %1955 = vrot.lane.b32.xlu0 %v1345, 126
    %v1956 = vpop.permute.xlu0 %1955
    %1957 = vrot.lane.b32.xlu0 %v1346, 126
    %v1958 = vpop.permute.xlu0 %1957
    %1959 = vrot.lane.b32.xlu0 %v1347, 126
    %v1960 = vpop.permute.xlu0 %1959
    %v1961 = vsel %vm179, %v1930, %v1932
    %v1962 = vsel %vm179, %v1932, %v1934
    %v1963 = vsel %vm179, %v1934, %v1936
    %v1964 = vsel %vm179, %v1936, %v1938
    %v1965 = vsel %vm179, %v1938, %v1940
    %v1966 = vsel %vm179, %v1940, %v1942
    %v1967 = vsel %vm179, %v1942, %v1944
    %v1968 = vsel %vm179, %v1946, %v1948
    %v1969 = vsel %vm179, %v1948, %v1950
    %v1970 = vsel %vm179, %v1950, %v1952
    %v1971 = vsel %vm179, %v1952, %v1954
    %v1972 = vsel %vm179, %v1954, %v1956
    %v1973 = vsel %vm179, %v1956, %v1958
    %v1974 = vsel %vm179, %v1958, %v1960
    %v1992 = vsel %vm1435, %v1925, 0
    %v1995 = vsel %vm1435, %v1926, 0
    %v1998 = vsel %vm1435, %v1927, 0
    %v2001 = vsel %vm1435, %v1928, 0
    %2003 = vmatpush.msra.mxu0 0.0
    %2004 = vmatpush.msra.mxu0 0.0
    %2005 = vmatpush.msra.mxu0 0.0
    %2006 = vmatpush.msra.mxu0 0.0
    %2007 = vmatpush.msra.mxu0 0.0
    %2008 = vmatpush.msra.mxu0 0.0
    %2009 = vmatpush.msra.mxu0 0.0
    %2010 = vmatpush.msra.mxu0 0.0
    %2011 = vmatpush.msra.mxu0 0.0
    %2012 = vmatpush.msra.mxu0 0.0
    %2013 = vmatpush.msra.mxu0 0.0
    %2014 = vmatpush.msra.mxu0 0.0
    %2015 = vmatpush.msra.mxu0 0.0
    %2016 = vmatpush.msra.mxu0 0.0
    %2017 = vmatpush.msra.mxu0 %v1968
    %2018 = vmatpush.msra.mxu0 %v1961
    %2019 = vmatmul.f32.gmra.mxu0 %v1992
    %v2020 = vpop.f32.mrf.mxu0
    %v2021 = vadd.f32 0.0, %v2020
    %2022 = vmatmul.f32.gmra.mxu0 %v1995
    %v2023 = vpop.f32.mrf.mxu0
    %v2024 = vadd.f32 0.0, %v2023
    %2025 = vmatmul.f32.gmra.mxu0 %v1998
    %v2026 = vpop.f32.mrf.mxu0
    %v2027 = vadd.f32 0.0, %v2026
    %2028 = vmatmul.f32.gmra.mxu0 %v2001
    %v2029 = vpop.f32.mrf.mxu0
    %v2030 = vadd.f32 0.0, %v2029
    %2031 = vdwg.mxu0
    %2032 = vmatpush.msra.mxu0 0.0
    %2033 = vmatpush.msra.mxu0 0.0
    %2034 = vmatpush.msra.mxu0 0.0
    %2035 = vmatpush.msra.mxu0 0.0
    %2036 = vmatpush.msra.mxu0 0.0
    %2037 = vmatpush.msra.mxu0 0.0
    %2038 = vmatpush.msra.mxu0 0.0
    %2039 = vmatpush.msra.mxu0 0.0
    %2040 = vmatpush.msra.mxu0 0.0
    %2041 = vmatpush.msra.mxu0 0.0
    %2042 = vmatpush.msra.mxu0 0.0
    %2043 = vmatpush.msra.mxu0 0.0
    %2044 = vmatpush.msra.mxu0 0.0
    %2045 = vmatpush.msra.mxu0 0.0
    %2046 = vmatpush.msra.mxu0 %v1969
    %2047 = vmatpush.msra.mxu0 %v1962
    %2048 = vmatmul.f32.gmra.mxu0 %v1992
    %v2049 = vpop.f32.mrf.mxu0
    %v2050 = vadd.f32 0.0, %v2049
    %2051 = vmatmul.f32.gmra.mxu0 %v1995
    %v2052 = vpop.f32.mrf.mxu0
    %v2053 = vadd.f32 0.0, %v2052
    %2054 = vmatmul.f32.gmra.mxu0 %v1998
    %v2055 = vpop.f32.mrf.mxu0
    %v2056 = vadd.f32 0.0, %v2055
    %2057 = vmatmul.f32.gmra.mxu0 %v2001
    %v2058 = vpop.f32.mrf.mxu0
    %v2059 = vadd.f32 0.0, %v2058
    %2060 = vdwg.mxu0
    %2061 = vmatpush.msra.mxu0 0.0
    %2062 = vmatpush.msra.mxu0 0.0
    %2063 = vmatpush.msra.mxu0 0.0
    %2064 = vmatpush.msra.mxu0 0.0
    %2065 = vmatpush.msra.mxu0 0.0
    %2066 = vmatpush.msra.mxu0 0.0
    %2067 = vmatpush.msra.mxu0 0.0
    %2068 = vmatpush.msra.mxu0 0.0
    %2069 = vmatpush.msra.mxu0 0.0
    %2070 = vmatpush.msra.mxu0 0.0
    %2071 = vmatpush.msra.mxu0 0.0
    %2072 = vmatpush.msra.mxu0 0.0
    %2073 = vmatpush.msra.mxu0 0.0
    %2074 = vmatpush.msra.mxu0 0.0
    %2075 = vmatpush.msra.mxu0 %v1970
    %2076 = vmatpush.msra.mxu0 %v1963
    %2077 = vmatmul.f32.gmra.mxu0 %v1992
    %v2078 = vpop.f32.mrf.mxu0
    %v2079 = vadd.f32 0.0, %v2078
    %2080 = vmatmul.f32.gmra.mxu0 %v1995
    %v2081 = vpop.f32.mrf.mxu0
    %v2082 = vadd.f32 0.0, %v2081
    %2083 = vmatmul.f32.gmra.mxu0 %v1998
    %v2084 = vpop.f32.mrf.mxu0
    %v2085 = vadd.f32 0.0, %v2084
    %2086 = vmatmul.f32.gmra.mxu0 %v2001
    %v2087 = vpop.f32.mrf.mxu0
    %v2088 = vadd.f32 0.0, %v2087
    %2089 = vdwg.mxu0
    %2090 = vmatpush.msra.mxu0 0.0
    %2091 = vmatpush.msra.mxu0 0.0
    %2092 = vmatpush.msra.mxu0 0.0
    %2093 = vmatpush.msra.mxu0 0.0
    %2094 = vmatpush.msra.mxu0 0.0
    %2095 = vmatpush.msra.mxu0 0.0
    %2096 = vmatpush.msra.mxu0 0.0
    %2097 = vmatpush.msra.mxu0 0.0
    %2098 = vmatpush.msra.mxu0 0.0
    %2099 = vmatpush.msra.mxu0 0.0
    %2100 = vmatpush.msra.mxu0 0.0
    %2101 = vmatpush.msra.mxu0 0.0
    %2102 = vmatpush.msra.mxu0 0.0
    %2103 = vmatpush.msra.mxu0 0.0
    %2104 = vmatpush.msra.mxu0 %v1971
    %2105 = vmatpush.msra.mxu0 %v1964
    %2106 = vmatmul.f32.gmra.mxu0 %v1992
    %v2107 = vpop.f32.mrf.mxu0
    %v2108 = vadd.f32 0.0, %v2107
    %2109 = vmatmul.f32.gmra.mxu0 %v1995
    %v2110 = vpop.f32.mrf.mxu0
    %v2111 = vadd.f32 0.0, %v2110
    %2112 = vmatmul.f32.gmra.mxu0 %v1998
    %v2113 = vpop.f32.mrf.mxu0
    %v2114 = vadd.f32 0.0, %v2113
    %2115 = vmatmul.f32.gmra.mxu0 %v2001
    %v2116 = vpop.f32.mrf.mxu0
    %v2117 = vadd.f32 0.0, %v2116
    %2118 = vdwg.mxu0
    %2119 = vmatpush.msra.mxu0 0.0
    %2120 = vmatpush.msra.mxu0 0.0
    %2121 = vmatpush.msra.mxu0 0.0
    %2122 = vmatpush.msra.mxu0 0.0
    %2123 = vmatpush.msra.mxu0 0.0
    %2124 = vmatpush.msra.mxu0 0.0
    %2125 = vmatpush.msra.mxu0 0.0
    %2126 = vmatpush.msra.mxu0 0.0
    %2127 = vmatpush.msra.mxu0 0.0
    %2128 = vmatpush.msra.mxu0 0.0
    %2129 = vmatpush.msra.mxu0 0.0
    %2130 = vmatpush.msra.mxu0 0.0
    %2131 = vmatpush.msra.mxu0 0.0
    %2132 = vmatpush.msra.mxu0 0.0
    %2133 = vmatpush.msra.mxu0 %v1972
    %2134 = vmatpush.msra.mxu0 %v1965
    %2135 = vmatmul.f32.gmra.mxu0 %v1992
    %v2136 = vpop.f32.mrf.mxu0
    %v2137 = vadd.f32 0.0, %v2136
    %2138 = vmatmul.f32.gmra.mxu0 %v1995
    %v2139 = vpop.f32.mrf.mxu0
    %v2140 = vadd.f32 0.0, %v2139
    %2141 = vmatmul.f32.gmra.mxu0 %v1998
    %v2142 = vpop.f32.mrf.mxu0
    %v2143 = vadd.f32 0.0, %v2142
    %2144 = vmatmul.f32.gmra.mxu0 %v2001
    %v2145 = vpop.f32.mrf.mxu0
    %v2146 = vadd.f32 0.0, %v2145
    %2147 = vdwg.mxu0
    %2148 = vmatpush.msra.mxu0 0.0
    %2149 = vmatpush.msra.mxu0 0.0
    %2150 = vmatpush.msra.mxu0 0.0
    %2151 = vmatpush.msra.mxu0 0.0
    %2152 = vmatpush.msra.mxu0 0.0
    %2153 = vmatpush.msra.mxu0 0.0
    %2154 = vmatpush.msra.mxu0 0.0
    %2155 = vmatpush.msra.mxu0 0.0
    %2156 = vmatpush.msra.mxu0 0.0
    %2157 = vmatpush.msra.mxu0 0.0
    %2158 = vmatpush.msra.mxu0 0.0
    %2159 = vmatpush.msra.mxu0 0.0
    %2160 = vmatpush.msra.mxu0 0.0
    %2161 = vmatpush.msra.mxu0 0.0
    %2162 = vmatpush.msra.mxu0 %v1973
    %2163 = vmatpush.msra.mxu0 %v1966
    %2164 = vmatmul.f32.gmra.mxu0 %v1992
    %v2165 = vpop.f32.mrf.mxu0
    %v2166 = vadd.f32 0.0, %v2165
    %2167 = vmatmul.f32.gmra.mxu0 %v1995
    %v2168 = vpop.f32.mrf.mxu0
    %v2169 = vadd.f32 0.0, %v2168
    %2170 = vmatmul.f32.gmra.mxu0 %v1998
    %v2171 = vpop.f32.mrf.mxu0
    %v2172 = vadd.f32 0.0, %v2171
    %2173 = vmatmul.f32.gmra.mxu0 %v2001
    %v2174 = vpop.f32.mrf.mxu0
    %v2175 = vadd.f32 0.0, %v2174
    %2176 = vdwg.mxu0
    %2177 = vmatpush.msra.mxu0 0.0
    %2178 = vmatpush.msra.mxu0 0.0
    %2179 = vmatpush.msra.mxu0 0.0
    %2180 = vmatpush.msra.mxu0 0.0
    %2181 = vmatpush.msra.mxu0 0.0
    %2182 = vmatpush.msra.mxu0 0.0
    %2183 = vmatpush.msra.mxu0 0.0
    %2184 = vmatpush.msra.mxu0 0.0
    %2185 = vmatpush.msra.mxu0 0.0
    %2186 = vmatpush.msra.mxu0 0.0
    %2187 = vmatpush.msra.mxu0 0.0
    %2188 = vmatpush.msra.mxu0 0.0
    %2189 = vmatpush.msra.mxu0 0.0
    %2190 = vmatpush.msra.mxu0 0.0
    %2191 = vmatpush.msra.mxu0 %v1974
    %2192 = vmatpush.msra.mxu0 %v1967
    %2193 = vmatmul.f32.gmra.mxu0 %v1992
    %v2194 = vpop.f32.mrf.mxu0
    %v2195 = vadd.f32 0.0, %v2194
    %2196 = vmatmul.f32.gmra.mxu0 %v1995
    %v2197 = vpop.f32.mrf.mxu0
    %v2198 = vadd.f32 0.0, %v2197
    %2199 = vmatmul.f32.gmra.mxu0 %v1998
    %v2200 = vpop.f32.mrf.mxu0
    %v2201 = vadd.f32 0.0, %v2200
    %2202 = vmatmul.f32.gmra.mxu0 %v2001
    %v2203 = vpop.f32.mrf.mxu0
    %v2204 = vadd.f32 0.0, %v2203
    %2205 = vdwg.mxu0
    %2206 = vmatpush.msra.mxu0 0.0
    %2207 = vmatpush.msra.mxu0 0.0
    %2208 = vmatpush.msra.mxu0 0.0
    %2209 = vmatpush.msra.mxu0 0.0
    %2210 = vmatpush.msra.mxu0 0.0
    %2211 = vmatpush.msra.mxu0 0.0
    %2212 = vmatpush.msra.mxu0 0.0
    %2213 = vmatpush.msra.mxu0 0.0
    %2214 = vmatpush.msra.mxu0 0.0
    %2215 = vmatpush.msra.mxu0 0.0
    %2216 = vmatpush.msra.mxu0 0.0
    %2217 = vmatpush.msra.mxu0 0.0
    %2218 = vmatpush.msra.mxu0 0.0
    %2219 = vmatpush.msra.mxu0 0.0
    %2220 = vmatpush.msra.mxu0 %v1960
    %2221 = vmatpush.msra.mxu0 %v1944
    %2222 = vmatmul.f32.gmra.mxu0 %v1992
    %v2223 = vpop.f32.mrf.mxu0
    %v2224 = vadd.f32 0.0, %v2223
    %2225 = vmatmul.f32.gmra.mxu0 %v1995
    %v2226 = vpop.f32.mrf.mxu0
    %v2227 = vadd.f32 0.0, %v2226
    %2228 = vmatmul.f32.gmra.mxu0 %v1998
    %v2229 = vpop.f32.mrf.mxu0
    %v2230 = vadd.f32 0.0, %v2229
    %2231 = vmatmul.f32.gmra.mxu0 %v2001
    %v2232 = vpop.f32.mrf.mxu0
    %v2233 = vadd.f32 0.0, %v2232
    %2234 = vdwg.mxu0
    %v2235 = vadd.f32 %v1710, %v2021
    %v2236 = vadd.f32 %v1739, %v2050
    %v2237 = vadd.f32 %v1768, %v2079
    %v2238 = vadd.f32 %v1797, %v2108
    %v2239 = vadd.f32 %v1826, %v2137
    %v2240 = vadd.f32 %v1855, %v2166
    %v2241 = vadd.f32 %v1884, %v2195
    %v2242 = vadd.f32 %v1913, %v2224
    %v2243 = vadd.f32 %v1713, %v2024
    %v2244 = vadd.f32 %v1742, %v2053
    %v2245 = vadd.f32 %v1771, %v2082
    %v2246 = vadd.f32 %v1800, %v2111
    %v2247 = vadd.f32 %v1829, %v2140
    %v2248 = vadd.f32 %v1858, %v2169
    %v2249 = vadd.f32 %v1887, %v2198
    %v2250 = vadd.f32 %v1916, %v2227
    %v2251 = vadd.f32 %v1716, %v2027
    %v2252 = vadd.f32 %v1745, %v2056
    %v2253 = vadd.f32 %v1774, %v2085
    %v2254 = vadd.f32 %v1803, %v2114
    %v2255 = vadd.f32 %v1832, %v2143
    %v2256 = vadd.f32 %v1861, %v2172
    %v2257 = vadd.f32 %v1890, %v2201
    %v2258 = vadd.f32 %v1919, %v2230
    %v2259 = vadd.f32 %v1719, %v2030
    %v2260 = vadd.f32 %v1748, %v2059
    %v2261 = vadd.f32 %v1777, %v2088
    %v2262 = vadd.f32 %v1806, %v2117
    %v2263 = vadd.f32 %v1835, %v2146
    %v2264 = vadd.f32 %v1864, %v2175
    %v2265 = vadd.f32 %v1893, %v2204
    %v2266 = vadd.f32 %v1922, %v2233
    %v2267 = vld [vmem:[%s10] sm:$0xff]
    %v2268 = vld [vmem:[%s10 + $0x8] sm:$0xff]
    %v2269 = vld [vmem:[%s10 + $0x10] sm:$0xff]
    %v2270 = vld [vmem:[%s10 + $0x18] sm:$0xff]
    %2272 = vset.pattern.permute.xlu0 0
    %2273 = vperm.xlu0 %2272, %v2267
    %v2274 = vpop.permute.xlu0 %2273
    %2277 = vset.pattern.permute.xlu0 0
    %2278 = vperm.xlu0 %2277, %v2268
    %v2279 = vpop.permute.xlu0 %2278
    %2282 = vset.pattern.permute.xlu0 0
    %2283 = vperm.xlu0 %2282, %v2269
    %v2284 = vpop.permute.xlu0 %2283
    %2287 = vset.pattern.permute.xlu0 0
    %2288 = vperm.xlu0 %2287, %v2270
    %v2289 = vpop.permute.xlu0 %2288
    %v2291 = vadd.f32 %v2235, %v2274
    %v2292 = vadd.f32 %v2236, %v2274
    %v2293 = vadd.f32 %v2237, %v2274
    %v2294 = vadd.f32 %v2238, %v2274
    %v2295 = vadd.f32 %v2239, %v2274
    %v2296 = vadd.f32 %v2240, %v2274
    %v2297 = vadd.f32 %v2241, %v2274
    %v2298 = vadd.f32 %v2242, %v2274
    %v2299 = vadd.f32 %v2243, %v2279
    %v2300 = vadd.f32 %v2244, %v2279
    %v2301 = vadd.f32 %v2245, %v2279
    %v2302 = vadd.f32 %v2246, %v2279
    %v2303 = vadd.f32 %v2247, %v2279
    %v2304 = vadd.f32 %v2248, %v2279
    %v2305 = vadd.f32 %v2249, %v2279
    %v2306 = vadd.f32 %v2250, %v2279
    %v2307 = vadd.f32 %v2251, %v2284
    %v2308 = vadd.f32 %v2252, %v2284
    %v2309 = vadd.f32 %v2253, %v2284
    %v2310 = vadd.f32 %v2254, %v2284
    %v2311 = vadd.f32 %v2255, %v2284
    %v2312 = vadd.f32 %v2256, %v2284
    %v2313 = vadd.f32 %v2257, %v2284
    %v2314 = vadd.f32 %v2258, %v2284
    %v2315 = vadd.f32 %v2259, %v2289
    %v2316 = vadd.f32 %v2260, %v2289
    %v2317 = vadd.f32 %v2261, %v2289
    %v2318 = vadd.f32 %v2262, %v2289
    %v2319 = vadd.f32 %v2263, %v2289
    %v2320 = vadd.f32 %v2264, %v2289
    %v2321 = vadd.f32 %v2265, %v2289
    %v2322 = vadd.f32 %v2266, %v2289
    %v2323 = vld [vmem:[%s11] sm:$0xff]
    %v2324 = vld [vmem:[%s11 + $0x8] sm:$0xff]
    %v2325 = vld [vmem:[%s11 + $0x10] sm:$0xff]
    %v2326 = vld [vmem:[%s11 + $0x18] sm:$0xff]
    %2328 = vset.pattern.permute.xlu0 0
    %2329 = vperm.xlu0 %2328, %v2323
    %v2330 = vpop.permute.xlu0 %2329
    %2333 = vset.pattern.permute.xlu0 0
    %2334 = vperm.xlu0 %2333, %v2324
    %v2335 = vpop.permute.xlu0 %2334
    %2338 = vset.pattern.permute.xlu0 0
    %2339 = vperm.xlu0 %2338, %v2325
    %v2340 = vpop.permute.xlu0 %2339
    %2343 = vset.pattern.permute.xlu0 0
    %2344 = vperm.xlu0 %2343, %v2326
    %v2345 = vpop.permute.xlu0 %2344
    %v2347 = vmul.f32 %v2291, %v2330
    %v2348 = vmul.f32 %v2292, %v2330
    %v2349 = vmul.f32 %v2293, %v2330
    %v2350 = vmul.f32 %v2294, %v2330
    %v2351 = vmul.f32 %v2295, %v2330
    %v2352 = vmul.f32 %v2296, %v2330
    %v2353 = vmul.f32 %v2297, %v2330
    %v2354 = vmul.f32 %v2298, %v2330
    %v2355 = vmul.f32 %v2299, %v2335
    %v2356 = vmul.f32 %v2300, %v2335
    %v2357 = vmul.f32 %v2301, %v2335
    %v2358 = vmul.f32 %v2302, %v2335
    %v2359 = vmul.f32 %v2303, %v2335
    %v2360 = vmul.f32 %v2304, %v2335
    %v2361 = vmul.f32 %v2305, %v2335
    %v2362 = vmul.f32 %v2306, %v2335
    %v2363 = vmul.f32 %v2307, %v2340
    %v2364 = vmul.f32 %v2308, %v2340
    %v2365 = vmul.f32 %v2309, %v2340
    %v2366 = vmul.f32 %v2310, %v2340
    %v2367 = vmul.f32 %v2311, %v2340
    %v2368 = vmul.f32 %v2312, %v2340
    %v2369 = vmul.f32 %v2313, %v2340
    %v2370 = vmul.f32 %v2314, %v2340
    %v2371 = vmul.f32 %v2315, %v2345
    %v2372 = vmul.f32 %v2316, %v2345
    %v2373 = vmul.f32 %v2317, %v2345
    %v2374 = vmul.f32 %v2318, %v2345
    %v2375 = vmul.f32 %v2319, %v2345
    %v2376 = vmul.f32 %v2320, %v2345
    %v2377 = vmul.f32 %v2321, %v2345
    %v2378 = vmul.f32 %v2322, %v2345
    %v2379 = vld [vmem:[%s12] sm:$0xff]
    %v2380 = vld [vmem:[%s12 + $0x8] sm:$0xff]
    %v2381 = vld [vmem:[%s12 + $0x10] sm:$0xff]
    %v2382 = vld [vmem:[%s12 + $0x18] sm:$0xff]
    %2384 = vset.pattern.permute.xlu0 0
    %2385 = vperm.xlu0 %2384, %v2379
    %v2386 = vpop.permute.xlu0 %2385
    %2389 = vset.pattern.permute.xlu0 0
    %2390 = vperm.xlu0 %2389, %v2380
    %v2391 = vpop.permute.xlu0 %2390
    %2394 = vset.pattern.permute.xlu0 0
    %2395 = vperm.xlu0 %2394, %v2381
    %v2396 = vpop.permute.xlu0 %2395
    %2399 = vset.pattern.permute.xlu0 0
    %2400 = vperm.xlu0 %2399, %v2382
    %v2401 = vpop.permute.xlu0 %2400
    %v2403 = vadd.f32 %v2347, %v2386
    %v2404 = vadd.f32 %v2348, %v2386
    %v2405 = vadd.f32 %v2349, %v2386
    %v2406 = vadd.f32 %v2350, %v2386
    %v2407 = vadd.f32 %v2351, %v2386
    %v2408 = vadd.f32 %v2352, %v2386
    %v2409 = vadd.f32 %v2353, %v2386
    %v2410 = vadd.f32 %v2354, %v2386
    %v2411 = vadd.f32 %v2355, %v2391
    %v2412 = vadd.f32 %v2356, %v2391
    %v2413 = vadd.f32 %v2357, %v2391
    %v2414 = vadd.f32 %v2358, %v2391
    %v2415 = vadd.f32 %v2359, %v2391
    %v2416 = vadd.f32 %v2360, %v2391
    %v2417 = vadd.f32 %v2361, %v2391
    %v2418 = vadd.f32 %v2362, %v2391
    %v2419 = vadd.f32 %v2363, %v2396
    %v2420 = vadd.f32 %v2364, %v2396
    %v2421 = vadd.f32 %v2365, %v2396
    %v2422 = vadd.f32 %v2366, %v2396
    %v2423 = vadd.f32 %v2367, %v2396
    %v2424 = vadd.f32 %v2368, %v2396
    %v2425 = vadd.f32 %v2369, %v2396
    %v2426 = vadd.f32 %v2370, %v2396
    %v2427 = vadd.f32 %v2371, %v2401
    %v2428 = vadd.f32 %v2372, %v2401
    %v2429 = vadd.f32 %v2373, %v2401
    %v2430 = vadd.f32 %v2374, %v2401
    %v2431 = vadd.f32 %v2375, %v2401
    %v2432 = vadd.f32 %v2376, %v2401
    %v2433 = vadd.f32 %v2377, %v2401
    %v2434 = vadd.f32 %v2378, %v2401
    %vm2435 = vcmp.ge.f32.partialorder %v2403, 0.0
    %vm2436 = vcmp.ge.f32.partialorder %v2404, 0.0
    %vm2437 = vcmp.ge.f32.partialorder %v2405, 0.0
    %vm2438 = vcmp.ge.f32.partialorder %v2406, 0.0
    %vm2439 = vcmp.ge.f32.partialorder %v2407, 0.0
    %vm2440 = vcmp.ge.f32.partialorder %v2408, 0.0
    %vm2441 = vcmp.ge.f32.partialorder %v2409, 0.0
    %vm2442 = vcmp.ge.f32.partialorder %v2410, 0.0
    %vm2443 = vcmp.ge.f32.partialorder %v2411, 0.0
    %vm2444 = vcmp.ge.f32.partialorder %v2412, 0.0
    %vm2445 = vcmp.ge.f32.partialorder %v2413, 0.0
    %vm2446 = vcmp.ge.f32.partialorder %v2414, 0.0
    %vm2447 = vcmp.ge.f32.partialorder %v2415, 0.0
    %vm2448 = vcmp.ge.f32.partialorder %v2416, 0.0
    %vm2449 = vcmp.ge.f32.partialorder %v2417, 0.0
    %vm2450 = vcmp.ge.f32.partialorder %v2418, 0.0
    %vm2451 = vcmp.ge.f32.partialorder %v2419, 0.0
    %vm2452 = vcmp.ge.f32.partialorder %v2420, 0.0
    %vm2453 = vcmp.ge.f32.partialorder %v2421, 0.0
    %vm2454 = vcmp.ge.f32.partialorder %v2422, 0.0
    %vm2455 = vcmp.ge.f32.partialorder %v2423, 0.0
    %vm2456 = vcmp.ge.f32.partialorder %v2424, 0.0
    %vm2457 = vcmp.ge.f32.partialorder %v2425, 0.0
    %vm2458 = vcmp.ge.f32.partialorder %v2426, 0.0
    %vm2459 = vcmp.ge.f32.partialorder %v2427, 0.0
    %vm2460 = vcmp.ge.f32.partialorder %v2428, 0.0
    %vm2461 = vcmp.ge.f32.partialorder %v2429, 0.0
    %vm2462 = vcmp.ge.f32.partialorder %v2430, 0.0
    %vm2463 = vcmp.ge.f32.partialorder %v2431, 0.0
    %vm2464 = vcmp.ge.f32.partialorder %v2432, 0.0
    %vm2465 = vcmp.ge.f32.partialorder %v2433, 0.0
    %vm2466 = vcmp.ge.f32.partialorder %v2434, 0.0
    %v2467 = vmul.f32 %v2403, 0.3
    %v2468 = vmul.f32 %v2404, 0.3
    %v2469 = vmul.f32 %v2405, 0.3
    %v2470 = vmul.f32 %v2406, 0.3
    %v2471 = vmul.f32 %v2407, 0.3
    %v2472 = vmul.f32 %v2408, 0.3
    %v2473 = vmul.f32 %v2409, 0.3
    %v2474 = vmul.f32 %v2410, 0.3
    %v2475 = vmul.f32 %v2411, 0.3
    %v2476 = vmul.f32 %v2412, 0.3
    %v2477 = vmul.f32 %v2413, 0.3
    %v2478 = vmul.f32 %v2414, 0.3
    %v2479 = vmul.f32 %v2415, 0.3
    %v2480 = vmul.f32 %v2416, 0.3
    %v2481 = vmul.f32 %v2417, 0.3
    %v2482 = vmul.f32 %v2418, 0.3
    %v2483 = vmul.f32 %v2419, 0.3
    %v2484 = vmul.f32 %v2420, 0.3
    %v2485 = vmul.f32 %v2421, 0.3
    %v2486 = vmul.f32 %v2422, 0.3
    %v2487 = vmul.f32 %v2423, 0.3
    %v2488 = vmul.f32 %v2424, 0.3
    %v2489 = vmul.f32 %v2425, 0.3
    %v2490 = vmul.f32 %v2426, 0.3
    %v2491 = vmul.f32 %v2427, 0.3
    %v2492 = vmul.f32 %v2428, 0.3
    %v2493 = vmul.f32 %v2429, 0.3
    %v2494 = vmul.f32 %v2430, 0.3
    %v2495 = vmul.f32 %v2431, 0.3
    %v2496 = vmul.f32 %v2432, 0.3
    %v2497 = vmul.f32 %v2433, 0.3
    %v2498 = vmul.f32 %v2434, 0.3
    %v2499 = vsel %vm2435, %v2403, %v2467
    %v2500 = vsel %vm2436, %v2404, %v2468
    %v2501 = vsel %vm2437, %v2405, %v2469
    %v2502 = vsel %vm2438, %v2406, %v2470
    %v2503 = vsel %vm2439, %v2407, %v2471
    %v2504 = vsel %vm2440, %v2408, %v2472
    %v2505 = vsel %vm2441, %v2409, %v2473
    %v2506 = vsel %vm2442, %v2410, %v2474
    %v2507 = vsel %vm2443, %v2411, %v2475
    %v2508 = vsel %vm2444, %v2412, %v2476
    %v2509 = vsel %vm2445, %v2413, %v2477
    %v2510 = vsel %vm2446, %v2414, %v2478
    %v2511 = vsel %vm2447, %v2415, %v2479
    %v2512 = vsel %vm2448, %v2416, %v2480
    %v2513 = vsel %vm2449, %v2417, %v2481
    %v2514 = vsel %vm2450, %v2418, %v2482
    %v2515 = vsel %vm2451, %v2419, %v2483
    %v2516 = vsel %vm2452, %v2420, %v2484
    %v2517 = vsel %vm2453, %v2421, %v2485
    %v2518 = vsel %vm2454, %v2422, %v2486
    %v2519 = vsel %vm2455, %v2423, %v2487
    %v2520 = vsel %vm2456, %v2424, %v2488
    %v2521 = vsel %vm2457, %v2425, %v2489
    %v2522 = vsel %vm2458, %v2426, %v2490
    %v2523 = vsel %vm2459, %v2427, %v2491
    %v2524 = vsel %vm2460, %v2428, %v2492
    %v2525 = vsel %vm2461, %v2429, %v2493
    %v2526 = vsel %vm2462, %v2430, %v2494
    %v2527 = vsel %vm2463, %v2431, %v2495
    %v2528 = vsel %vm2464, %v2432, %v2496
    %v2529 = vsel %vm2465, %v2433, %v2497
    %v2530 = vsel %vm2466, %v2434, %v2498
    %2563 = vrot.lane.b32.xlu0 %v2499, 127
    %v2564 = vpop.permute.xlu0 %2563
    %2565 = vrot.lane.b32.xlu0 %v2500, 127
    %v2566 = vpop.permute.xlu0 %2565
    %2567 = vrot.lane.b32.xlu0 %v2501, 127
    %v2568 = vpop.permute.xlu0 %2567
    %2569 = vrot.lane.b32.xlu0 %v2502, 127
    %v2570 = vpop.permute.xlu0 %2569
    %2571 = vrot.lane.b32.xlu0 %v2503, 127
    %v2572 = vpop.permute.xlu0 %2571
    %2573 = vrot.lane.b32.xlu0 %v2504, 127
    %v2574 = vpop.permute.xlu0 %2573
    %2575 = vrot.lane.b32.xlu0 %v2505, 127
    %v2576 = vpop.permute.xlu0 %2575
    %2577 = vrot.lane.b32.xlu0 %v2506, 127
    %v2578 = vpop.permute.xlu0 %2577
    %2579 = vrot.lane.b32.xlu0 %v2507, 127
    %v2580 = vpop.permute.xlu0 %2579
    %2581 = vrot.lane.b32.xlu0 %v2508, 127
    %v2582 = vpop.permute.xlu0 %2581
    %2583 = vrot.lane.b32.xlu0 %v2509, 127
    %v2584 = vpop.permute.xlu0 %2583
    %2585 = vrot.lane.b32.xlu0 %v2510, 127
    %v2586 = vpop.permute.xlu0 %2585
    %2587 = vrot.lane.b32.xlu0 %v2511, 127
    %v2588 = vpop.permute.xlu0 %2587
    %2589 = vrot.lane.b32.xlu0 %v2512, 127
    %v2590 = vpop.permute.xlu0 %2589
    %2591 = vrot.lane.b32.xlu0 %v2513, 127
    %v2592 = vpop.permute.xlu0 %2591
    %2593 = vrot.lane.b32.xlu0 %v2514, 127
    %v2594 = vpop.permute.xlu0 %2593
    %2595 = vrot.lane.b32.xlu0 %v2515, 127
    %v2596 = vpop.permute.xlu0 %2595
    %2597 = vrot.lane.b32.xlu0 %v2516, 127
    %v2598 = vpop.permute.xlu0 %2597
    %2599 = vrot.lane.b32.xlu0 %v2517, 127
    %v2600 = vpop.permute.xlu0 %2599
    %2601 = vrot.lane.b32.xlu0 %v2518, 127
    %v2602 = vpop.permute.xlu0 %2601
    %2603 = vrot.lane.b32.xlu0 %v2519, 127
    %v2604 = vpop.permute.xlu0 %2603
    %2605 = vrot.lane.b32.xlu0 %v2520, 127
    %v2606 = vpop.permute.xlu0 %2605
    %2607 = vrot.lane.b32.xlu0 %v2521, 127
    %v2608 = vpop.permute.xlu0 %2607
    %2609 = vrot.lane.b32.xlu0 %v2522, 127
    %v2610 = vpop.permute.xlu0 %2609
    %2611 = vrot.lane.b32.xlu0 %v2523, 127
    %v2612 = vpop.permute.xlu0 %2611
    %2613 = vrot.lane.b32.xlu0 %v2524, 127
    %v2614 = vpop.permute.xlu0 %2613
    %2615 = vrot.lane.b32.xlu0 %v2525, 127
    %v2616 = vpop.permute.xlu0 %2615
    %2617 = vrot.lane.b32.xlu0 %v2526, 127
    %v2618 = vpop.permute.xlu0 %2617
    %2619 = vrot.lane.b32.xlu0 %v2527, 127
    %v2620 = vpop.permute.xlu0 %2619
    %2621 = vrot.lane.b32.xlu0 %v2528, 127
    %v2622 = vpop.permute.xlu0 %2621
    %2623 = vrot.lane.b32.xlu0 %v2529, 127
    %v2624 = vpop.permute.xlu0 %2623
    %2625 = vrot.lane.b32.xlu0 %v2530, 127
    %v2626 = vpop.permute.xlu0 %2625
    %v2627 = vsel %vm116, %v2564, %v2566
    %v2628 = vsel %vm116, %v2566, %v2568
    %v2629 = vsel %vm116, %v2568, %v2570
    %v2630 = vsel %vm116, %v2570, %v2572
    %v2631 = vsel %vm116, %v2572, %v2574
    %v2632 = vsel %vm116, %v2574, %v2576
    %v2633 = vsel %vm116, %v2576, %v2578
    %v2634 = vsel %vm116, %v2580, %v2582
    %v2635 = vsel %vm116, %v2582, %v2584
    %v2636 = vsel %vm116, %v2584, %v2586
    %v2637 = vsel %vm116, %v2586, %v2588
    %v2638 = vsel %vm116, %v2588, %v2590
    %v2639 = vsel %vm116, %v2590, %v2592
    %v2640 = vsel %vm116, %v2592, %v2594
    %v2641 = vsel %vm116, %v2596, %v2598
    %v2642 = vsel %vm116, %v2598, %v2600
    %v2643 = vsel %vm116, %v2600, %v2602
    %v2644 = vsel %vm116, %v2602, %v2604
    %v2645 = vsel %vm116, %v2604, %v2606
    %v2646 = vsel %vm116, %v2606, %v2608
    %v2647 = vsel %vm116, %v2608, %v2610
    %v2648 = vsel %vm116, %v2612, %v2614
    %v2649 = vsel %vm116, %v2614, %v2616
    %v2650 = vsel %vm116, %v2616, %v2618
    %v2651 = vsel %vm116, %v2618, %v2620
    %v2652 = vsel %vm116, %v2620, %v2622
    %v2653 = vsel %vm116, %v2622, %v2624
    %v2654 = vsel %vm116, %v2624, %v2626
    %v2687 = vmax.f32 %v2499, %v2627
    %v2688 = vmax.f32 %v2500, %v2628
    %v2689 = vmax.f32 %v2501, %v2629
    %v2690 = vmax.f32 %v2502, %v2630
    %v2691 = vmax.f32 %v2503, %v2631
    %v2692 = vmax.f32 %v2504, %v2632
    %v2693 = vmax.f32 %v2505, %v2633
    %v2694 = vmax.f32 %v2506, %v2578
    %v2695 = vmax.f32 %v2507, %v2634
    %v2696 = vmax.f32 %v2508, %v2635
    %v2697 = vmax.f32 %v2509, %v2636
    %v2698 = vmax.f32 %v2510, %v2637
    %v2699 = vmax.f32 %v2511, %v2638
    %v2700 = vmax.f32 %v2512, %v2639
    %v2701 = vmax.f32 %v2513, %v2640
    %v2702 = vmax.f32 %v2514, %v2594
    %v2703 = vmax.f32 %v2515, %v2641
    %v2704 = vmax.f32 %v2516, %v2642
    %v2705 = vmax.f32 %v2517, %v2643
    %v2706 = vmax.f32 %v2518, %v2644
    %v2707 = vmax.f32 %v2519, %v2645
    %v2708 = vmax.f32 %v2520, %v2646
    %v2709 = vmax.f32 %v2521, %v2647
    %v2710 = vmax.f32 %v2522, %v2610
    %v2711 = vmax.f32 %v2523, %v2648
    %v2712 = vmax.f32 %v2524, %v2649
    %v2713 = vmax.f32 %v2525, %v2650
    %v2714 = vmax.f32 %v2526, %v2651
    %v2715 = vmax.f32 %v2527, %v2652
    %v2716 = vmax.f32 %v2528, %v2653
    %v2717 = vmax.f32 %v2529, %v2654
    %v2718 = vmax.f32 %v2530, %v2626
    %2751 = vrot.lane.b32.xlu0 %v2687, 126
    %v2752 = vpop.permute.xlu0 %2751
    %2753 = vrot.lane.b32.xlu0 %v2688, 126
    %v2754 = vpop.permute.xlu0 %2753
    %2755 = vrot.lane.b32.xlu0 %v2689, 126
    %v2756 = vpop.permute.xlu0 %2755
    %2757 = vrot.lane.b32.xlu0 %v2690, 126
    %v2758 = vpop.permute.xlu0 %2757
    %2759 = vrot.lane.b32.xlu0 %v2691, 126
    %v2760 = vpop.permute.xlu0 %2759
    %2761 = vrot.lane.b32.xlu0 %v2692, 126
    %v2762 = vpop.permute.xlu0 %2761
    %2763 = vrot.lane.b32.xlu0 %v2693, 126
    %v2764 = vpop.permute.xlu0 %2763
    %2765 = vrot.lane.b32.xlu0 %v2694, 126
    %v2766 = vpop.permute.xlu0 %2765
    %2767 = vrot.lane.b32.xlu0 %v2695, 126
    %v2768 = vpop.permute.xlu0 %2767
    %2769 = vrot.lane.b32.xlu0 %v2696, 126
    %v2770 = vpop.permute.xlu0 %2769
    %2771 = vrot.lane.b32.xlu0 %v2697, 126
    %v2772 = vpop.permute.xlu0 %2771
    %2773 = vrot.lane.b32.xlu0 %v2698, 126
    %v2774 = vpop.permute.xlu0 %2773
    %2775 = vrot.lane.b32.xlu0 %v2699, 126
    %v2776 = vpop.permute.xlu0 %2775
    %2777 = vrot.lane.b32.xlu0 %v2700, 126
    %v2778 = vpop.permute.xlu0 %2777
    %2779 = vrot.lane.b32.xlu0 %v2701, 126
    %v2780 = vpop.permute.xlu0 %2779
    %2781 = vrot.lane.b32.xlu0 %v2702, 126
    %v2782 = vpop.permute.xlu0 %2781
    %2783 = vrot.lane.b32.xlu0 %v2703, 126
    %v2784 = vpop.permute.xlu0 %2783
    %2785 = vrot.lane.b32.xlu0 %v2704, 126
    %v2786 = vpop.permute.xlu0 %2785
    %2787 = vrot.lane.b32.xlu0 %v2705, 126
    %v2788 = vpop.permute.xlu0 %2787
    %2789 = vrot.lane.b32.xlu0 %v2706, 126
    %v2790 = vpop.permute.xlu0 %2789
    %2791 = vrot.lane.b32.xlu0 %v2707, 126
    %v2792 = vpop.permute.xlu0 %2791
    %2793 = vrot.lane.b32.xlu0 %v2708, 126
    %v2794 = vpop.permute.xlu0 %2793
    %2795 = vrot.lane.b32.xlu0 %v2709, 126
    %v2796 = vpop.permute.xlu0 %2795
    %2797 = vrot.lane.b32.xlu0 %v2710, 126
    %v2798 = vpop.permute.xlu0 %2797
    %2799 = vrot.lane.b32.xlu0 %v2711, 126
    %v2800 = vpop.permute.xlu0 %2799
    %2801 = vrot.lane.b32.xlu0 %v2712, 126
    %v2802 = vpop.permute.xlu0 %2801
    %2803 = vrot.lane.b32.xlu0 %v2713, 126
    %v2804 = vpop.permute.xlu0 %2803
    %2805 = vrot.lane.b32.xlu0 %v2714, 126
    %v2806 = vpop.permute.xlu0 %2805
    %2807 = vrot.lane.b32.xlu0 %v2715, 126
    %v2808 = vpop.permute.xlu0 %2807
    %2809 = vrot.lane.b32.xlu0 %v2716, 126
    %v2810 = vpop.permute.xlu0 %2809
    %2811 = vrot.lane.b32.xlu0 %v2717, 126
    %v2812 = vpop.permute.xlu0 %2811
    %2813 = vrot.lane.b32.xlu0 %v2718, 126
    %v2814 = vpop.permute.xlu0 %2813
    %v2815 = vsel %vm179, %v2752, %v2754
    %v2816 = vsel %vm179, %v2754, %v2756
    %v2817 = vsel %vm179, %v2756, %v2758
    %v2818 = vsel %vm179, %v2758, %v2760
    %v2819 = vsel %vm179, %v2760, %v2762
    %v2820 = vsel %vm179, %v2762, %v2764
    %v2821 = vsel %vm179, %v2764, %v2766
    %v2822 = vsel %vm179, %v2768, %v2770
    %v2823 = vsel %vm179, %v2770, %v2772
    %v2824 = vsel %vm179, %v2772, %v2774
    %v2825 = vsel %vm179, %v2774, %v2776
    %v2826 = vsel %vm179, %v2776, %v2778
    %v2827 = vsel %vm179, %v2778, %v2780
    %v2828 = vsel %vm179, %v2780, %v2782
    %v2829 = vsel %vm179, %v2784, %v2786
    %v2830 = vsel %vm179, %v2786, %v2788
    %v2831 = vsel %vm179, %v2788, %v2790
    %v2832 = vsel %vm179, %v2790, %v2792
    %v2833 = vsel %vm179, %v2792, %v2794
    %v2834 = vsel %vm179, %v2794, %v2796
    %v2835 = vsel %vm179, %v2796, %v2798
    %v2836 = vsel %vm179, %v2800, %v2802
    %v2837 = vsel %vm179, %v2802, %v2804
    %v2838 = vsel %vm179, %v2804, %v2806
    %v2839 = vsel %vm179, %v2806, %v2808
    %v2840 = vsel %vm179, %v2808, %v2810
    %v2841 = vsel %vm179, %v2810, %v2812
    %v2842 = vsel %vm179, %v2812, %v2814
    %v2875 = vmax.f32 %v2687, %v2815
    %v2876 = vmax.f32 %v2688, %v2816
    %v2877 = vmax.f32 %v2689, %v2817
    %v2878 = vmax.f32 %v2690, %v2818
    %v2879 = vmax.f32 %v2691, %v2819
    %v2880 = vmax.f32 %v2692, %v2820
    %v2881 = vmax.f32 %v2693, %v2821
    %v2882 = vmax.f32 %v2694, %v2766
    %v2883 = vmax.f32 %v2695, %v2822
    %v2884 = vmax.f32 %v2696, %v2823
    %v2885 = vmax.f32 %v2697, %v2824
    %v2886 = vmax.f32 %v2698, %v2825
    %v2887 = vmax.f32 %v2699, %v2826
    %v2888 = vmax.f32 %v2700, %v2827
    %v2889 = vmax.f32 %v2701, %v2828
    %v2890 = vmax.f32 %v2702, %v2782
    %v2891 = vmax.f32 %v2703, %v2829
    %v2892 = vmax.f32 %v2704, %v2830
    %v2893 = vmax.f32 %v2705, %v2831
    %v2894 = vmax.f32 %v2706, %v2832
    %v2895 = vmax.f32 %v2707, %v2833
    %v2896 = vmax.f32 %v2708, %v2834
    %v2897 = vmax.f32 %v2709, %v2835
    %v2898 = vmax.f32 %v2710, %v2798
    %v2899 = vmax.f32 %v2711, %v2836
    %v2900 = vmax.f32 %v2712, %v2837
    %v2901 = vmax.f32 %v2713, %v2838
    %v2902 = vmax.f32 %v2714, %v2839
    %v2903 = vmax.f32 %v2715, %v2840
    %v2904 = vmax.f32 %v2716, %v2841
    %v2905 = vmax.f32 %v2717, %v2842
    %v2906 = vmax.f32 %v2718, %v2814
    %v2907 = vpack.c.bf16 %v2876, %v2875
    %v2908 = vpack.c.bf16 %v2878, %v2877
    %v2909 = vpack.c.bf16 %v2880, %v2879
    %v2910 = vpack.c.bf16 %v2882, %v2881
    %v2911 = vpack.c.bf16 %v2884, %v2883
    %v2912 = vpack.c.bf16 %v2886, %v2885
    %v2913 = vpack.c.bf16 %v2888, %v2887
    %v2914 = vpack.c.bf16 %v2890, %v2889
    %v2915 = vpack.c.bf16 %v2892, %v2891
    %v2916 = vpack.c.bf16 %v2894, %v2893
    %v2917 = vpack.c.bf16 %v2896, %v2895
    %v2918 = vpack.c.bf16 %v2898, %v2897
    %v2919 = vpack.c.bf16 %v2900, %v2899
    %v2920 = vpack.c.bf16 %v2902, %v2901
    %v2921 = vpack.c.bf16 %v2904, %v2903
    %v2922 = vpack.c.bf16 %v2906, %v2905
    %2923 = vst [vmem:[#allocation2] sm:$0xff] %v2907
    %2924 = vst [vmem:[#allocation2 + $0x8] sm:$0xff] %v2908
    %2925 = vst [vmem:[#allocation2 + $0x10] sm:$0xff] %v2909
    %vm2926 = vcmask 1043456
    %vm2927 = vcmask 850948
    %vm2928 = vmor %vm2927, %vm2926
    %2929 = vst.msk [vmem:[#allocation2 + $0x18] sm:$0xff] %vm2928, %v2910
    %2930 = vst [vmem:[#allocation2 + $0x20] sm:$0xff] %v2911
    %2931 = vst [vmem:[#allocation2 + $0x28] sm:$0xff] %v2912
    %2932 = vst [vmem:[#allocation2 + $0x30] sm:$0xff] %v2913
    %2933 = vst.msk [vmem:[#allocation2 + $0x38] sm:$0xff] %vm2928, %v2914
    %2934 = vst [vmem:[#allocation2 + $0x40] sm:$0xff] %v2915
    %2935 = vst [vmem:[#allocation2 + $0x48] sm:$0xff] %v2916
    %2936 = vst [vmem:[#allocation2 + $0x50] sm:$0xff] %v2917
    %2937 = vst.msk [vmem:[#allocation2 + $0x58] sm:$0xff] %vm2928, %v2918
    %2938 = vst [vmem:[#allocation2 + $0x60] sm:$0xff] %v2919
    %2939 = vst [vmem:[#allocation2 + $0x68] sm:$0xff] %v2920
    %2940 = vst [vmem:[#allocation2 + $0x70] sm:$0xff] %v2921
    %2941 = vst.msk [vmem:[#allocation2 + $0x78] sm:$0xff] %vm2928, %v2922
    %s2942 = scalar_lea.vmem %s0, 8
    %v2943 = vld [vmem:[%s2942] sm:$0xff]
    %v2944 = vld [vmem:[%s1] sm:$0xff]
    %2946 = vset.pattern.permute.xlu0 0
    %2947 = vperm.xlu0 %2946, %v2944
    %v2948 = vpop.permute.xlu0 %2947
    %v2951 = vperm.slane %v2943, 0
    %v2952 = vperm.slane %v2943, 1
    %v2953 = vperm.slane %v2943, 2
    %v2954 = vperm.slane %v2943, 3
    %v2955 = vperm.slane %v2943, 4
    %v2956 = vperm.slane %v2943, 5
    %v2957 = vperm.slane %v2943, 6
    %v2958 = vperm.slane %v2943, 7
    %v2967 = vmul.f32 %v2948, %v2951
    %v2968 = vmul.f32 %v2948, %v2952
    %v2969 = vmul.f32 %v2948, %v2953
    %v2970 = vmul.f32 %v2948, %v2954
    %v2971 = vmul.f32 %v2948, %v2955
    %v2972 = vmul.f32 %v2948, %v2956
    %v2973 = vmul.f32 %v2948, %v2957
    %v2974 = vmul.f32 %v2948, %v2958
    %v2975 = vld [vmem:[%s77] sm:$0xff]
    %2977 = vset.pattern.permute.xlu0 0
    %2978 = vperm.xlu0 %2977, %v2975
    %v2979 = vpop.permute.xlu0 %2978
    %v2981 = vmul.f32 %v2979, %v2951
    %v2982 = vmul.f32 %v2979, %v2952
    %v2983 = vmul.f32 %v2979, %v2953
    %v2984 = vmul.f32 %v2979, %v2954
    %v2985 = vmul.f32 %v2979, %v2955
    %v2986 = vmul.f32 %v2979, %v2956
    %v2987 = vmul.f32 %v2979, %v2957
    %v2988 = vmul.f32 %v2979, %v2958
    %2997 = vrot.lane.b32.xlu0 %v2981, 127
    %v2998 = vpop.permute.xlu0 %2997
    %2999 = vrot.lane.b32.xlu0 %v2982, 127
    %v3000 = vpop.permute.xlu0 %2999
    %3001 = vrot.lane.b32.xlu0 %v2983, 127
    %v3002 = vpop.permute.xlu0 %3001
    %3003 = vrot.lane.b32.xlu0 %v2984, 127
    %v3004 = vpop.permute.xlu0 %3003
    %3005 = vrot.lane.b32.xlu0 %v2985, 127
    %v3006 = vpop.permute.xlu0 %3005
    %3007 = vrot.lane.b32.xlu0 %v2986, 127
    %v3008 = vpop.permute.xlu0 %3007
    %3009 = vrot.lane.b32.xlu0 %v2987, 127
    %v3010 = vpop.permute.xlu0 %3009
    %3011 = vrot.lane.b32.xlu0 %v2988, 127
    %v3012 = vpop.permute.xlu0 %3011
    %v3013 = vsel %vm116, %v2998, %v3000
    %v3014 = vsel %vm116, %v3000, %v3002
    %v3015 = vsel %vm116, %v3002, %v3004
    %v3016 = vsel %vm116, %v3004, %v3006
    %v3017 = vsel %vm116, %v3006, %v3008
    %v3018 = vsel %vm116, %v3008, %v3010
    %v3019 = vsel %vm116, %v3010, %v3012
    %v3028 = vadd.f32 %v2967, %v3013
    %v3029 = vadd.f32 %v2968, %v3014
    %v3030 = vadd.f32 %v2969, %v3015
    %v3031 = vadd.f32 %v2970, %v3016
    %v3032 = vadd.f32 %v2971, %v3017
    %v3033 = vadd.f32 %v2972, %v3018
    %v3034 = vadd.f32 %v2973, %v3019
    %v3035 = vadd.f32 %v2974, %v3012
    %v3036 = vld [vmem:[%s140] sm:$0xff]
    %3038 = vset.pattern.permute.xlu0 0
    %3039 = vperm.xlu0 %3038, %v3036
    %v3040 = vpop.permute.xlu0 %3039
    %v3042 = vmul.f32 %v3040, %v2951
    %v3043 = vmul.f32 %v3040, %v2952
    %v3044 = vmul.f32 %v3040, %v2953
    %v3045 = vmul.f32 %v3040, %v2954
    %v3046 = vmul.f32 %v3040, %v2955
    %v3047 = vmul.f32 %v3040, %v2956
    %v3048 = vmul.f32 %v3040, %v2957
    %v3049 = vmul.f32 %v3040, %v2958
    %3058 = vrot.lane.b32.xlu0 %v3042, 126
    %v3059 = vpop.permute.xlu0 %3058
    %3060 = vrot.lane.b32.xlu0 %v3043, 126
    %v3061 = vpop.permute.xlu0 %3060
    %3062 = vrot.lane.b32.xlu0 %v3044, 126
    %v3063 = vpop.permute.xlu0 %3062
    %3064 = vrot.lane.b32.xlu0 %v3045, 126
    %v3065 = vpop.permute.xlu0 %3064
    %3066 = vrot.lane.b32.xlu0 %v3046, 126
    %v3067 = vpop.permute.xlu0 %3066
    %3068 = vrot.lane.b32.xlu0 %v3047, 126
    %v3069 = vpop.permute.xlu0 %3068
    %3070 = vrot.lane.b32.xlu0 %v3048, 126
    %v3071 = vpop.permute.xlu0 %3070
    %3072 = vrot.lane.b32.xlu0 %v3049, 126
    %v3073 = vpop.permute.xlu0 %3072
    %v3074 = vsel %vm179, %v3059, %v3061
    %v3075 = vsel %vm179, %v3061, %v3063
    %v3076 = vsel %vm179, %v3063, %v3065
    %v3077 = vsel %vm179, %v3065, %v3067
    %v3078 = vsel %vm179, %v3067, %v3069
    %v3079 = vsel %vm179, %v3069, %v3071
    %v3080 = vsel %vm179, %v3071, %v3073
    %v3089 = vadd.f32 %v3028, %v3074
    %v3090 = vadd.f32 %v3029, %v3075
    %v3091 = vadd.f32 %v3030, %v3076
    %v3092 = vadd.f32 %v3031, %v3077
    %v3093 = vadd.f32 %v3032, %v3078
    %v3094 = vadd.f32 %v3033, %v3079
    %v3095 = vadd.f32 %v3034, %v3080
    %v3096 = vadd.f32 %v3035, %v3073
    %v3097 = vld [vmem:[%s2] sm:$0xff]
    %3099 = vset.pattern.permute.xlu0 0
    %3100 = vperm.xlu0 %3099, %v3097
    %v3101 = vpop.permute.xlu0 %3100
    %v3103 = vadd.f32 %v3089, %v3101
    %v3104 = vadd.f32 %v3090, %v3101
    %v3105 = vadd.f32 %v3091, %v3101
    %v3106 = vadd.f32 %v3092, %v3101
    %v3107 = vadd.f32 %v3093, %v3101
    %v3108 = vadd.f32 %v3094, %v3101
    %v3109 = vadd.f32 %v3095, %v3101
    %v3110 = vadd.f32 %v3096, %v3101
    %v3111 = vld [vmem:[%s3] sm:$0xff]
    %3113 = vset.pattern.permute.xlu0 0
    %3114 = vperm.xlu0 %3113, %v3111
    %v3115 = vpop.permute.xlu0 %3114
    %v3117 = vmul.f32 %v3103, %v3115
    %v3118 = vmul.f32 %v3104, %v3115
    %v3119 = vmul.f32 %v3105, %v3115
    %v3120 = vmul.f32 %v3106, %v3115
    %v3121 = vmul.f32 %v3107, %v3115
    %v3122 = vmul.f32 %v3108, %v3115
    %v3123 = vmul.f32 %v3109, %v3115
    %v3124 = vmul.f32 %v3110, %v3115
    %v3125 = vld [vmem:[%s4] sm:$0xff]
    %3127 = vset.pattern.permute.xlu0 0
    %3128 = vperm.xlu0 %3127, %v3125
    %v3129 = vpop.permute.xlu0 %3128
    %v3131 = vadd.f32 %v3117, %v3129
    %v3132 = vadd.f32 %v3118, %v3129
    %v3133 = vadd.f32 %v3119, %v3129
    %v3134 = vadd.f32 %v3120, %v3129
    %v3135 = vadd.f32 %v3121, %v3129
    %v3136 = vadd.f32 %v3122, %v3129
    %v3137 = vadd.f32 %v3123, %v3129
    %v3138 = vadd.f32 %v3124, %v3129
    %vm3139 = vcmp.ge.f32.partialorder %v3131, 0.0
    %vm3140 = vcmp.ge.f32.partialorder %v3132, 0.0
    %vm3141 = vcmp.ge.f32.partialorder %v3133, 0.0
    %vm3142 = vcmp.ge.f32.partialorder %v3134, 0.0
    %vm3143 = vcmp.ge.f32.partialorder %v3135, 0.0
    %vm3144 = vcmp.ge.f32.partialorder %v3136, 0.0
    %vm3145 = vcmp.ge.f32.partialorder %v3137, 0.0
    %vm3146 = vcmp.ge.f32.partialorder %v3138, 0.0
    %v3147 = vmul.f32 %v3131, 0.3
    %v3148 = vmul.f32 %v3132, 0.3
    %v3149 = vmul.f32 %v3133, 0.3
    %v3150 = vmul.f32 %v3134, 0.3
    %v3151 = vmul.f32 %v3135, 0.3
    %v3152 = vmul.f32 %v3136, 0.3
    %v3153 = vmul.f32 %v3137, 0.3
    %v3154 = vmul.f32 %v3138, 0.3
    %v3155 = vsel %vm3139, %v3131, %v3147
    %v3156 = vsel %vm3140, %v3132, %v3148
    %v3157 = vsel %vm3141, %v3133, %v3149
    %v3158 = vsel %vm3142, %v3134, %v3150
    %v3159 = vsel %vm3143, %v3135, %v3151
    %v3160 = vsel %vm3144, %v3136, %v3152
    %v3161 = vsel %vm3145, %v3137, %v3153
    %v3162 = vsel %vm3146, %v3138, %v3154
    %3171 = vrot.lane.b32.xlu0 %v3155, 127
    %v3172 = vpop.permute.xlu0 %3171
    %3173 = vrot.lane.b32.xlu0 %v3156, 127
    %v3174 = vpop.permute.xlu0 %3173
    %3175 = vrot.lane.b32.xlu0 %v3157, 127
    %v3176 = vpop.permute.xlu0 %3175
    %3177 = vrot.lane.b32.xlu0 %v3158, 127
    %v3178 = vpop.permute.xlu0 %3177
    %3179 = vrot.lane.b32.xlu0 %v3159, 127
    %v3180 = vpop.permute.xlu0 %3179
    %3181 = vrot.lane.b32.xlu0 %v3160, 127
    %v3182 = vpop.permute.xlu0 %3181
    %3183 = vrot.lane.b32.xlu0 %v3161, 127
    %v3184 = vpop.permute.xlu0 %3183
    %3185 = vrot.lane.b32.xlu0 %v3162, 127
    %v3186 = vpop.permute.xlu0 %3185
    %v3187 = vsel %vm116, %v3172, %v3174
    %v3188 = vsel %vm116, %v3174, %v3176
    %v3189 = vsel %vm116, %v3176, %v3178
    %v3190 = vsel %vm116, %v3178, %v3180
    %v3191 = vsel %vm116, %v3180, %v3182
    %v3192 = vsel %vm116, %v3182, %v3184
    %v3193 = vsel %vm116, %v3184, %v3186
    %v3202 = vmax.f32 %v3155, %v3187
    %v3203 = vmax.f32 %v3156, %v3188
    %v3204 = vmax.f32 %v3157, %v3189
    %v3205 = vmax.f32 %v3158, %v3190
    %v3206 = vmax.f32 %v3159, %v3191
    %v3207 = vmax.f32 %v3160, %v3192
    %v3208 = vmax.f32 %v3161, %v3193
    %v3209 = vmax.f32 %v3162, %v3186
    %3218 = vrot.lane.b32.xlu0 %v3202, 126
    %v3219 = vpop.permute.xlu0 %3218
    %3220 = vrot.lane.b32.xlu0 %v3203, 126
    %v3221 = vpop.permute.xlu0 %3220
    %3222 = vrot.lane.b32.xlu0 %v3204, 126
    %v3223 = vpop.permute.xlu0 %3222
    %3224 = vrot.lane.b32.xlu0 %v3205, 126
    %v3225 = vpop.permute.xlu0 %3224
    %3226 = vrot.lane.b32.xlu0 %v3206, 126
    %v3227 = vpop.permute.xlu0 %3226
    %3228 = vrot.lane.b32.xlu0 %v3207, 126
    %v3229 = vpop.permute.xlu0 %3228
    %3230 = vrot.lane.b32.xlu0 %v3208, 126
    %v3231 = vpop.permute.xlu0 %3230
    %3232 = vrot.lane.b32.xlu0 %v3209, 126
    %v3233 = vpop.permute.xlu0 %3232
    %v3234 = vsel %vm179, %v3219, %v3221
    %v3235 = vsel %vm179, %v3221, %v3223
    %v3236 = vsel %vm179, %v3223, %v3225
    %v3237 = vsel %vm179, %v3225, %v3227
    %v3238 = vsel %vm179, %v3227, %v3229
    %v3239 = vsel %vm179, %v3229, %v3231
    %v3240 = vsel %vm179, %v3231, %v3233
    %v3249 = vmax.f32 %v3202, %v3234
    %v3250 = vmax.f32 %v3203, %v3235
    %v3251 = vmax.f32 %v3204, %v3236
    %v3252 = vmax.f32 %v3205, %v3237
    %v3253 = vmax.f32 %v3206, %v3238
    %v3254 = vmax.f32 %v3207, %v3239
    %v3255 = vmax.f32 %v3208, %v3240
    %v3256 = vmax.f32 %v3209, %v3233
    %v3257 = vld [vmem:[%s5] sm:$0xff]
    %v3258 = vld [vmem:[%s5 + $0x8] sm:$0xff]
    %v3259 = vld [vmem:[%s365] sm:$0xff]
    %v3260 = vld [vmem:[%s365 + $0x8] sm:$0xff]
    %3269 = vrot.lane.b32.xlu0 %v3249, 127
    %v3270 = vpop.permute.xlu0 %3269
    %3271 = vrot.lane.b32.xlu0 %v3250, 127
    %v3272 = vpop.permute.xlu0 %3271
    %3273 = vrot.lane.b32.xlu0 %v3251, 127
    %v3274 = vpop.permute.xlu0 %3273
    %3275 = vrot.lane.b32.xlu0 %v3252, 127
    %v3276 = vpop.permute.xlu0 %3275
    %3277 = vrot.lane.b32.xlu0 %v3253, 127
    %v3278 = vpop.permute.xlu0 %3277
    %3279 = vrot.lane.b32.xlu0 %v3254, 127
    %v3280 = vpop.permute.xlu0 %3279
    %3281 = vrot.lane.b32.xlu0 %v3255, 127
    %v3282 = vpop.permute.xlu0 %3281
    %3283 = vrot.lane.b32.xlu0 %v3256, 127
    %v3284 = vpop.permute.xlu0 %3283
    %v3285 = vsel %vm116, %v3270, %v3272
    %v3286 = vsel %vm116, %v3272, %v3274
    %v3287 = vsel %vm116, %v3274, %v3276
    %v3288 = vsel %vm116, %v3276, %v3278
    %v3289 = vsel %vm116, %v3278, %v3280
    %v3290 = vsel %vm116, %v3280, %v3282
    %v3291 = vsel %vm116, %v3282, %v3284
    %v3301 = vsel %vm407, %v3259, 0
    %v3304 = vsel %vm407, %v3260, 0
    %3306 = vmatpush.msra.mxu0 0.0
    %3307 = vmatpush.msra.mxu0 0.0
    %3308 = vmatpush.msra.mxu0 0.0
    %3309 = vmatpush.msra.mxu0 0.0
    %3310 = vmatpush.msra.mxu0 0.0
    %3311 = vmatpush.msra.mxu0 0.0
    %3312 = vmatpush.msra.mxu0 0.0
    %3313 = vmatpush.msra.mxu0 0.0
    %3314 = vmatpush.msra.mxu0 0.0
    %3315 = vmatpush.msra.mxu0 0.0
    %3316 = vmatpush.msra.mxu0 0.0
    %3317 = vmatpush.msra.mxu0 0.0
    %3318 = vmatpush.msra.mxu0 0.0
    %3319 = vmatpush.msra.mxu0 0.0
    %3320 = vmatpush.msra.mxu0 0.0
    %3321 = vmatpush.msra.mxu0 %v3285
    %3322 = vmatmul.f32.gmra.mxu0 %v3301
    %v3323 = vpop.f32.mrf.mxu0
    %v3324 = vadd.f32 0.0, %v3323
    %3325 = vmatmul.f32.gmra.mxu0 %v3304
    %v3326 = vpop.f32.mrf.mxu0
    %v3327 = vadd.f32 0.0, %v3326
    %3328 = vdwg.mxu0
    %3329 = vmatpush.msra.mxu0 0.0
    %3330 = vmatpush.msra.mxu0 0.0
    %3331 = vmatpush.msra.mxu0 0.0
    %3332 = vmatpush.msra.mxu0 0.0
    %3333 = vmatpush.msra.mxu0 0.0
    %3334 = vmatpush.msra.mxu0 0.0
    %3335 = vmatpush.msra.mxu0 0.0
    %3336 = vmatpush.msra.mxu0 0.0
    %3337 = vmatpush.msra.mxu0 0.0
    %3338 = vmatpush.msra.mxu0 0.0
    %3339 = vmatpush.msra.mxu0 0.0
    %3340 = vmatpush.msra.mxu0 0.0
    %3341 = vmatpush.msra.mxu0 0.0
    %3342 = vmatpush.msra.mxu0 0.0
    %3343 = vmatpush.msra.mxu0 0.0
    %3344 = vmatpush.msra.mxu0 %v3286
    %3345 = vmatmul.f32.gmra.mxu0 %v3301
    %v3346 = vpop.f32.mrf.mxu0
    %v3347 = vadd.f32 0.0, %v3346
    %3348 = vmatmul.f32.gmra.mxu0 %v3304
    %v3349 = vpop.f32.mrf.mxu0
    %v3350 = vadd.f32 0.0, %v3349
    %3351 = vdwg.mxu0
    %3352 = vmatpush.msra.mxu0 0.0
    %3353 = vmatpush.msra.mxu0 0.0
    %3354 = vmatpush.msra.mxu0 0.0
    %3355 = vmatpush.msra.mxu0 0.0
    %3356 = vmatpush.msra.mxu0 0.0
    %3357 = vmatpush.msra.mxu0 0.0
    %3358 = vmatpush.msra.mxu0 0.0
    %3359 = vmatpush.msra.mxu0 0.0
    %3360 = vmatpush.msra.mxu0 0.0
    %3361 = vmatpush.msra.mxu0 0.0
    %3362 = vmatpush.msra.mxu0 0.0
    %3363 = vmatpush.msra.mxu0 0.0
    %3364 = vmatpush.msra.mxu0 0.0
    %3365 = vmatpush.msra.mxu0 0.0
    %3366 = vmatpush.msra.mxu0 0.0
    %3367 = vmatpush.msra.mxu0 %v3287
    %3368 = vmatmul.f32.gmra.mxu0 %v3301
    %v3369 = vpop.f32.mrf.mxu0
    %v3370 = vadd.f32 0.0, %v3369
    %3371 = vmatmul.f32.gmra.mxu0 %v3304
    %v3372 = vpop.f32.mrf.mxu0
    %v3373 = vadd.f32 0.0, %v3372
    %3374 = vdwg.mxu0
    %3375 = vmatpush.msra.mxu0 0.0
    %3376 = vmatpush.msra.mxu0 0.0
    %3377 = vmatpush.msra.mxu0 0.0
    %3378 = vmatpush.msra.mxu0 0.0
    %3379 = vmatpush.msra.mxu0 0.0
    %3380 = vmatpush.msra.mxu0 0.0
    %3381 = vmatpush.msra.mxu0 0.0
    %3382 = vmatpush.msra.mxu0 0.0
    %3383 = vmatpush.msra.mxu0 0.0
    %3384 = vmatpush.msra.mxu0 0.0
    %3385 = vmatpush.msra.mxu0 0.0
    %3386 = vmatpush.msra.mxu0 0.0
    %3387 = vmatpush.msra.mxu0 0.0
    %3388 = vmatpush.msra.mxu0 0.0
    %3389 = vmatpush.msra.mxu0 0.0
    %3390 = vmatpush.msra.mxu0 %v3288
    %3391 = vmatmul.f32.gmra.mxu0 %v3301
    %v3392 = vpop.f32.mrf.mxu0
    %v3393 = vadd.f32 0.0, %v3392
    %3394 = vmatmul.f32.gmra.mxu0 %v3304
    %v3395 = vpop.f32.mrf.mxu0
    %v3396 = vadd.f32 0.0, %v3395
    %3397 = vdwg.mxu0
    %3398 = vmatpush.msra.mxu0 0.0
    %3399 = vmatpush.msra.mxu0 0.0
    %3400 = vmatpush.msra.mxu0 0.0
    %3401 = vmatpush.msra.mxu0 0.0
    %3402 = vmatpush.msra.mxu0 0.0
    %3403 = vmatpush.msra.mxu0 0.0
    %3404 = vmatpush.msra.mxu0 0.0
    %3405 = vmatpush.msra.mxu0 0.0
    %3406 = vmatpush.msra.mxu0 0.0
    %3407 = vmatpush.msra.mxu0 0.0
    %3408 = vmatpush.msra.mxu0 0.0
    %3409 = vmatpush.msra.mxu0 0.0
    %3410 = vmatpush.msra.mxu0 0.0
    %3411 = vmatpush.msra.mxu0 0.0
    %3412 = vmatpush.msra.mxu0 0.0
    %3413 = vmatpush.msra.mxu0 %v3289
    %3414 = vmatmul.f32.gmra.mxu0 %v3301
    %v3415 = vpop.f32.mrf.mxu0
    %v3416 = vadd.f32 0.0, %v3415
    %3417 = vmatmul.f32.gmra.mxu0 %v3304
    %v3418 = vpop.f32.mrf.mxu0
    %v3419 = vadd.f32 0.0, %v3418
    %3420 = vdwg.mxu0
    %3421 = vmatpush.msra.mxu0 0.0
    %3422 = vmatpush.msra.mxu0 0.0
    %3423 = vmatpush.msra.mxu0 0.0
    %3424 = vmatpush.msra.mxu0 0.0
    %3425 = vmatpush.msra.mxu0 0.0
    %3426 = vmatpush.msra.mxu0 0.0
    %3427 = vmatpush.msra.mxu0 0.0
    %3428 = vmatpush.msra.mxu0 0.0
    %3429 = vmatpush.msra.mxu0 0.0
    %3430 = vmatpush.msra.mxu0 0.0
    %3431 = vmatpush.msra.mxu0 0.0
    %3432 = vmatpush.msra.mxu0 0.0
    %3433 = vmatpush.msra.mxu0 0.0
    %3434 = vmatpush.msra.mxu0 0.0
    %3435 = vmatpush.msra.mxu0 0.0
    %3436 = vmatpush.msra.mxu0 %v3290
    %3437 = vmatmul.f32.gmra.mxu0 %v3301
    %v3438 = vpop.f32.mrf.mxu0
    %v3439 = vadd.f32 0.0, %v3438
    %3440 = vmatmul.f32.gmra.mxu0 %v3304
    %v3441 = vpop.f32.mrf.mxu0
    %v3442 = vadd.f32 0.0, %v3441
    %3443 = vdwg.mxu0
    %3444 = vmatpush.msra.mxu0 0.0
    %3445 = vmatpush.msra.mxu0 0.0
    %3446 = vmatpush.msra.mxu0 0.0
    %3447 = vmatpush.msra.mxu0 0.0
    %3448 = vmatpush.msra.mxu0 0.0
    %3449 = vmatpush.msra.mxu0 0.0
    %3450 = vmatpush.msra.mxu0 0.0
    %3451 = vmatpush.msra.mxu0 0.0
    %3452 = vmatpush.msra.mxu0 0.0
    %3453 = vmatpush.msra.mxu0 0.0
    %3454 = vmatpush.msra.mxu0 0.0
    %3455 = vmatpush.msra.mxu0 0.0
    %3456 = vmatpush.msra.mxu0 0.0
    %3457 = vmatpush.msra.mxu0 0.0
    %3458 = vmatpush.msra.mxu0 0.0
    %3459 = vmatpush.msra.mxu0 %v3291
    %3460 = vmatmul.f32.gmra.mxu0 %v3301
    %v3461 = vpop.f32.mrf.mxu0
    %v3462 = vadd.f32 0.0, %v3461
    %3463 = vmatmul.f32.gmra.mxu0 %v3304
    %v3464 = vpop.f32.mrf.mxu0
    %v3465 = vadd.f32 0.0, %v3464
    %3466 = vdwg.mxu0
    %3467 = vmatpush.msra.mxu0 0.0
    %3468 = vmatpush.msra.mxu0 0.0
    %3469 = vmatpush.msra.mxu0 0.0
    %3470 = vmatpush.msra.mxu0 0.0
    %3471 = vmatpush.msra.mxu0 0.0
    %3472 = vmatpush.msra.mxu0 0.0
    %3473 = vmatpush.msra.mxu0 0.0
    %3474 = vmatpush.msra.mxu0 0.0
    %3475 = vmatpush.msra.mxu0 0.0
    %3476 = vmatpush.msra.mxu0 0.0
    %3477 = vmatpush.msra.mxu0 0.0
    %3478 = vmatpush.msra.mxu0 0.0
    %3479 = vmatpush.msra.mxu0 0.0
    %3480 = vmatpush.msra.mxu0 0.0
    %3481 = vmatpush.msra.mxu0 0.0
    %3482 = vmatpush.msra.mxu0 %v3284
    %3483 = vmatmul.f32.gmra.mxu0 %v3301
    %v3484 = vpop.f32.mrf.mxu0
    %v3485 = vadd.f32 0.0, %v3484
    %3486 = vmatmul.f32.gmra.mxu0 %v3304
    %v3487 = vpop.f32.mrf.mxu0
    %v3488 = vadd.f32 0.0, %v3487
    %3489 = vdwg.mxu0
    %v3491 = vsel %vm407, %v3257, 0
    %v3494 = vsel %vm407, %v3258, 0
    %3496 = vmatpush.msra.mxu0 0.0
    %3497 = vmatpush.msra.mxu0 0.0
    %3498 = vmatpush.msra.mxu0 0.0
    %3499 = vmatpush.msra.mxu0 0.0
    %3500 = vmatpush.msra.mxu0 0.0
    %3501 = vmatpush.msra.mxu0 0.0
    %3502 = vmatpush.msra.mxu0 0.0
    %3503 = vmatpush.msra.mxu0 0.0
    %3504 = vmatpush.msra.mxu0 0.0
    %3505 = vmatpush.msra.mxu0 0.0
    %3506 = vmatpush.msra.mxu0 0.0
    %3507 = vmatpush.msra.mxu0 0.0
    %3508 = vmatpush.msra.mxu0 0.0
    %3509 = vmatpush.msra.mxu0 0.0
    %3510 = vmatpush.msra.mxu0 0.0
    %3511 = vmatpush.msra.mxu0 %v3249
    %3512 = vmatmul.f32.gmra.mxu0 %v3491
    %v3513 = vpop.f32.mrf.mxu0
    %v3514 = vadd.f32 %v3324, %v3513
    %3515 = vmatmul.f32.gmra.mxu0 %v3494
    %v3516 = vpop.f32.mrf.mxu0
    %v3517 = vadd.f32 %v3327, %v3516
    %3518 = vdwg.mxu0
    %3519 = vmatpush.msra.mxu0 0.0
    %3520 = vmatpush.msra.mxu0 0.0
    %3521 = vmatpush.msra.mxu0 0.0
    %3522 = vmatpush.msra.mxu0 0.0
    %3523 = vmatpush.msra.mxu0 0.0
    %3524 = vmatpush.msra.mxu0 0.0
    %3525 = vmatpush.msra.mxu0 0.0
    %3526 = vmatpush.msra.mxu0 0.0
    %3527 = vmatpush.msra.mxu0 0.0
    %3528 = vmatpush.msra.mxu0 0.0
    %3529 = vmatpush.msra.mxu0 0.0
    %3530 = vmatpush.msra.mxu0 0.0
    %3531 = vmatpush.msra.mxu0 0.0
    %3532 = vmatpush.msra.mxu0 0.0
    %3533 = vmatpush.msra.mxu0 0.0
    %3534 = vmatpush.msra.mxu0 %v3250
    %3535 = vmatmul.f32.gmra.mxu0 %v3491
    %v3536 = vpop.f32.mrf.mxu0
    %v3537 = vadd.f32 %v3347, %v3536
    %3538 = vmatmul.f32.gmra.mxu0 %v3494
    %v3539 = vpop.f32.mrf.mxu0
    %v3540 = vadd.f32 %v3350, %v3539
    %3541 = vdwg.mxu0
    %3542 = vmatpush.msra.mxu0 0.0
    %3543 = vmatpush.msra.mxu0 0.0
    %3544 = vmatpush.msra.mxu0 0.0
    %3545 = vmatpush.msra.mxu0 0.0
    %3546 = vmatpush.msra.mxu0 0.0
    %3547 = vmatpush.msra.mxu0 0.0
    %3548 = vmatpush.msra.mxu0 0.0
    %3549 = vmatpush.msra.mxu0 0.0
    %3550 = vmatpush.msra.mxu0 0.0
    %3551 = vmatpush.msra.mxu0 0.0
    %3552 = vmatpush.msra.mxu0 0.0
    %3553 = vmatpush.msra.mxu0 0.0
    %3554 = vmatpush.msra.mxu0 0.0
    %3555 = vmatpush.msra.mxu0 0.0
    %3556 = vmatpush.msra.mxu0 0.0
    %3557 = vmatpush.msra.mxu0 %v3251
    %3558 = vmatmul.f32.gmra.mxu0 %v3491
    %v3559 = vpop.f32.mrf.mxu0
    %v3560 = vadd.f32 %v3370, %v3559
    %3561 = vmatmul.f32.gmra.mxu0 %v3494
    %v3562 = vpop.f32.mrf.mxu0
    %v3563 = vadd.f32 %v3373, %v3562
    %3564 = vdwg.mxu0
    %3565 = vmatpush.msra.mxu0 0.0
    %3566 = vmatpush.msra.mxu0 0.0
    %3567 = vmatpush.msra.mxu0 0.0
    %3568 = vmatpush.msra.mxu0 0.0
    %3569 = vmatpush.msra.mxu0 0.0
    %3570 = vmatpush.msra.mxu0 0.0
    %3571 = vmatpush.msra.mxu0 0.0
    %3572 = vmatpush.msra.mxu0 0.0
    %3573 = vmatpush.msra.mxu0 0.0
    %3574 = vmatpush.msra.mxu0 0.0
    %3575 = vmatpush.msra.mxu0 0.0
    %3576 = vmatpush.msra.mxu0 0.0
    %3577 = vmatpush.msra.mxu0 0.0
    %3578 = vmatpush.msra.mxu0 0.0
    %3579 = vmatpush.msra.mxu0 0.0
    %3580 = vmatpush.msra.mxu0 %v3252
    %3581 = vmatmul.f32.gmra.mxu0 %v3491
    %v3582 = vpop.f32.mrf.mxu0
    %v3583 = vadd.f32 %v3393, %v3582
    %3584 = vmatmul.f32.gmra.mxu0 %v3494
    %v3585 = vpop.f32.mrf.mxu0
    %v3586 = vadd.f32 %v3396, %v3585
    %3587 = vdwg.mxu0
    %3588 = vmatpush.msra.mxu0 0.0
    %3589 = vmatpush.msra.mxu0 0.0
    %3590 = vmatpush.msra.mxu0 0.0
    %3591 = vmatpush.msra.mxu0 0.0
    %3592 = vmatpush.msra.mxu0 0.0
    %3593 = vmatpush.msra.mxu0 0.0
    %3594 = vmatpush.msra.mxu0 0.0
    %3595 = vmatpush.msra.mxu0 0.0
    %3596 = vmatpush.msra.mxu0 0.0
    %3597 = vmatpush.msra.mxu0 0.0
    %3598 = vmatpush.msra.mxu0 0.0
    %3599 = vmatpush.msra.mxu0 0.0
    %3600 = vmatpush.msra.mxu0 0.0
    %3601 = vmatpush.msra.mxu0 0.0
    %3602 = vmatpush.msra.mxu0 0.0
    %3603 = vmatpush.msra.mxu0 %v3253
    %3604 = vmatmul.f32.gmra.mxu0 %v3491
    %v3605 = vpop.f32.mrf.mxu0
    %v3606 = vadd.f32 %v3416, %v3605
    %3607 = vmatmul.f32.gmra.mxu0 %v3494
    %v3608 = vpop.f32.mrf.mxu0
    %v3609 = vadd.f32 %v3419, %v3608
    %3610 = vdwg.mxu0
    %3611 = vmatpush.msra.mxu0 0.0
    %3612 = vmatpush.msra.mxu0 0.0
    %3613 = vmatpush.msra.mxu0 0.0
    %3614 = vmatpush.msra.mxu0 0.0
    %3615 = vmatpush.msra.mxu0 0.0
    %3616 = vmatpush.msra.mxu0 0.0
    %3617 = vmatpush.msra.mxu0 0.0
    %3618 = vmatpush.msra.mxu0 0.0
    %3619 = vmatpush.msra.mxu0 0.0
    %3620 = vmatpush.msra.mxu0 0.0
    %3621 = vmatpush.msra.mxu0 0.0
    %3622 = vmatpush.msra.mxu0 0.0
    %3623 = vmatpush.msra.mxu0 0.0
    %3624 = vmatpush.msra.mxu0 0.0
    %3625 = vmatpush.msra.mxu0 0.0
    %3626 = vmatpush.msra.mxu0 %v3254
    %3627 = vmatmul.f32.gmra.mxu0 %v3491
    %v3628 = vpop.f32.mrf.mxu0
    %v3629 = vadd.f32 %v3439, %v3628
    %3630 = vmatmul.f32.gmra.mxu0 %v3494
    %v3631 = vpop.f32.mrf.mxu0
    %v3632 = vadd.f32 %v3442, %v3631
    %3633 = vdwg.mxu0
    %3634 = vmatpush.msra.mxu0 0.0
    %3635 = vmatpush.msra.mxu0 0.0
    %3636 = vmatpush.msra.mxu0 0.0
    %3637 = vmatpush.msra.mxu0 0.0
    %3638 = vmatpush.msra.mxu0 0.0
    %3639 = vmatpush.msra.mxu0 0.0
    %3640 = vmatpush.msra.mxu0 0.0
    %3641 = vmatpush.msra.mxu0 0.0
    %3642 = vmatpush.msra.mxu0 0.0
    %3643 = vmatpush.msra.mxu0 0.0
    %3644 = vmatpush.msra.mxu0 0.0
    %3645 = vmatpush.msra.mxu0 0.0
    %3646 = vmatpush.msra.mxu0 0.0
    %3647 = vmatpush.msra.mxu0 0.0
    %3648 = vmatpush.msra.mxu0 0.0
    %3649 = vmatpush.msra.mxu0 %v3255
    %3650 = vmatmul.f32.gmra.mxu0 %v3491
    %v3651 = vpop.f32.mrf.mxu0
    %v3652 = vadd.f32 %v3462, %v3651
    %3653 = vmatmul.f32.gmra.mxu0 %v3494
    %v3654 = vpop.f32.mrf.mxu0
    %v3655 = vadd.f32 %v3465, %v3654
    %3656 = vdwg.mxu0
    %3657 = vmatpush.msra.mxu0 0.0
    %3658 = vmatpush.msra.mxu0 0.0
    %3659 = vmatpush.msra.mxu0 0.0
    %3660 = vmatpush.msra.mxu0 0.0
    %3661 = vmatpush.msra.mxu0 0.0
    %3662 = vmatpush.msra.mxu0 0.0
    %3663 = vmatpush.msra.mxu0 0.0
    %3664 = vmatpush.msra.mxu0 0.0
    %3665 = vmatpush.msra.mxu0 0.0
    %3666 = vmatpush.msra.mxu0 0.0
    %3667 = vmatpush.msra.mxu0 0.0
    %3668 = vmatpush.msra.mxu0 0.0
    %3669 = vmatpush.msra.mxu0 0.0
    %3670 = vmatpush.msra.mxu0 0.0
    %3671 = vmatpush.msra.mxu0 0.0
    %3672 = vmatpush.msra.mxu0 %v3256
    %3673 = vmatmul.f32.gmra.mxu0 %v3491
    %v3674 = vpop.f32.mrf.mxu0
    %v3675 = vadd.f32 %v3485, %v3674
    %3676 = vmatmul.f32.gmra.mxu0 %v3494
    %v3677 = vpop.f32.mrf.mxu0
    %v3678 = vadd.f32 %v3488, %v3677
    %3679 = vdwg.mxu0
    %v3680 = vld [vmem:[%s788] sm:$0xff]
    %v3681 = vld [vmem:[%s788 + $0x8] sm:$0xff]
    %3682 = vrot.lane.b32.xlu0 %v3249, 126
    %v3683 = vpop.permute.xlu0 %3682
    %3684 = vrot.lane.b32.xlu0 %v3250, 126
    %v3685 = vpop.permute.xlu0 %3684
    %3686 = vrot.lane.b32.xlu0 %v3251, 126
    %v3687 = vpop.permute.xlu0 %3686
    %3688 = vrot.lane.b32.xlu0 %v3252, 126
    %v3689 = vpop.permute.xlu0 %3688
    %3690 = vrot.lane.b32.xlu0 %v3253, 126
    %v3691 = vpop.permute.xlu0 %3690
    %3692 = vrot.lane.b32.xlu0 %v3254, 126
    %v3693 = vpop.permute.xlu0 %3692
    %3694 = vrot.lane.b32.xlu0 %v3255, 126
    %v3695 = vpop.permute.xlu0 %3694
    %3696 = vrot.lane.b32.xlu0 %v3256, 126
    %v3697 = vpop.permute.xlu0 %3696
    %v3698 = vsel %vm179, %v3683, %v3685
    %v3699 = vsel %vm179, %v3685, %v3687
    %v3700 = vsel %vm179, %v3687, %v3689
    %v3701 = vsel %vm179, %v3689, %v3691
    %v3702 = vsel %vm179, %v3691, %v3693
    %v3703 = vsel %vm179, %v3693, %v3695
    %v3704 = vsel %vm179, %v3695, %v3697
    %v3714 = vsel %vm407, %v3680, 0
    %v3717 = vsel %vm407, %v3681, 0
    %3719 = vmatpush.msra.mxu0 0.0
    %3720 = vmatpush.msra.mxu0 0.0
    %3721 = vmatpush.msra.mxu0 0.0
    %3722 = vmatpush.msra.mxu0 0.0
    %3723 = vmatpush.msra.mxu0 0.0
    %3724 = vmatpush.msra.mxu0 0.0
    %3725 = vmatpush.msra.mxu0 0.0
    %3726 = vmatpush.msra.mxu0 0.0
    %3727 = vmatpush.msra.mxu0 0.0
    %3728 = vmatpush.msra.mxu0 0.0
    %3729 = vmatpush.msra.mxu0 0.0
    %3730 = vmatpush.msra.mxu0 0.0
    %3731 = vmatpush.msra.mxu0 0.0
    %3732 = vmatpush.msra.mxu0 0.0
    %3733 = vmatpush.msra.mxu0 0.0
    %3734 = vmatpush.msra.mxu0 %v3698
    %3735 = vmatmul.f32.gmra.mxu0 %v3714
    %v3736 = vpop.f32.mrf.mxu0
    %v3737 = vadd.f32 0.0, %v3736
    %3738 = vmatmul.f32.gmra.mxu0 %v3717
    %v3739 = vpop.f32.mrf.mxu0
    %v3740 = vadd.f32 0.0, %v3739
    %3741 = vdwg.mxu0
    %3742 = vmatpush.msra.mxu0 0.0
    %3743 = vmatpush.msra.mxu0 0.0
    %3744 = vmatpush.msra.mxu0 0.0
    %3745 = vmatpush.msra.mxu0 0.0
    %3746 = vmatpush.msra.mxu0 0.0
    %3747 = vmatpush.msra.mxu0 0.0
    %3748 = vmatpush.msra.mxu0 0.0
    %3749 = vmatpush.msra.mxu0 0.0
    %3750 = vmatpush.msra.mxu0 0.0
    %3751 = vmatpush.msra.mxu0 0.0
    %3752 = vmatpush.msra.mxu0 0.0
    %3753 = vmatpush.msra.mxu0 0.0
    %3754 = vmatpush.msra.mxu0 0.0
    %3755 = vmatpush.msra.mxu0 0.0
    %3756 = vmatpush.msra.mxu0 0.0
    %3757 = vmatpush.msra.mxu0 %v3699
    %3758 = vmatmul.f32.gmra.mxu0 %v3714
    %v3759 = vpop.f32.mrf.mxu0
    %v3760 = vadd.f32 0.0, %v3759
    %3761 = vmatmul.f32.gmra.mxu0 %v3717
    %v3762 = vpop.f32.mrf.mxu0
    %v3763 = vadd.f32 0.0, %v3762
    %3764 = vdwg.mxu0
    %3765 = vmatpush.msra.mxu0 0.0
    %3766 = vmatpush.msra.mxu0 0.0
    %3767 = vmatpush.msra.mxu0 0.0
    %3768 = vmatpush.msra.mxu0 0.0
    %3769 = vmatpush.msra.mxu0 0.0
    %3770 = vmatpush.msra.mxu0 0.0
    %3771 = vmatpush.msra.mxu0 0.0
    %3772 = vmatpush.msra.mxu0 0.0
    %3773 = vmatpush.msra.mxu0 0.0
    %3774 = vmatpush.msra.mxu0 0.0
    %3775 = vmatpush.msra.mxu0 0.0
    %3776 = vmatpush.msra.mxu0 0.0
    %3777 = vmatpush.msra.mxu0 0.0
    %3778 = vmatpush.msra.mxu0 0.0
    %3779 = vmatpush.msra.mxu0 0.0
    %3780 = vmatpush.msra.mxu0 %v3700
    %3781 = vmatmul.f32.gmra.mxu0 %v3714
    %v3782 = vpop.f32.mrf.mxu0
    %v3783 = vadd.f32 0.0, %v3782
    %3784 = vmatmul.f32.gmra.mxu0 %v3717
    %v3785 = vpop.f32.mrf.mxu0
    %v3786 = vadd.f32 0.0, %v3785
    %3787 = vdwg.mxu0
    %3788 = vmatpush.msra.mxu0 0.0
    %3789 = vmatpush.msra.mxu0 0.0
    %3790 = vmatpush.msra.mxu0 0.0
    %3791 = vmatpush.msra.mxu0 0.0
    %3792 = vmatpush.msra.mxu0 0.0
    %3793 = vmatpush.msra.mxu0 0.0
    %3794 = vmatpush.msra.mxu0 0.0
    %3795 = vmatpush.msra.mxu0 0.0
    %3796 = vmatpush.msra.mxu0 0.0
    %3797 = vmatpush.msra.mxu0 0.0
    %3798 = vmatpush.msra.mxu0 0.0
    %3799 = vmatpush.msra.mxu0 0.0
    %3800 = vmatpush.msra.mxu0 0.0
    %3801 = vmatpush.msra.mxu0 0.0
    %3802 = vmatpush.msra.mxu0 0.0
    %3803 = vmatpush.msra.mxu0 %v3701
    %3804 = vmatmul.f32.gmra.mxu0 %v3714
    %v3805 = vpop.f32.mrf.mxu0
    %v3806 = vadd.f32 0.0, %v3805
    %3807 = vmatmul.f32.gmra.mxu0 %v3717
    %v3808 = vpop.f32.mrf.mxu0
    %v3809 = vadd.f32 0.0, %v3808
    %3810 = vdwg.mxu0
    %3811 = vmatpush.msra.mxu0 0.0
    %3812 = vmatpush.msra.mxu0 0.0
    %3813 = vmatpush.msra.mxu0 0.0
    %3814 = vmatpush.msra.mxu0 0.0
    %3815 = vmatpush.msra.mxu0 0.0
    %3816 = vmatpush.msra.mxu0 0.0
    %3817 = vmatpush.msra.mxu0 0.0
    %3818 = vmatpush.msra.mxu0 0.0
    %3819 = vmatpush.msra.mxu0 0.0
    %3820 = vmatpush.msra.mxu0 0.0
    %3821 = vmatpush.msra.mxu0 0.0
    %3822 = vmatpush.msra.mxu0 0.0
    %3823 = vmatpush.msra.mxu0 0.0
    %3824 = vmatpush.msra.mxu0 0.0
    %3825 = vmatpush.msra.mxu0 0.0
    %3826 = vmatpush.msra.mxu0 %v3702
    %3827 = vmatmul.f32.gmra.mxu0 %v3714
    %v3828 = vpop.f32.mrf.mxu0
    %v3829 = vadd.f32 0.0, %v3828
    %3830 = vmatmul.f32.gmra.mxu0 %v3717
    %v3831 = vpop.f32.mrf.mxu0
    %v3832 = vadd.f32 0.0, %v3831
    %3833 = vdwg.mxu0
    %3834 = vmatpush.msra.mxu0 0.0
    %3835 = vmatpush.msra.mxu0 0.0
    %3836 = vmatpush.msra.mxu0 0.0
    %3837 = vmatpush.msra.mxu0 0.0
    %3838 = vmatpush.msra.mxu0 0.0
    %3839 = vmatpush.msra.mxu0 0.0
    %3840 = vmatpush.msra.mxu0 0.0
    %3841 = vmatpush.msra.mxu0 0.0
    %3842 = vmatpush.msra.mxu0 0.0
    %3843 = vmatpush.msra.mxu0 0.0
    %3844 = vmatpush.msra.mxu0 0.0
    %3845 = vmatpush.msra.mxu0 0.0
    %3846 = vmatpush.msra.mxu0 0.0
    %3847 = vmatpush.msra.mxu0 0.0
    %3848 = vmatpush.msra.mxu0 0.0
    %3849 = vmatpush.msra.mxu0 %v3703
    %3850 = vmatmul.f32.gmra.mxu0 %v3714
    %v3851 = vpop.f32.mrf.mxu0
    %v3852 = vadd.f32 0.0, %v3851
    %3853 = vmatmul.f32.gmra.mxu0 %v3717
    %v3854 = vpop.f32.mrf.mxu0
    %v3855 = vadd.f32 0.0, %v3854
    %3856 = vdwg.mxu0
    %3857 = vmatpush.msra.mxu0 0.0
    %3858 = vmatpush.msra.mxu0 0.0
    %3859 = vmatpush.msra.mxu0 0.0
    %3860 = vmatpush.msra.mxu0 0.0
    %3861 = vmatpush.msra.mxu0 0.0
    %3862 = vmatpush.msra.mxu0 0.0
    %3863 = vmatpush.msra.mxu0 0.0
    %3864 = vmatpush.msra.mxu0 0.0
    %3865 = vmatpush.msra.mxu0 0.0
    %3866 = vmatpush.msra.mxu0 0.0
    %3867 = vmatpush.msra.mxu0 0.0
    %3868 = vmatpush.msra.mxu0 0.0
    %3869 = vmatpush.msra.mxu0 0.0
    %3870 = vmatpush.msra.mxu0 0.0
    %3871 = vmatpush.msra.mxu0 0.0
    %3872 = vmatpush.msra.mxu0 %v3704
    %3873 = vmatmul.f32.gmra.mxu0 %v3714
    %v3874 = vpop.f32.mrf.mxu0
    %v3875 = vadd.f32 0.0, %v3874
    %3876 = vmatmul.f32.gmra.mxu0 %v3717
    %v3877 = vpop.f32.mrf.mxu0
    %v3878 = vadd.f32 0.0, %v3877
    %3879 = vdwg.mxu0
    %3880 = vmatpush.msra.mxu0 0.0
    %3881 = vmatpush.msra.mxu0 0.0
    %3882 = vmatpush.msra.mxu0 0.0
    %3883 = vmatpush.msra.mxu0 0.0
    %3884 = vmatpush.msra.mxu0 0.0
    %3885 = vmatpush.msra.mxu0 0.0
    %3886 = vmatpush.msra.mxu0 0.0
    %3887 = vmatpush.msra.mxu0 0.0
    %3888 = vmatpush.msra.mxu0 0.0
    %3889 = vmatpush.msra.mxu0 0.0
    %3890 = vmatpush.msra.mxu0 0.0
    %3891 = vmatpush.msra.mxu0 0.0
    %3892 = vmatpush.msra.mxu0 0.0
    %3893 = vmatpush.msra.mxu0 0.0
    %3894 = vmatpush.msra.mxu0 0.0
    %3895 = vmatpush.msra.mxu0 %v3697
    %3896 = vmatmul.f32.gmra.mxu0 %v3714
    %v3897 = vpop.f32.mrf.mxu0
    %v3898 = vadd.f32 0.0, %v3897
    %3899 = vmatmul.f32.gmra.mxu0 %v3717
    %v3900 = vpop.f32.mrf.mxu0
    %v3901 = vadd.f32 0.0, %v3900
    %3902 = vdwg.mxu0
    %v3903 = vadd.f32 %v3514, %v3737
    %v3904 = vadd.f32 %v3537, %v3760
    %v3905 = vadd.f32 %v3560, %v3783
    %v3906 = vadd.f32 %v3583, %v3806
    %v3907 = vadd.f32 %v3606, %v3829
    %v3908 = vadd.f32 %v3629, %v3852
    %v3909 = vadd.f32 %v3652, %v3875
    %v3910 = vadd.f32 %v3675, %v3898
    %v3911 = vadd.f32 %v3517, %v3740
    %v3912 = vadd.f32 %v3540, %v3763
    %v3913 = vadd.f32 %v3563, %v3786
    %v3914 = vadd.f32 %v3586, %v3809
    %v3915 = vadd.f32 %v3609, %v3832
    %v3916 = vadd.f32 %v3632, %v3855
    %v3917 = vadd.f32 %v3655, %v3878
    %v3918 = vadd.f32 %v3678, %v3901
    %v3919 = vld [vmem:[%s6] sm:$0xff]
    %v3920 = vld [vmem:[%s6 + $0x8] sm:$0xff]
    %3922 = vset.pattern.permute.xlu0 0
    %3923 = vperm.xlu0 %3922, %v3919
    %v3924 = vpop.permute.xlu0 %3923
    %3927 = vset.pattern.permute.xlu0 0
    %3928 = vperm.xlu0 %3927, %v3920
    %v3929 = vpop.permute.xlu0 %3928
    %v3931 = vadd.f32 %v3903, %v3924
    %v3932 = vadd.f32 %v3904, %v3924
    %v3933 = vadd.f32 %v3905, %v3924
    %v3934 = vadd.f32 %v3906, %v3924
    %v3935 = vadd.f32 %v3907, %v3924
    %v3936 = vadd.f32 %v3908, %v3924
    %v3937 = vadd.f32 %v3909, %v3924
    %v3938 = vadd.f32 %v3910, %v3924
    %v3939 = vadd.f32 %v3911, %v3929
    %v3940 = vadd.f32 %v3912, %v3929
    %v3941 = vadd.f32 %v3913, %v3929
    %v3942 = vadd.f32 %v3914, %v3929
    %v3943 = vadd.f32 %v3915, %v3929
    %v3944 = vadd.f32 %v3916, %v3929
    %v3945 = vadd.f32 %v3917, %v3929
    %v3946 = vadd.f32 %v3918, %v3929
    %v3947 = vld [vmem:[%s7] sm:$0xff]
    %v3948 = vld [vmem:[%s7 + $0x8] sm:$0xff]
    %3950 = vset.pattern.permute.xlu0 0
    %3951 = vperm.xlu0 %3950, %v3947
    %v3952 = vpop.permute.xlu0 %3951
    %3955 = vset.pattern.permute.xlu0 0
    %3956 = vperm.xlu0 %3955, %v3948
    %v3957 = vpop.permute.xlu0 %3956
    %v3959 = vmul.f32 %v3931, %v3952
    %v3960 = vmul.f32 %v3932, %v3952
    %v3961 = vmul.f32 %v3933, %v3952
    %v3962 = vmul.f32 %v3934, %v3952
    %v3963 = vmul.f32 %v3935, %v3952
    %v3964 = vmul.f32 %v3936, %v3952
    %v3965 = vmul.f32 %v3937, %v3952
    %v3966 = vmul.f32 %v3938, %v3952
    %v3967 = vmul.f32 %v3939, %v3957
    %v3968 = vmul.f32 %v3940, %v3957
    %v3969 = vmul.f32 %v3941, %v3957
    %v3970 = vmul.f32 %v3942, %v3957
    %v3971 = vmul.f32 %v3943, %v3957
    %v3972 = vmul.f32 %v3944, %v3957
    %v3973 = vmul.f32 %v3945, %v3957
    %v3974 = vmul.f32 %v3946, %v3957
    %v3975 = vld [vmem:[%s8] sm:$0xff]
    %v3976 = vld [vmem:[%s8 + $0x8] sm:$0xff]
    %3978 = vset.pattern.permute.xlu0 0
    %3979 = vperm.xlu0 %3978, %v3975
    %v3980 = vpop.permute.xlu0 %3979
    %3983 = vset.pattern.permute.xlu0 0
    %3984 = vperm.xlu0 %3983, %v3976
    %v3985 = vpop.permute.xlu0 %3984
    %v3987 = vadd.f32 %v3959, %v3980
    %v3988 = vadd.f32 %v3960, %v3980
    %v3989 = vadd.f32 %v3961, %v3980
    %v3990 = vadd.f32 %v3962, %v3980
    %v3991 = vadd.f32 %v3963, %v3980
    %v3992 = vadd.f32 %v3964, %v3980
    %v3993 = vadd.f32 %v3965, %v3980
    %v3994 = vadd.f32 %v3966, %v3980
    %v3995 = vadd.f32 %v3967, %v3985
    %v3996 = vadd.f32 %v3968, %v3985
    %v3997 = vadd.f32 %v3969, %v3985
    %v3998 = vadd.f32 %v3970, %v3985
    %v3999 = vadd.f32 %v3971, %v3985
    %v4000 = vadd.f32 %v3972, %v3985
    %v4001 = vadd.f32 %v3973, %v3985
    %v4002 = vadd.f32 %v3974, %v3985
    %vm4003 = vcmp.ge.f32.partialorder %v3987, 0.0
    %vm4004 = vcmp.ge.f32.partialorder %v3988, 0.0
    %vm4005 = vcmp.ge.f32.partialorder %v3989, 0.0
    %vm4006 = vcmp.ge.f32.partialorder %v3990, 0.0
    %vm4007 = vcmp.ge.f32.partialorder %v3991, 0.0
    %vm4008 = vcmp.ge.f32.partialorder %v3992, 0.0
    %vm4009 = vcmp.ge.f32.partialorder %v3993, 0.0
    %vm4010 = vcmp.ge.f32.partialorder %v3994, 0.0
    %vm4011 = vcmp.ge.f32.partialorder %v3995, 0.0
    %vm4012 = vcmp.ge.f32.partialorder %v3996, 0.0
    %vm4013 = vcmp.ge.f32.partialorder %v3997, 0.0
    %vm4014 = vcmp.ge.f32.partialorder %v3998, 0.0
    %vm4015 = vcmp.ge.f32.partialorder %v3999, 0.0
    %vm4016 = vcmp.ge.f32.partialorder %v4000, 0.0
    %vm4017 = vcmp.ge.f32.partialorder %v4001, 0.0
    %vm4018 = vcmp.ge.f32.partialorder %v4002, 0.0
    %v4019 = vmul.f32 %v3987, 0.3
    %v4020 = vmul.f32 %v3988, 0.3
    %v4021 = vmul.f32 %v3989, 0.3
    %v4022 = vmul.f32 %v3990, 0.3
    %v4023 = vmul.f32 %v3991, 0.3
    %v4024 = vmul.f32 %v3992, 0.3
    %v4025 = vmul.f32 %v3993, 0.3
    %v4026 = vmul.f32 %v3994, 0.3
    %v4027 = vmul.f32 %v3995, 0.3
    %v4028 = vmul.f32 %v3996, 0.3
    %v4029 = vmul.f32 %v3997, 0.3
    %v4030 = vmul.f32 %v3998, 0.3
    %v4031 = vmul.f32 %v3999, 0.3
    %v4032 = vmul.f32 %v4000, 0.3
    %v4033 = vmul.f32 %v4001, 0.3
    %v4034 = vmul.f32 %v4002, 0.3
    %v4035 = vsel %vm4003, %v3987, %v4019
    %v4036 = vsel %vm4004, %v3988, %v4020
    %v4037 = vsel %vm4005, %v3989, %v4021
    %v4038 = vsel %vm4006, %v3990, %v4022
    %v4039 = vsel %vm4007, %v3991, %v4023
    %v4040 = vsel %vm4008, %v3992, %v4024
    %v4041 = vsel %vm4009, %v3993, %v4025
    %v4042 = vsel %vm4010, %v3994, %v4026
    %v4043 = vsel %vm4011, %v3995, %v4027
    %v4044 = vsel %vm4012, %v3996, %v4028
    %v4045 = vsel %vm4013, %v3997, %v4029
    %v4046 = vsel %vm4014, %v3998, %v4030
    %v4047 = vsel %vm4015, %v3999, %v4031
    %v4048 = vsel %vm4016, %v4000, %v4032
    %v4049 = vsel %vm4017, %v4001, %v4033
    %v4050 = vsel %vm4018, %v4002, %v4034
    %4067 = vrot.lane.b32.xlu0 %v4035, 127
    %v4068 = vpop.permute.xlu0 %4067
    %4069 = vrot.lane.b32.xlu0 %v4036, 127
    %v4070 = vpop.permute.xlu0 %4069
    %4071 = vrot.lane.b32.xlu0 %v4037, 127
    %v4072 = vpop.permute.xlu0 %4071
    %4073 = vrot.lane.b32.xlu0 %v4038, 127
    %v4074 = vpop.permute.xlu0 %4073
    %4075 = vrot.lane.b32.xlu0 %v4039, 127
    %v4076 = vpop.permute.xlu0 %4075
    %4077 = vrot.lane.b32.xlu0 %v4040, 127
    %v4078 = vpop.permute.xlu0 %4077
    %4079 = vrot.lane.b32.xlu0 %v4041, 127
    %v4080 = vpop.permute.xlu0 %4079
    %4081 = vrot.lane.b32.xlu0 %v4042, 127
    %v4082 = vpop.permute.xlu0 %4081
    %4083 = vrot.lane.b32.xlu0 %v4043, 127
    %v4084 = vpop.permute.xlu0 %4083
    %4085 = vrot.lane.b32.xlu0 %v4044, 127
    %v4086 = vpop.permute.xlu0 %4085
    %4087 = vrot.lane.b32.xlu0 %v4045, 127
    %v4088 = vpop.permute.xlu0 %4087
    %4089 = vrot.lane.b32.xlu0 %v4046, 127
    %v4090 = vpop.permute.xlu0 %4089
    %4091 = vrot.lane.b32.xlu0 %v4047, 127
    %v4092 = vpop.permute.xlu0 %4091
    %4093 = vrot.lane.b32.xlu0 %v4048, 127
    %v4094 = vpop.permute.xlu0 %4093
    %4095 = vrot.lane.b32.xlu0 %v4049, 127
    %v4096 = vpop.permute.xlu0 %4095
    %4097 = vrot.lane.b32.xlu0 %v4050, 127
    %v4098 = vpop.permute.xlu0 %4097
    %v4099 = vsel %vm116, %v4068, %v4070
    %v4100 = vsel %vm116, %v4070, %v4072
    %v4101 = vsel %vm116, %v4072, %v4074
    %v4102 = vsel %vm116, %v4074, %v4076
    %v4103 = vsel %vm116, %v4076, %v4078
    %v4104 = vsel %vm116, %v4078, %v4080
    %v4105 = vsel %vm116, %v4080, %v4082
    %v4106 = vsel %vm116, %v4084, %v4086
    %v4107 = vsel %vm116, %v4086, %v4088
    %v4108 = vsel %vm116, %v4088, %v4090
    %v4109 = vsel %vm116, %v4090, %v4092
    %v4110 = vsel %vm116, %v4092, %v4094
    %v4111 = vsel %vm116, %v4094, %v4096
    %v4112 = vsel %vm116, %v4096, %v4098
    %v4129 = vmax.f32 %v4035, %v4099
    %v4130 = vmax.f32 %v4036, %v4100
    %v4131 = vmax.f32 %v4037, %v4101
    %v4132 = vmax.f32 %v4038, %v4102
    %v4133 = vmax.f32 %v4039, %v4103
    %v4134 = vmax.f32 %v4040, %v4104
    %v4135 = vmax.f32 %v4041, %v4105
    %v4136 = vmax.f32 %v4042, %v4082
    %v4137 = vmax.f32 %v4043, %v4106
    %v4138 = vmax.f32 %v4044, %v4107
    %v4139 = vmax.f32 %v4045, %v4108
    %v4140 = vmax.f32 %v4046, %v4109
    %v4141 = vmax.f32 %v4047, %v4110
    %v4142 = vmax.f32 %v4048, %v4111
    %v4143 = vmax.f32 %v4049, %v4112
    %v4144 = vmax.f32 %v4050, %v4098
    %4161 = vrot.lane.b32.xlu0 %v4129, 126
    %v4162 = vpop.permute.xlu0 %4161
    %4163 = vrot.lane.b32.xlu0 %v4130, 126
    %v4164 = vpop.permute.xlu0 %4163
    %4165 = vrot.lane.b32.xlu0 %v4131, 126
    %v4166 = vpop.permute.xlu0 %4165
    %4167 = vrot.lane.b32.xlu0 %v4132, 126
    %v4168 = vpop.permute.xlu0 %4167
    %4169 = vrot.lane.b32.xlu0 %v4133, 126
    %v4170 = vpop.permute.xlu0 %4169
    %4171 = vrot.lane.b32.xlu0 %v4134, 126
    %v4172 = vpop.permute.xlu0 %4171
    %4173 = vrot.lane.b32.xlu0 %v4135, 126
    %v4174 = vpop.permute.xlu0 %4173
    %4175 = vrot.lane.b32.xlu0 %v4136, 126
    %v4176 = vpop.permute.xlu0 %4175
    %4177 = vrot.lane.b32.xlu0 %v4137, 126
    %v4178 = vpop.permute.xlu0 %4177
    %4179 = vrot.lane.b32.xlu0 %v4138, 126
    %v4180 = vpop.permute.xlu0 %4179
    %4181 = vrot.lane.b32.xlu0 %v4139, 126
    %v4182 = vpop.permute.xlu0 %4181
    %4183 = vrot.lane.b32.xlu0 %v4140, 126
    %v4184 = vpop.permute.xlu0 %4183
    %4185 = vrot.lane.b32.xlu0 %v4141, 126
    %v4186 = vpop.permute.xlu0 %4185
    %4187 = vrot.lane.b32.xlu0 %v4142, 126
    %v4188 = vpop.permute.xlu0 %4187
    %4189 = vrot.lane.b32.xlu0 %v4143, 126
    %v4190 = vpop.permute.xlu0 %4189
    %4191 = vrot.lane.b32.xlu0 %v4144, 126
    %v4192 = vpop.permute.xlu0 %4191
    %v4193 = vsel %vm179, %v4162, %v4164
    %v4194 = vsel %vm179, %v4164, %v4166
    %v4195 = vsel %vm179, %v4166, %v4168
    %v4196 = vsel %vm179, %v4168, %v4170
    %v4197 = vsel %vm179, %v4170, %v4172
    %v4198 = vsel %vm179, %v4172, %v4174
    %v4199 = vsel %vm179, %v4174, %v4176
    %v4200 = vsel %vm179, %v4178, %v4180
    %v4201 = vsel %vm179, %v4180, %v4182
    %v4202 = vsel %vm179, %v4182, %v4184
    %v4203 = vsel %vm179, %v4184, %v4186
    %v4204 = vsel %vm179, %v4186, %v4188
    %v4205 = vsel %vm179, %v4188, %v4190
    %v4206 = vsel %vm179, %v4190, %v4192
    %v4223 = vmax.f32 %v4129, %v4193
    %v4224 = vmax.f32 %v4130, %v4194
    %v4225 = vmax.f32 %v4131, %v4195
    %v4226 = vmax.f32 %v4132, %v4196
    %v4227 = vmax.f32 %v4133, %v4197
    %v4228 = vmax.f32 %v4134, %v4198
    %v4229 = vmax.f32 %v4135, %v4199
    %v4230 = vmax.f32 %v4136, %v4176
    %v4231 = vmax.f32 %v4137, %v4200
    %v4232 = vmax.f32 %v4138, %v4201
    %v4233 = vmax.f32 %v4139, %v4202
    %v4234 = vmax.f32 %v4140, %v4203
    %v4235 = vmax.f32 %v4141, %v4204
    %v4236 = vmax.f32 %v4142, %v4205
    %v4237 = vmax.f32 %v4143, %v4206
    %v4238 = vmax.f32 %v4144, %v4192
    %v4239 = vld [vmem:[%s9] sm:$0xff]
    %v4240 = vld [vmem:[%s9 + $0x8] sm:$0xff]
    %v4241 = vld [vmem:[%s9 + $0x10] sm:$0xff]
    %v4242 = vld [vmem:[%s9 + $0x18] sm:$0xff]
    %v4243 = vld [vmem:[%s1352] sm:$0xff]
    %v4244 = vld [vmem:[%s1352 + $0x8] sm:$0xff]
    %v4245 = vld [vmem:[%s1352 + $0x10] sm:$0xff]
    %v4246 = vld [vmem:[%s1352 + $0x18] sm:$0xff]
    %4263 = vrot.lane.b32.xlu0 %v4223, 127
    %v4264 = vpop.permute.xlu0 %4263
    %4265 = vrot.lane.b32.xlu0 %v4224, 127
    %v4266 = vpop.permute.xlu0 %4265
    %4267 = vrot.lane.b32.xlu0 %v4225, 127
    %v4268 = vpop.permute.xlu0 %4267
    %4269 = vrot.lane.b32.xlu0 %v4226, 127
    %v4270 = vpop.permute.xlu0 %4269
    %4271 = vrot.lane.b32.xlu0 %v4227, 127
    %v4272 = vpop.permute.xlu0 %4271
    %4273 = vrot.lane.b32.xlu0 %v4228, 127
    %v4274 = vpop.permute.xlu0 %4273
    %4275 = vrot.lane.b32.xlu0 %v4229, 127
    %v4276 = vpop.permute.xlu0 %4275
    %4277 = vrot.lane.b32.xlu0 %v4230, 127
    %v4278 = vpop.permute.xlu0 %4277
    %4279 = vrot.lane.b32.xlu0 %v4231, 127
    %v4280 = vpop.permute.xlu0 %4279
    %4281 = vrot.lane.b32.xlu0 %v4232, 127
    %v4282 = vpop.permute.xlu0 %4281
    %4283 = vrot.lane.b32.xlu0 %v4233, 127
    %v4284 = vpop.permute.xlu0 %4283
    %4285 = vrot.lane.b32.xlu0 %v4234, 127
    %v4286 = vpop.permute.xlu0 %4285
    %4287 = vrot.lane.b32.xlu0 %v4235, 127
    %v4288 = vpop.permute.xlu0 %4287
    %4289 = vrot.lane.b32.xlu0 %v4236, 127
    %v4290 = vpop.permute.xlu0 %4289
    %4291 = vrot.lane.b32.xlu0 %v4237, 127
    %v4292 = vpop.permute.xlu0 %4291
    %4293 = vrot.lane.b32.xlu0 %v4238, 127
    %v4294 = vpop.permute.xlu0 %4293
    %v4295 = vsel %vm116, %v4264, %v4266
    %v4296 = vsel %vm116, %v4266, %v4268
    %v4297 = vsel %vm116, %v4268, %v4270
    %v4298 = vsel %vm116, %v4270, %v4272
    %v4299 = vsel %vm116, %v4272, %v4274
    %v4300 = vsel %vm116, %v4274, %v4276
    %v4301 = vsel %vm116, %v4276, %v4278
    %v4302 = vsel %vm116, %v4280, %v4282
    %v4303 = vsel %vm116, %v4282, %v4284
    %v4304 = vsel %vm116, %v4284, %v4286
    %v4305 = vsel %vm116, %v4286, %v4288
    %v4306 = vsel %vm116, %v4288, %v4290
    %v4307 = vsel %vm116, %v4290, %v4292
    %v4308 = vsel %vm116, %v4292, %v4294
    %v4326 = vsel %vm1435, %v4243, 0
    %v4329 = vsel %vm1435, %v4244, 0
    %v4332 = vsel %vm1435, %v4245, 0
    %v4335 = vsel %vm1435, %v4246, 0
    %4337 = vmatpush.msra.mxu0 0.0
    %4338 = vmatpush.msra.mxu0 0.0
    %4339 = vmatpush.msra.mxu0 0.0
    %4340 = vmatpush.msra.mxu0 0.0
    %4341 = vmatpush.msra.mxu0 0.0
    %4342 = vmatpush.msra.mxu0 0.0
    %4343 = vmatpush.msra.mxu0 0.0
    %4344 = vmatpush.msra.mxu0 0.0
    %4345 = vmatpush.msra.mxu0 0.0
    %4346 = vmatpush.msra.mxu0 0.0
    %4347 = vmatpush.msra.mxu0 0.0
    %4348 = vmatpush.msra.mxu0 0.0
    %4349 = vmatpush.msra.mxu0 0.0
    %4350 = vmatpush.msra.mxu0 0.0
    %4351 = vmatpush.msra.mxu0 %v4302
    %4352 = vmatpush.msra.mxu0 %v4295
    %4353 = vmatmul.f32.gmra.mxu0 %v4326
    %v4354 = vpop.f32.mrf.mxu0
    %v4355 = vadd.f32 0.0, %v4354
    %4356 = vmatmul.f32.gmra.mxu0 %v4329
    %v4357 = vpop.f32.mrf.mxu0
    %v4358 = vadd.f32 0.0, %v4357
    %4359 = vmatmul.f32.gmra.mxu0 %v4332
    %v4360 = vpop.f32.mrf.mxu0
    %v4361 = vadd.f32 0.0, %v4360
    %4362 = vmatmul.f32.gmra.mxu0 %v4335
    %v4363 = vpop.f32.mrf.mxu0
    %v4364 = vadd.f32 0.0, %v4363
    %4365 = vdwg.mxu0
    %4366 = vmatpush.msra.mxu0 0.0
    %4367 = vmatpush.msra.mxu0 0.0
    %4368 = vmatpush.msra.mxu0 0.0
    %4369 = vmatpush.msra.mxu0 0.0
    %4370 = vmatpush.msra.mxu0 0.0
    %4371 = vmatpush.msra.mxu0 0.0
    %4372 = vmatpush.msra.mxu0 0.0
    %4373 = vmatpush.msra.mxu0 0.0
    %4374 = vmatpush.msra.mxu0 0.0
    %4375 = vmatpush.msra.mxu0 0.0
    %4376 = vmatpush.msra.mxu0 0.0
    %4377 = vmatpush.msra.mxu0 0.0
    %4378 = vmatpush.msra.mxu0 0.0
    %4379 = vmatpush.msra.mxu0 0.0
    %4380 = vmatpush.msra.mxu0 %v4303
    %4381 = vmatpush.msra.mxu0 %v4296
    %4382 = vmatmul.f32.gmra.mxu0 %v4326
    %v4383 = vpop.f32.mrf.mxu0
    %v4384 = vadd.f32 0.0, %v4383
    %4385 = vmatmul.f32.gmra.mxu0 %v4329
    %v4386 = vpop.f32.mrf.mxu0
    %v4387 = vadd.f32 0.0, %v4386
    %4388 = vmatmul.f32.gmra.mxu0 %v4332
    %v4389 = vpop.f32.mrf.mxu0
    %v4390 = vadd.f32 0.0, %v4389
    %4391 = vmatmul.f32.gmra.mxu0 %v4335
    %v4392 = vpop.f32.mrf.mxu0
    %v4393 = vadd.f32 0.0, %v4392
    %4394 = vdwg.mxu0
    %4395 = vmatpush.msra.mxu0 0.0
    %4396 = vmatpush.msra.mxu0 0.0
    %4397 = vmatpush.msra.mxu0 0.0
    %4398 = vmatpush.msra.mxu0 0.0
    %4399 = vmatpush.msra.mxu0 0.0
    %4400 = vmatpush.msra.mxu0 0.0
    %4401 = vmatpush.msra.mxu0 0.0
    %4402 = vmatpush.msra.mxu0 0.0
    %4403 = vmatpush.msra.mxu0 0.0
    %4404 = vmatpush.msra.mxu0 0.0
    %4405 = vmatpush.msra.mxu0 0.0
    %4406 = vmatpush.msra.mxu0 0.0
    %4407 = vmatpush.msra.mxu0 0.0
    %4408 = vmatpush.msra.mxu0 0.0
    %4409 = vmatpush.msra.mxu0 %v4304
    %4410 = vmatpush.msra.mxu0 %v4297
    %4411 = vmatmul.f32.gmra.mxu0 %v4326
    %v4412 = vpop.f32.mrf.mxu0
    %v4413 = vadd.f32 0.0, %v4412
    %4414 = vmatmul.f32.gmra.mxu0 %v4329
    %v4415 = vpop.f32.mrf.mxu0
    %v4416 = vadd.f32 0.0, %v4415
    %4417 = vmatmul.f32.gmra.mxu0 %v4332
    %v4418 = vpop.f32.mrf.mxu0
    %v4419 = vadd.f32 0.0, %v4418
    %4420 = vmatmul.f32.gmra.mxu0 %v4335
    %v4421 = vpop.f32.mrf.mxu0
    %v4422 = vadd.f32 0.0, %v4421
    %4423 = vdwg.mxu0
    %4424 = vmatpush.msra.mxu0 0.0
    %4425 = vmatpush.msra.mxu0 0.0
    %4426 = vmatpush.msra.mxu0 0.0
    %4427 = vmatpush.msra.mxu0 0.0
    %4428 = vmatpush.msra.mxu0 0.0
    %4429 = vmatpush.msra.mxu0 0.0
    %4430 = vmatpush.msra.mxu0 0.0
    %4431 = vmatpush.msra.mxu0 0.0
    %4432 = vmatpush.msra.mxu0 0.0
    %4433 = vmatpush.msra.mxu0 0.0
    %4434 = vmatpush.msra.mxu0 0.0
    %4435 = vmatpush.msra.mxu0 0.0
    %4436 = vmatpush.msra.mxu0 0.0
    %4437 = vmatpush.msra.mxu0 0.0
    %4438 = vmatpush.msra.mxu0 %v4305
    %4439 = vmatpush.msra.mxu0 %v4298
    %4440 = vmatmul.f32.gmra.mxu0 %v4326
    %v4441 = vpop.f32.mrf.mxu0
    %v4442 = vadd.f32 0.0, %v4441
    %4443 = vmatmul.f32.gmra.mxu0 %v4329
    %v4444 = vpop.f32.mrf.mxu0
    %v4445 = vadd.f32 0.0, %v4444
    %4446 = vmatmul.f32.gmra.mxu0 %v4332
    %v4447 = vpop.f32.mrf.mxu0
    %v4448 = vadd.f32 0.0, %v4447
    %4449 = vmatmul.f32.gmra.mxu0 %v4335
    %v4450 = vpop.f32.mrf.mxu0
    %v4451 = vadd.f32 0.0, %v4450
    %4452 = vdwg.mxu0
    %4453 = vmatpush.msra.mxu0 0.0
    %4454 = vmatpush.msra.mxu0 0.0
    %4455 = vmatpush.msra.mxu0 0.0
    %4456 = vmatpush.msra.mxu0 0.0
    %4457 = vmatpush.msra.mxu0 0.0
    %4458 = vmatpush.msra.mxu0 0.0
    %4459 = vmatpush.msra.mxu0 0.0
    %4460 = vmatpush.msra.mxu0 0.0
    %4461 = vmatpush.msra.mxu0 0.0
    %4462 = vmatpush.msra.mxu0 0.0
    %4463 = vmatpush.msra.mxu0 0.0
    %4464 = vmatpush.msra.mxu0 0.0
    %4465 = vmatpush.msra.mxu0 0.0
    %4466 = vmatpush.msra.mxu0 0.0
    %4467 = vmatpush.msra.mxu0 %v4306
    %4468 = vmatpush.msra.mxu0 %v4299
    %4469 = vmatmul.f32.gmra.mxu0 %v4326
    %v4470 = vpop.f32.mrf.mxu0
    %v4471 = vadd.f32 0.0, %v4470
    %4472 = vmatmul.f32.gmra.mxu0 %v4329
    %v4473 = vpop.f32.mrf.mxu0
    %v4474 = vadd.f32 0.0, %v4473
    %4475 = vmatmul.f32.gmra.mxu0 %v4332
    %v4476 = vpop.f32.mrf.mxu0
    %v4477 = vadd.f32 0.0, %v4476
    %4478 = vmatmul.f32.gmra.mxu0 %v4335
    %v4479 = vpop.f32.mrf.mxu0
    %v4480 = vadd.f32 0.0, %v4479
    %4481 = vdwg.mxu0
    %4482 = vmatpush.msra.mxu0 0.0
    %4483 = vmatpush.msra.mxu0 0.0
    %4484 = vmatpush.msra.mxu0 0.0
    %4485 = vmatpush.msra.mxu0 0.0
    %4486 = vmatpush.msra.mxu0 0.0
    %4487 = vmatpush.msra.mxu0 0.0
    %4488 = vmatpush.msra.mxu0 0.0
    %4489 = vmatpush.msra.mxu0 0.0
    %4490 = vmatpush.msra.mxu0 0.0
    %4491 = vmatpush.msra.mxu0 0.0
    %4492 = vmatpush.msra.mxu0 0.0
    %4493 = vmatpush.msra.mxu0 0.0
    %4494 = vmatpush.msra.mxu0 0.0
    %4495 = vmatpush.msra.mxu0 0.0
    %4496 = vmatpush.msra.mxu0 %v4307
    %4497 = vmatpush.msra.mxu0 %v4300
    %4498 = vmatmul.f32.gmra.mxu0 %v4326
    %v4499 = vpop.f32.mrf.mxu0
    %v4500 = vadd.f32 0.0, %v4499
    %4501 = vmatmul.f32.gmra.mxu0 %v4329
    %v4502 = vpop.f32.mrf.mxu0
    %v4503 = vadd.f32 0.0, %v4502
    %4504 = vmatmul.f32.gmra.mxu0 %v4332
    %v4505 = vpop.f32.mrf.mxu0
    %v4506 = vadd.f32 0.0, %v4505
    %4507 = vmatmul.f32.gmra.mxu0 %v4335
    %v4508 = vpop.f32.mrf.mxu0
    %v4509 = vadd.f32 0.0, %v4508
    %4510 = vdwg.mxu0
    %4511 = vmatpush.msra.mxu0 0.0
    %4512 = vmatpush.msra.mxu0 0.0
    %4513 = vmatpush.msra.mxu0 0.0
    %4514 = vmatpush.msra.mxu0 0.0
    %4515 = vmatpush.msra.mxu0 0.0
    %4516 = vmatpush.msra.mxu0 0.0
    %4517 = vmatpush.msra.mxu0 0.0
    %4518 = vmatpush.msra.mxu0 0.0
    %4519 = vmatpush.msra.mxu0 0.0
    %4520 = vmatpush.msra.mxu0 0.0
    %4521 = vmatpush.msra.mxu0 0.0
    %4522 = vmatpush.msra.mxu0 0.0
    %4523 = vmatpush.msra.mxu0 0.0
    %4524 = vmatpush.msra.mxu0 0.0
    %4525 = vmatpush.msra.mxu0 %v4308
    %4526 = vmatpush.msra.mxu0 %v4301
    %4527 = vmatmul.f32.gmra.mxu0 %v4326
    %v4528 = vpop.f32.mrf.mxu0
    %v4529 = vadd.f32 0.0, %v4528
    %4530 = vmatmul.f32.gmra.mxu0 %v4329
    %v4531 = vpop.f32.mrf.mxu0
    %v4532 = vadd.f32 0.0, %v4531
    %4533 = vmatmul.f32.gmra.mxu0 %v4332
    %v4534 = vpop.f32.mrf.mxu0
    %v4535 = vadd.f32 0.0, %v4534
    %4536 = vmatmul.f32.gmra.mxu0 %v4335
    %v4537 = vpop.f32.mrf.mxu0
    %v4538 = vadd.f32 0.0, %v4537
    %4539 = vdwg.mxu0
    %4540 = vmatpush.msra.mxu0 0.0
    %4541 = vmatpush.msra.mxu0 0.0
    %4542 = vmatpush.msra.mxu0 0.0
    %4543 = vmatpush.msra.mxu0 0.0
    %4544 = vmatpush.msra.mxu0 0.0
    %4545 = vmatpush.msra.mxu0 0.0
    %4546 = vmatpush.msra.mxu0 0.0
    %4547 = vmatpush.msra.mxu0 0.0
    %4548 = vmatpush.msra.mxu0 0.0
    %4549 = vmatpush.msra.mxu0 0.0
    %4550 = vmatpush.msra.mxu0 0.0
    %4551 = vmatpush.msra.mxu0 0.0
    %4552 = vmatpush.msra.mxu0 0.0
    %4553 = vmatpush.msra.mxu0 0.0
    %4554 = vmatpush.msra.mxu0 %v4294
    %4555 = vmatpush.msra.mxu0 %v4278
    %4556 = vmatmul.f32.gmra.mxu0 %v4326
    %v4557 = vpop.f32.mrf.mxu0
    %v4558 = vadd.f32 0.0, %v4557
    %4559 = vmatmul.f32.gmra.mxu0 %v4329
    %v4560 = vpop.f32.mrf.mxu0
    %v4561 = vadd.f32 0.0, %v4560
    %4562 = vmatmul.f32.gmra.mxu0 %v4332
    %v4563 = vpop.f32.mrf.mxu0
    %v4564 = vadd.f32 0.0, %v4563
    %4565 = vmatmul.f32.gmra.mxu0 %v4335
    %v4566 = vpop.f32.mrf.mxu0
    %v4567 = vadd.f32 0.0, %v4566
    %4568 = vdwg.mxu0
    %v4570 = vsel %vm1435, %v4239, 0
    %v4573 = vsel %vm1435, %v4240, 0
    %v4576 = vsel %vm1435, %v4241, 0
    %v4579 = vsel %vm1435, %v4242, 0
    %4581 = vmatpush.msra.mxu0 0.0
    %4582 = vmatpush.msra.mxu0 0.0
    %4583 = vmatpush.msra.mxu0 0.0
    %4584 = vmatpush.msra.mxu0 0.0
    %4585 = vmatpush.msra.mxu0 0.0
    %4586 = vmatpush.msra.mxu0 0.0
    %4587 = vmatpush.msra.mxu0 0.0
    %4588 = vmatpush.msra.mxu0 0.0
    %4589 = vmatpush.msra.mxu0 0.0
    %4590 = vmatpush.msra.mxu0 0.0
    %4591 = vmatpush.msra.mxu0 0.0
    %4592 = vmatpush.msra.mxu0 0.0
    %4593 = vmatpush.msra.mxu0 0.0
    %4594 = vmatpush.msra.mxu0 0.0
    %4595 = vmatpush.msra.mxu0 %v4231
    %4596 = vmatpush.msra.mxu0 %v4223
    %4597 = vmatmul.f32.gmra.mxu0 %v4570
    %v4598 = vpop.f32.mrf.mxu0
    %v4599 = vadd.f32 %v4355, %v4598
    %4600 = vmatmul.f32.gmra.mxu0 %v4573
    %v4601 = vpop.f32.mrf.mxu0
    %v4602 = vadd.f32 %v4358, %v4601
    %4603 = vmatmul.f32.gmra.mxu0 %v4576
    %v4604 = vpop.f32.mrf.mxu0
    %v4605 = vadd.f32 %v4361, %v4604
    %4606 = vmatmul.f32.gmra.mxu0 %v4579
    %v4607 = vpop.f32.mrf.mxu0
    %v4608 = vadd.f32 %v4364, %v4607
    %4609 = vdwg.mxu0
    %4610 = vmatpush.msra.mxu0 0.0
    %4611 = vmatpush.msra.mxu0 0.0
    %4612 = vmatpush.msra.mxu0 0.0
    %4613 = vmatpush.msra.mxu0 0.0
    %4614 = vmatpush.msra.mxu0 0.0
    %4615 = vmatpush.msra.mxu0 0.0
    %4616 = vmatpush.msra.mxu0 0.0
    %4617 = vmatpush.msra.mxu0 0.0
    %4618 = vmatpush.msra.mxu0 0.0
    %4619 = vmatpush.msra.mxu0 0.0
    %4620 = vmatpush.msra.mxu0 0.0
    %4621 = vmatpush.msra.mxu0 0.0
    %4622 = vmatpush.msra.mxu0 0.0
    %4623 = vmatpush.msra.mxu0 0.0
    %4624 = vmatpush.msra.mxu0 %v4232
    %4625 = vmatpush.msra.mxu0 %v4224
    %4626 = vmatmul.f32.gmra.mxu0 %v4570
    %v4627 = vpop.f32.mrf.mxu0
    %v4628 = vadd.f32 %v4384, %v4627
    %4629 = vmatmul.f32.gmra.mxu0 %v4573
    %v4630 = vpop.f32.mrf.mxu0
    %v4631 = vadd.f32 %v4387, %v4630
    %4632 = vmatmul.f32.gmra.mxu0 %v4576
    %v4633 = vpop.f32.mrf.mxu0
    %v4634 = vadd.f32 %v4390, %v4633
    %4635 = vmatmul.f32.gmra.mxu0 %v4579
    %v4636 = vpop.f32.mrf.mxu0
    %v4637 = vadd.f32 %v4393, %v4636
    %4638 = vdwg.mxu0
    %4639 = vmatpush.msra.mxu0 0.0
    %4640 = vmatpush.msra.mxu0 0.0
    %4641 = vmatpush.msra.mxu0 0.0
    %4642 = vmatpush.msra.mxu0 0.0
    %4643 = vmatpush.msra.mxu0 0.0
    %4644 = vmatpush.msra.mxu0 0.0
    %4645 = vmatpush.msra.mxu0 0.0
    %4646 = vmatpush.msra.mxu0 0.0
    %4647 = vmatpush.msra.mxu0 0.0
    %4648 = vmatpush.msra.mxu0 0.0
    %4649 = vmatpush.msra.mxu0 0.0
    %4650 = vmatpush.msra.mxu0 0.0
    %4651 = vmatpush.msra.mxu0 0.0
    %4652 = vmatpush.msra.mxu0 0.0
    %4653 = vmatpush.msra.mxu0 %v4233
    %4654 = vmatpush.msra.mxu0 %v4225
    %4655 = vmatmul.f32.gmra.mxu0 %v4570
    %v4656 = vpop.f32.mrf.mxu0
    %v4657 = vadd.f32 %v4413, %v4656
    %4658 = vmatmul.f32.gmra.mxu0 %v4573
    %v4659 = vpop.f32.mrf.mxu0
    %v4660 = vadd.f32 %v4416, %v4659
    %4661 = vmatmul.f32.gmra.mxu0 %v4576
    %v4662 = vpop.f32.mrf.mxu0
    %v4663 = vadd.f32 %v4419, %v4662
    %4664 = vmatmul.f32.gmra.mxu0 %v4579
    %v4665 = vpop.f32.mrf.mxu0
    %v4666 = vadd.f32 %v4422, %v4665
    %4667 = vdwg.mxu0
    %4668 = vmatpush.msra.mxu0 0.0
    %4669 = vmatpush.msra.mxu0 0.0
    %4670 = vmatpush.msra.mxu0 0.0
    %4671 = vmatpush.msra.mxu0 0.0
    %4672 = vmatpush.msra.mxu0 0.0
    %4673 = vmatpush.msra.mxu0 0.0
    %4674 = vmatpush.msra.mxu0 0.0
    %4675 = vmatpush.msra.mxu0 0.0
    %4676 = vmatpush.msra.mxu0 0.0
    %4677 = vmatpush.msra.mxu0 0.0
    %4678 = vmatpush.msra.mxu0 0.0
    %4679 = vmatpush.msra.mxu0 0.0
    %4680 = vmatpush.msra.mxu0 0.0
    %4681 = vmatpush.msra.mxu0 0.0
    %4682 = vmatpush.msra.mxu0 %v4234
    %4683 = vmatpush.msra.mxu0 %v4226
    %4684 = vmatmul.f32.gmra.mxu0 %v4570
    %v4685 = vpop.f32.mrf.mxu0
    %v4686 = vadd.f32 %v4442, %v4685
    %4687 = vmatmul.f32.gmra.mxu0 %v4573
    %v4688 = vpop.f32.mrf.mxu0
    %v4689 = vadd.f32 %v4445, %v4688
    %4690 = vmatmul.f32.gmra.mxu0 %v4576
    %v4691 = vpop.f32.mrf.mxu0
    %v4692 = vadd.f32 %v4448, %v4691
    %4693 = vmatmul.f32.gmra.mxu0 %v4579
    %v4694 = vpop.f32.mrf.mxu0
    %v4695 = vadd.f32 %v4451, %v4694
    %4696 = vdwg.mxu0
    %4697 = vmatpush.msra.mxu0 0.0
    %4698 = vmatpush.msra.mxu0 0.0
    %4699 = vmatpush.msra.mxu0 0.0
    %4700 = vmatpush.msra.mxu0 0.0
    %4701 = vmatpush.msra.mxu0 0.0
    %4702 = vmatpush.msra.mxu0 0.0
    %4703 = vmatpush.msra.mxu0 0.0
    %4704 = vmatpush.msra.mxu0 0.0
    %4705 = vmatpush.msra.mxu0 0.0
    %4706 = vmatpush.msra.mxu0 0.0
    %4707 = vmatpush.msra.mxu0 0.0
    %4708 = vmatpush.msra.mxu0 0.0
    %4709 = vmatpush.msra.mxu0 0.0
    %4710 = vmatpush.msra.mxu0 0.0
    %4711 = vmatpush.msra.mxu0 %v4235
    %4712 = vmatpush.msra.mxu0 %v4227
    %4713 = vmatmul.f32.gmra.mxu0 %v4570
    %v4714 = vpop.f32.mrf.mxu0
    %v4715 = vadd.f32 %v4471, %v4714
    %4716 = vmatmul.f32.gmra.mxu0 %v4573
    %v4717 = vpop.f32.mrf.mxu0
    %v4718 = vadd.f32 %v4474, %v4717
    %4719 = vmatmul.f32.gmra.mxu0 %v4576
    %v4720 = vpop.f32.mrf.mxu0
    %v4721 = vadd.f32 %v4477, %v4720
    %4722 = vmatmul.f32.gmra.mxu0 %v4579
    %v4723 = vpop.f32.mrf.mxu0
    %v4724 = vadd.f32 %v4480, %v4723
    %4725 = vdwg.mxu0
    %4726 = vmatpush.msra.mxu0 0.0
    %4727 = vmatpush.msra.mxu0 0.0
    %4728 = vmatpush.msra.mxu0 0.0
    %4729 = vmatpush.msra.mxu0 0.0
    %4730 = vmatpush.msra.mxu0 0.0
    %4731 = vmatpush.msra.mxu0 0.0
    %4732 = vmatpush.msra.mxu0 0.0
    %4733 = vmatpush.msra.mxu0 0.0
    %4734 = vmatpush.msra.mxu0 0.0
    %4735 = vmatpush.msra.mxu0 0.0
    %4736 = vmatpush.msra.mxu0 0.0
    %4737 = vmatpush.msra.mxu0 0.0
    %4738 = vmatpush.msra.mxu0 0.0
    %4739 = vmatpush.msra.mxu0 0.0
    %4740 = vmatpush.msra.mxu0 %v4236
    %4741 = vmatpush.msra.mxu0 %v4228
    %4742 = vmatmul.f32.gmra.mxu0 %v4570
    %v4743 = vpop.f32.mrf.mxu0
    %v4744 = vadd.f32 %v4500, %v4743
    %4745 = vmatmul.f32.gmra.mxu0 %v4573
    %v4746 = vpop.f32.mrf.mxu0
    %v4747 = vadd.f32 %v4503, %v4746
    %4748 = vmatmul.f32.gmra.mxu0 %v4576
    %v4749 = vpop.f32.mrf.mxu0
    %v4750 = vadd.f32 %v4506, %v4749
    %4751 = vmatmul.f32.gmra.mxu0 %v4579
    %v4752 = vpop.f32.mrf.mxu0
    %v4753 = vadd.f32 %v4509, %v4752
    %4754 = vdwg.mxu0
    %4755 = vmatpush.msra.mxu0 0.0
    %4756 = vmatpush.msra.mxu0 0.0
    %4757 = vmatpush.msra.mxu0 0.0
    %4758 = vmatpush.msra.mxu0 0.0
    %4759 = vmatpush.msra.mxu0 0.0
    %4760 = vmatpush.msra.mxu0 0.0
    %4761 = vmatpush.msra.mxu0 0.0
    %4762 = vmatpush.msra.mxu0 0.0
    %4763 = vmatpush.msra.mxu0 0.0
    %4764 = vmatpush.msra.mxu0 0.0
    %4765 = vmatpush.msra.mxu0 0.0
    %4766 = vmatpush.msra.mxu0 0.0
    %4767 = vmatpush.msra.mxu0 0.0
    %4768 = vmatpush.msra.mxu0 0.0
    %4769 = vmatpush.msra.mxu0 %v4237
    %4770 = vmatpush.msra.mxu0 %v4229
    %4771 = vmatmul.f32.gmra.mxu0 %v4570
    %v4772 = vpop.f32.mrf.mxu0
    %v4773 = vadd.f32 %v4529, %v4772
    %4774 = vmatmul.f32.gmra.mxu0 %v4573
    %v4775 = vpop.f32.mrf.mxu0
    %v4776 = vadd.f32 %v4532, %v4775
    %4777 = vmatmul.f32.gmra.mxu0 %v4576
    %v4778 = vpop.f32.mrf.mxu0
    %v4779 = vadd.f32 %v4535, %v4778
    %4780 = vmatmul.f32.gmra.mxu0 %v4579
    %v4781 = vpop.f32.mrf.mxu0
    %v4782 = vadd.f32 %v4538, %v4781
    %4783 = vdwg.mxu0
    %4784 = vmatpush.msra.mxu0 0.0
    %4785 = vmatpush.msra.mxu0 0.0
    %4786 = vmatpush.msra.mxu0 0.0
    %4787 = vmatpush.msra.mxu0 0.0
    %4788 = vmatpush.msra.mxu0 0.0
    %4789 = vmatpush.msra.mxu0 0.0
    %4790 = vmatpush.msra.mxu0 0.0
    %4791 = vmatpush.msra.mxu0 0.0
    %4792 = vmatpush.msra.mxu0 0.0
    %4793 = vmatpush.msra.mxu0 0.0
    %4794 = vmatpush.msra.mxu0 0.0
    %4795 = vmatpush.msra.mxu0 0.0
    %4796 = vmatpush.msra.mxu0 0.0
    %4797 = vmatpush.msra.mxu0 0.0
    %4798 = vmatpush.msra.mxu0 %v4238
    %4799 = vmatpush.msra.mxu0 %v4230
    %4800 = vmatmul.f32.gmra.mxu0 %v4570
    %v4801 = vpop.f32.mrf.mxu0
    %v4802 = vadd.f32 %v4558, %v4801
    %4803 = vmatmul.f32.gmra.mxu0 %v4573
    %v4804 = vpop.f32.mrf.mxu0
    %v4805 = vadd.f32 %v4561, %v4804
    %4806 = vmatmul.f32.gmra.mxu0 %v4576
    %v4807 = vpop.f32.mrf.mxu0
    %v4808 = vadd.f32 %v4564, %v4807
    %4809 = vmatmul.f32.gmra.mxu0 %v4579
    %v4810 = vpop.f32.mrf.mxu0
    %v4811 = vadd.f32 %v4567, %v4810
    %4812 = vdwg.mxu0
    %v4813 = vld [vmem:[%s1924] sm:$0xff]
    %v4814 = vld [vmem:[%s1924 + $0x8] sm:$0xff]
    %v4815 = vld [vmem:[%s1924 + $0x10] sm:$0xff]
    %v4816 = vld [vmem:[%s1924 + $0x18] sm:$0xff]
    %4817 = vrot.lane.b32.xlu0 %v4223, 126
    %v4818 = vpop.permute.xlu0 %4817
    %4819 = vrot.lane.b32.xlu0 %v4224, 126
    %v4820 = vpop.permute.xlu0 %4819
    %4821 = vrot.lane.b32.xlu0 %v4225, 126
    %v4822 = vpop.permute.xlu0 %4821
    %4823 = vrot.lane.b32.xlu0 %v4226, 126
    %v4824 = vpop.permute.xlu0 %4823
    %4825 = vrot.lane.b32.xlu0 %v4227, 126
    %v4826 = vpop.permute.xlu0 %4825
    %4827 = vrot.lane.b32.xlu0 %v4228, 126
    %v4828 = vpop.permute.xlu0 %4827
    %4829 = vrot.lane.b32.xlu0 %v4229, 126
    %v4830 = vpop.permute.xlu0 %4829
    %4831 = vrot.lane.b32.xlu0 %v4230, 126
    %v4832 = vpop.permute.xlu0 %4831
    %4833 = vrot.lane.b32.xlu0 %v4231, 126
    %v4834 = vpop.permute.xlu0 %4833
    %4835 = vrot.lane.b32.xlu0 %v4232, 126
    %v4836 = vpop.permute.xlu0 %4835
    %4837 = vrot.lane.b32.xlu0 %v4233, 126
    %v4838 = vpop.permute.xlu0 %4837
    %4839 = vrot.lane.b32.xlu0 %v4234, 126
    %v4840 = vpop.permute.xlu0 %4839
    %4841 = vrot.lane.b32.xlu0 %v4235, 126
    %v4842 = vpop.permute.xlu0 %4841
    %4843 = vrot.lane.b32.xlu0 %v4236, 126
    %v4844 = vpop.permute.xlu0 %4843
    %4845 = vrot.lane.b32.xlu0 %v4237, 126
    %v4846 = vpop.permute.xlu0 %4845
    %4847 = vrot.lane.b32.xlu0 %v4238, 126
    %v4848 = vpop.permute.xlu0 %4847
    %v4849 = vsel %vm179, %v4818, %v4820
    %v4850 = vsel %vm179, %v4820, %v4822
    %v4851 = vsel %vm179, %v4822, %v4824
    %v4852 = vsel %vm179, %v4824, %v4826
    %v4853 = vsel %vm179, %v4826, %v4828
    %v4854 = vsel %vm179, %v4828, %v4830
    %v4855 = vsel %vm179, %v4830, %v4832
    %v4856 = vsel %vm179, %v4834, %v4836
    %v4857 = vsel %vm179, %v4836, %v4838
    %v4858 = vsel %vm179, %v4838, %v4840
    %v4859 = vsel %vm179, %v4840, %v4842
    %v4860 = vsel %vm179, %v4842, %v4844
    %v4861 = vsel %vm179, %v4844, %v4846
    %v4862 = vsel %vm179, %v4846, %v4848
    %v4880 = vsel %vm1435, %v4813, 0
    %v4883 = vsel %vm1435, %v4814, 0
    %v4886 = vsel %vm1435, %v4815, 0
    %v4889 = vsel %vm1435, %v4816, 0
    %4891 = vmatpush.msra.mxu0 0.0
    %4892 = vmatpush.msra.mxu0 0.0
    %4893 = vmatpush.msra.mxu0 0.0
    %4894 = vmatpush.msra.mxu0 0.0
    %4895 = vmatpush.msra.mxu0 0.0
    %4896 = vmatpush.msra.mxu0 0.0
    %4897 = vmatpush.msra.mxu0 0.0
    %4898 = vmatpush.msra.mxu0 0.0
    %4899 = vmatpush.msra.mxu0 0.0
    %4900 = vmatpush.msra.mxu0 0.0
    %4901 = vmatpush.msra.mxu0 0.0
    %4902 = vmatpush.msra.mxu0 0.0
    %4903 = vmatpush.msra.mxu0 0.0
    %4904 = vmatpush.msra.mxu0 0.0
    %4905 = vmatpush.msra.mxu0 %v4856
    %4906 = vmatpush.msra.mxu0 %v4849
    %4907 = vmatmul.f32.gmra.mxu0 %v4880
    %v4908 = vpop.f32.mrf.mxu0
    %v4909 = vadd.f32 0.0, %v4908
    %4910 = vmatmul.f32.gmra.mxu0 %v4883
    %v4911 = vpop.f32.mrf.mxu0
    %v4912 = vadd.f32 0.0, %v4911
    %4913 = vmatmul.f32.gmra.mxu0 %v4886
    %v4914 = vpop.f32.mrf.mxu0
    %v4915 = vadd.f32 0.0, %v4914
    %4916 = vmatmul.f32.gmra.mxu0 %v4889
    %v4917 = vpop.f32.mrf.mxu0
    %v4918 = vadd.f32 0.0, %v4917
    %4919 = vdwg.mxu0
    %4920 = vmatpush.msra.mxu0 0.0
    %4921 = vmatpush.msra.mxu0 0.0
    %4922 = vmatpush.msra.mxu0 0.0
    %4923 = vmatpush.msra.mxu0 0.0
    %4924 = vmatpush.msra.mxu0 0.0
    %4925 = vmatpush.msra.mxu0 0.0
    %4926 = vmatpush.msra.mxu0 0.0
    %4927 = vmatpush.msra.mxu0 0.0
    %4928 = vmatpush.msra.mxu0 0.0
    %4929 = vmatpush.msra.mxu0 0.0
    %4930 = vmatpush.msra.mxu0 0.0
    %4931 = vmatpush.msra.mxu0 0.0
    %4932 = vmatpush.msra.mxu0 0.0
    %4933 = vmatpush.msra.mxu0 0.0
    %4934 = vmatpush.msra.mxu0 %v4857
    %4935 = vmatpush.msra.mxu0 %v4850
    %4936 = vmatmul.f32.gmra.mxu0 %v4880
    %v4937 = vpop.f32.mrf.mxu0
    %v4938 = vadd.f32 0.0, %v4937
    %4939 = vmatmul.f32.gmra.mxu0 %v4883
    %v4940 = vpop.f32.mrf.mxu0
    %v4941 = vadd.f32 0.0, %v4940
    %4942 = vmatmul.f32.gmra.mxu0 %v4886
    %v4943 = vpop.f32.mrf.mxu0
    %v4944 = vadd.f32 0.0, %v4943
    %4945 = vmatmul.f32.gmra.mxu0 %v4889
    %v4946 = vpop.f32.mrf.mxu0
    %v4947 = vadd.f32 0.0, %v4946
    %4948 = vdwg.mxu0
    %4949 = vmatpush.msra.mxu0 0.0
    %4950 = vmatpush.msra.mxu0 0.0
    %4951 = vmatpush.msra.mxu0 0.0
    %4952 = vmatpush.msra.mxu0 0.0
    %4953 = vmatpush.msra.mxu0 0.0
    %4954 = vmatpush.msra.mxu0 0.0
    %4955 = vmatpush.msra.mxu0 0.0
    %4956 = vmatpush.msra.mxu0 0.0
    %4957 = vmatpush.msra.mxu0 0.0
    %4958 = vmatpush.msra.mxu0 0.0
    %4959 = vmatpush.msra.mxu0 0.0
    %4960 = vmatpush.msra.mxu0 0.0
    %4961 = vmatpush.msra.mxu0 0.0
    %4962 = vmatpush.msra.mxu0 0.0
    %4963 = vmatpush.msra.mxu0 %v4858
    %4964 = vmatpush.msra.mxu0 %v4851
    %4965 = vmatmul.f32.gmra.mxu0 %v4880
    %v4966 = vpop.f32.mrf.mxu0
    %v4967 = vadd.f32 0.0, %v4966
    %4968 = vmatmul.f32.gmra.mxu0 %v4883
    %v4969 = vpop.f32.mrf.mxu0
    %v4970 = vadd.f32 0.0, %v4969
    %4971 = vmatmul.f32.gmra.mxu0 %v4886
    %v4972 = vpop.f32.mrf.mxu0
    %v4973 = vadd.f32 0.0, %v4972
    %4974 = vmatmul.f32.gmra.mxu0 %v4889
    %v4975 = vpop.f32.mrf.mxu0
    %v4976 = vadd.f32 0.0, %v4975
    %4977 = vdwg.mxu0
    %4978 = vmatpush.msra.mxu0 0.0
    %4979 = vmatpush.msra.mxu0 0.0
    %4980 = vmatpush.msra.mxu0 0.0
    %4981 = vmatpush.msra.mxu0 0.0
    %4982 = vmatpush.msra.mxu0 0.0
    %4983 = vmatpush.msra.mxu0 0.0
    %4984 = vmatpush.msra.mxu0 0.0
    %4985 = vmatpush.msra.mxu0 0.0
    %4986 = vmatpush.msra.mxu0 0.0
    %4987 = vmatpush.msra.mxu0 0.0
    %4988 = vmatpush.msra.mxu0 0.0
    %4989 = vmatpush.msra.mxu0 0.0
    %4990 = vmatpush.msra.mxu0 0.0
    %4991 = vmatpush.msra.mxu0 0.0
    %4992 = vmatpush.msra.mxu0 %v4859
    %4993 = vmatpush.msra.mxu0 %v4852
    %4994 = vmatmul.f32.gmra.mxu0 %v4880
    %v4995 = vpop.f32.mrf.mxu0
    %v4996 = vadd.f32 0.0, %v4995
    %4997 = vmatmul.f32.gmra.mxu0 %v4883
    %v4998 = vpop.f32.mrf.mxu0
    %v4999 = vadd.f32 0.0, %v4998
    %5000 = vmatmul.f32.gmra.mxu0 %v4886
    %v5001 = vpop.f32.mrf.mxu0
    %v5002 = vadd.f32 0.0, %v5001
    %5003 = vmatmul.f32.gmra.mxu0 %v4889
    %v5004 = vpop.f32.mrf.mxu0
    %v5005 = vadd.f32 0.0, %v5004
    %5006 = vdwg.mxu0
    %5007 = vmatpush.msra.mxu0 0.0
    %5008 = vmatpush.msra.mxu0 0.0
    %5009 = vmatpush.msra.mxu0 0.0
    %5010 = vmatpush.msra.mxu0 0.0
    %5011 = vmatpush.msra.mxu0 0.0
    %5012 = vmatpush.msra.mxu0 0.0
    %5013 = vmatpush.msra.mxu0 0.0
    %5014 = vmatpush.msra.mxu0 0.0
    %5015 = vmatpush.msra.mxu0 0.0
    %5016 = vmatpush.msra.mxu0 0.0
    %5017 = vmatpush.msra.mxu0 0.0
    %5018 = vmatpush.msra.mxu0 0.0
    %5019 = vmatpush.msra.mxu0 0.0
    %5020 = vmatpush.msra.mxu0 0.0
    %5021 = vmatpush.msra.mxu0 %v4860
    %5022 = vmatpush.msra.mxu0 %v4853
    %5023 = vmatmul.f32.gmra.mxu0 %v4880
    %v5024 = vpop.f32.mrf.mxu0
    %v5025 = vadd.f32 0.0, %v5024
    %5026 = vmatmul.f32.gmra.mxu0 %v4883
    %v5027 = vpop.f32.mrf.mxu0
    %v5028 = vadd.f32 0.0, %v5027
    %5029 = vmatmul.f32.gmra.mxu0 %v4886
    %v5030 = vpop.f32.mrf.mxu0
    %v5031 = vadd.f32 0.0, %v5030
    %5032 = vmatmul.f32.gmra.mxu0 %v4889
    %v5033 = vpop.f32.mrf.mxu0
    %v5034 = vadd.f32 0.0, %v5033
    %5035 = vdwg.mxu0
    %5036 = vmatpush.msra.mxu0 0.0
    %5037 = vmatpush.msra.mxu0 0.0
    %5038 = vmatpush.msra.mxu0 0.0
    %5039 = vmatpush.msra.mxu0 0.0
    %5040 = vmatpush.msra.mxu0 0.0
    %5041 = vmatpush.msra.mxu0 0.0
    %5042 = vmatpush.msra.mxu0 0.0
    %5043 = vmatpush.msra.mxu0 0.0
    %5044 = vmatpush.msra.mxu0 0.0
    %5045 = vmatpush.msra.mxu0 0.0
    %5046 = vmatpush.msra.mxu0 0.0
    %5047 = vmatpush.msra.mxu0 0.0
    %5048 = vmatpush.msra.mxu0 0.0
    %5049 = vmatpush.msra.mxu0 0.0
    %5050 = vmatpush.msra.mxu0 %v4861
    %5051 = vmatpush.msra.mxu0 %v4854
    %5052 = vmatmul.f32.gmra.mxu0 %v4880
    %v5053 = vpop.f32.mrf.mxu0
    %v5054 = vadd.f32 0.0, %v5053
    %5055 = vmatmul.f32.gmra.mxu0 %v4883
    %v5056 = vpop.f32.mrf.mxu0
    %v5057 = vadd.f32 0.0, %v5056
    %5058 = vmatmul.f32.gmra.mxu0 %v4886
    %v5059 = vpop.f32.mrf.mxu0
    %v5060 = vadd.f32 0.0, %v5059
    %5061 = vmatmul.f32.gmra.mxu0 %v4889
    %v5062 = vpop.f32.mrf.mxu0
    %v5063 = vadd.f32 0.0, %v5062
    %5064 = vdwg.mxu0
    %5065 = vmatpush.msra.mxu0 0.0
    %5066 = vmatpush.msra.mxu0 0.0
    %5067 = vmatpush.msra.mxu0 0.0
    %5068 = vmatpush.msra.mxu0 0.0
    %5069 = vmatpush.msra.mxu0 0.0
    %5070 = vmatpush.msra.mxu0 0.0
    %5071 = vmatpush.msra.mxu0 0.0
    %5072 = vmatpush.msra.mxu0 0.0
    %5073 = vmatpush.msra.mxu0 0.0
    %5074 = vmatpush.msra.mxu0 0.0
    %5075 = vmatpush.msra.mxu0 0.0
    %5076 = vmatpush.msra.mxu0 0.0
    %5077 = vmatpush.msra.mxu0 0.0
    %5078 = vmatpush.msra.mxu0 0.0
    %5079 = vmatpush.msra.mxu0 %v4862
    %5080 = vmatpush.msra.mxu0 %v4855
    %5081 = vmatmul.f32.gmra.mxu0 %v4880
    %v5082 = vpop.f32.mrf.mxu0
    %v5083 = vadd.f32 0.0, %v5082
    %5084 = vmatmul.f32.gmra.mxu0 %v4883
    %v5085 = vpop.f32.mrf.mxu0
    %v5086 = vadd.f32 0.0, %v5085
    %5087 = vmatmul.f32.gmra.mxu0 %v4886
    %v5088 = vpop.f32.mrf.mxu0
    %v5089 = vadd.f32 0.0, %v5088
    %5090 = vmatmul.f32.gmra.mxu0 %v4889
    %v5091 = vpop.f32.mrf.mxu0
    %v5092 = vadd.f32 0.0, %v5091
    %5093 = vdwg.mxu0
    %5094 = vmatpush.msra.mxu0 0.0
    %5095 = vmatpush.msra.mxu0 0.0
    %5096 = vmatpush.msra.mxu0 0.0
    %5097 = vmatpush.msra.mxu0 0.0
    %5098 = vmatpush.msra.mxu0 0.0
    %5099 = vmatpush.msra.mxu0 0.0
    %5100 = vmatpush.msra.mxu0 0.0
    %5101 = vmatpush.msra.mxu0 0.0
    %5102 = vmatpush.msra.mxu0 0.0
    %5103 = vmatpush.msra.mxu0 0.0
    %5104 = vmatpush.msra.mxu0 0.0
    %5105 = vmatpush.msra.mxu0 0.0
    %5106 = vmatpush.msra.mxu0 0.0
    %5107 = vmatpush.msra.mxu0 0.0
    %5108 = vmatpush.msra.mxu0 %v4848
    %5109 = vmatpush.msra.mxu0 %v4832
    %5110 = vmatmul.f32.gmra.mxu0 %v4880
    %v5111 = vpop.f32.mrf.mxu0
    %v5112 = vadd.f32 0.0, %v5111
    %5113 = vmatmul.f32.gmra.mxu0 %v4883
    %v5114 = vpop.f32.mrf.mxu0
    %v5115 = vadd.f32 0.0, %v5114
    %5116 = vmatmul.f32.gmra.mxu0 %v4886
    %v5117 = vpop.f32.mrf.mxu0
    %v5118 = vadd.f32 0.0, %v5117
    %5119 = vmatmul.f32.gmra.mxu0 %v4889
    %v5120 = vpop.f32.mrf.mxu0
    %v5121 = vadd.f32 0.0, %v5120
    %5122 = vdwg.mxu0
    %v5123 = vadd.f32 %v4599, %v4909
    %v5124 = vadd.f32 %v4628, %v4938
    %v5125 = vadd.f32 %v4657, %v4967
    %v5126 = vadd.f32 %v4686, %v4996
    %v5127 = vadd.f32 %v4715, %v5025
    %v5128 = vadd.f32 %v4744, %v5054
    %v5129 = vadd.f32 %v4773, %v5083
    %v5130 = vadd.f32 %v4802, %v5112
    %v5131 = vadd.f32 %v4602, %v4912
    %v5132 = vadd.f32 %v4631, %v4941
    %v5133 = vadd.f32 %v4660, %v4970
    %v5134 = vadd.f32 %v4689, %v4999
    %v5135 = vadd.f32 %v4718, %v5028
    %v5136 = vadd.f32 %v4747, %v5057
    %v5137 = vadd.f32 %v4776, %v5086
    %v5138 = vadd.f32 %v4805, %v5115
    %v5139 = vadd.f32 %v4605, %v4915
    %v5140 = vadd.f32 %v4634, %v4944
    %v5141 = vadd.f32 %v4663, %v4973
    %v5142 = vadd.f32 %v4692, %v5002
    %v5143 = vadd.f32 %v4721, %v5031
    %v5144 = vadd.f32 %v4750, %v5060
    %v5145 = vadd.f32 %v4779, %v5089
    %v5146 = vadd.f32 %v4808, %v5118
    %v5147 = vadd.f32 %v4608, %v4918
    %v5148 = vadd.f32 %v4637, %v4947
    %v5149 = vadd.f32 %v4666, %v4976
    %v5150 = vadd.f32 %v4695, %v5005
    %v5151 = vadd.f32 %v4724, %v5034
    %v5152 = vadd.f32 %v4753, %v5063
    %v5153 = vadd.f32 %v4782, %v5092
    %v5154 = vadd.f32 %v4811, %v5121
    %v5155 = vld [vmem:[%s10] sm:$0xff]
    %v5156 = vld [vmem:[%s10 + $0x8] sm:$0xff]
    %v5157 = vld [vmem:[%s10 + $0x10] sm:$0xff]
    %v5158 = vld [vmem:[%s10 + $0x18] sm:$0xff]
    %5160 = vset.pattern.permute.xlu0 0
    %5161 = vperm.xlu0 %5160, %v5155
    %v5162 = vpop.permute.xlu0 %5161
    %5165 = vset.pattern.permute.xlu0 0
    %5166 = vperm.xlu0 %5165, %v5156
    %v5167 = vpop.permute.xlu0 %5166
    %5170 = vset.pattern.permute.xlu0 0
    %5171 = vperm.xlu0 %5170, %v5157
    %v5172 = vpop.permute.xlu0 %5171
    %5175 = vset.pattern.permute.xlu0 0
    %5176 = vperm.xlu0 %5175, %v5158
    %v5177 = vpop.permute.xlu0 %5176
    %v5179 = vadd.f32 %v5123, %v5162
    %v5180 = vadd.f32 %v5124, %v5162
    %v5181 = vadd.f32 %v5125, %v5162
    %v5182 = vadd.f32 %v5126, %v5162
    %v5183 = vadd.f32 %v5127, %v5162
    %v5184 = vadd.f32 %v5128, %v5162
    %v5185 = vadd.f32 %v5129, %v5162
    %v5186 = vadd.f32 %v5130, %v5162
    %v5187 = vadd.f32 %v5131, %v5167
    %v5188 = vadd.f32 %v5132, %v5167
    %v5189 = vadd.f32 %v5133, %v5167
    %v5190 = vadd.f32 %v5134, %v5167
    %v5191 = vadd.f32 %v5135, %v5167
    %v5192 = vadd.f32 %v5136, %v5167
    %v5193 = vadd.f32 %v5137, %v5167
    %v5194 = vadd.f32 %v5138, %v5167
    %v5195 = vadd.f32 %v5139, %v5172
    %v5196 = vadd.f32 %v5140, %v5172
    %v5197 = vadd.f32 %v5141, %v5172
    %v5198 = vadd.f32 %v5142, %v5172
    %v5199 = vadd.f32 %v5143, %v5172
    %v5200 = vadd.f32 %v5144, %v5172
    %v5201 = vadd.f32 %v5145, %v5172
    %v5202 = vadd.f32 %v5146, %v5172
    %v5203 = vadd.f32 %v5147, %v5177
    %v5204 = vadd.f32 %v5148, %v5177
    %v5205 = vadd.f32 %v5149, %v5177
    %v5206 = vadd.f32 %v5150, %v5177
    %v5207 = vadd.f32 %v5151, %v5177
    %v5208 = vadd.f32 %v5152, %v5177
    %v5209 = vadd.f32 %v5153, %v5177
    %v5210 = vadd.f32 %v5154, %v5177
    %v5211 = vld [vmem:[%s11] sm:$0xff]
    %v5212 = vld [vmem:[%s11 + $0x8] sm:$0xff]
    %v5213 = vld [vmem:[%s11 + $0x10] sm:$0xff]
    %v5214 = vld [vmem:[%s11 + $0x18] sm:$0xff]
    %5216 = vset.pattern.permute.xlu0 0
    %5217 = vperm.xlu0 %5216, %v5211
    %v5218 = vpop.permute.xlu0 %5217
    %5221 = vset.pattern.permute.xlu0 0
    %5222 = vperm.xlu0 %5221, %v5212
    %v5223 = vpop.permute.xlu0 %5222
    %5226 = vset.pattern.permute.xlu0 0
    %5227 = vperm.xlu0 %5226, %v5213
    %v5228 = vpop.permute.xlu0 %5227
    %5231 = vset.pattern.permute.xlu0 0
    %5232 = vperm.xlu0 %5231, %v5214
    %v5233 = vpop.permute.xlu0 %5232
    %v5235 = vmul.f32 %v5179, %v5218
    %v5236 = vmul.f32 %v5180, %v5218
    %v5237 = vmul.f32 %v5181, %v5218
    %v5238 = vmul.f32 %v5182, %v5218
    %v5239 = vmul.f32 %v5183, %v5218
    %v5240 = vmul.f32 %v5184, %v5218
    %v5241 = vmul.f32 %v5185, %v5218
    %v5242 = vmul.f32 %v5186, %v5218
    %v5243 = vmul.f32 %v5187, %v5223
    %v5244 = vmul.f32 %v5188, %v5223
    %v5245 = vmul.f32 %v5189, %v5223
    %v5246 = vmul.f32 %v5190, %v5223
    %v5247 = vmul.f32 %v5191, %v5223
    %v5248 = vmul.f32 %v5192, %v5223
    %v5249 = vmul.f32 %v5193, %v5223
    %v5250 = vmul.f32 %v5194, %v5223
    %v5251 = vmul.f32 %v5195, %v5228
    %v5252 = vmul.f32 %v5196, %v5228
    %v5253 = vmul.f32 %v5197, %v5228
    %v5254 = vmul.f32 %v5198, %v5228
    %v5255 = vmul.f32 %v5199, %v5228
    %v5256 = vmul.f32 %v5200, %v5228
    %v5257 = vmul.f32 %v5201, %v5228
    %v5258 = vmul.f32 %v5202, %v5228
    %v5259 = vmul.f32 %v5203, %v5233
    %v5260 = vmul.f32 %v5204, %v5233
    %v5261 = vmul.f32 %v5205, %v5233
    %v5262 = vmul.f32 %v5206, %v5233
    %v5263 = vmul.f32 %v5207, %v5233
    %v5264 = vmul.f32 %v5208, %v5233
    %v5265 = vmul.f32 %v5209, %v5233
    %v5266 = vmul.f32 %v5210, %v5233
    %v5267 = vld [vmem:[%s12] sm:$0xff]
    %v5268 = vld [vmem:[%s12 + $0x8] sm:$0xff]
    %v5269 = vld [vmem:[%s12 + $0x10] sm:$0xff]
    %v5270 = vld [vmem:[%s12 + $0x18] sm:$0xff]
    %5272 = vset.pattern.permute.xlu0 0
    %5273 = vperm.xlu0 %5272, %v5267
    %v5274 = vpop.permute.xlu0 %5273
    %5277 = vset.pattern.permute.xlu0 0
    %5278 = vperm.xlu0 %5277, %v5268
    %v5279 = vpop.permute.xlu0 %5278
    %5282 = vset.pattern.permute.xlu0 0
    %5283 = vperm.xlu0 %5282, %v5269
    %v5284 = vpop.permute.xlu0 %5283
    %5287 = vset.pattern.permute.xlu0 0
    %5288 = vperm.xlu0 %5287, %v5270
    %v5289 = vpop.permute.xlu0 %5288
    %v5291 = vadd.f32 %v5235, %v5274
    %v5292 = vadd.f32 %v5236, %v5274
    %v5293 = vadd.f32 %v5237, %v5274
    %v5294 = vadd.f32 %v5238, %v5274
    %v5295 = vadd.f32 %v5239, %v5274
    %v5296 = vadd.f32 %v5240, %v5274
    %v5297 = vadd.f32 %v5241, %v5274
    %v5298 = vadd.f32 %v5242, %v5274
    %v5299 = vadd.f32 %v5243, %v5279
    %v5300 = vadd.f32 %v5244, %v5279
    %v5301 = vadd.f32 %v5245, %v5279
    %v5302 = vadd.f32 %v5246, %v5279
    %v5303 = vadd.f32 %v5247, %v5279
    %v5304 = vadd.f32 %v5248, %v5279
    %v5305 = vadd.f32 %v5249, %v5279
    %v5306 = vadd.f32 %v5250, %v5279
    %v5307 = vadd.f32 %v5251, %v5284
    %v5308 = vadd.f32 %v5252, %v5284
    %v5309 = vadd.f32 %v5253, %v5284
    %v5310 = vadd.f32 %v5254, %v5284
    %v5311 = vadd.f32 %v5255, %v5284
    %v5312 = vadd.f32 %v5256, %v5284
    %v5313 = vadd.f32 %v5257, %v5284
    %v5314 = vadd.f32 %v5258, %v5284
    %v5315 = vadd.f32 %v5259, %v5289
    %v5316 = vadd.f32 %v5260, %v5289
    %v5317 = vadd.f32 %v5261, %v5289
    %v5318 = vadd.f32 %v5262, %v5289
    %v5319 = vadd.f32 %v5263, %v5289
    %v5320 = vadd.f32 %v5264, %v5289
    %v5321 = vadd.f32 %v5265, %v5289
    %v5322 = vadd.f32 %v5266, %v5289
    %vm5323 = vcmp.ge.f32.partialorder %v5291, 0.0
    %vm5324 = vcmp.ge.f32.partialorder %v5292, 0.0
    %vm5325 = vcmp.ge.f32.partialorder %v5293, 0.0
    %vm5326 = vcmp.ge.f32.partialorder %v5294, 0.0
    %vm5327 = vcmp.ge.f32.partialorder %v5295, 0.0
    %vm5328 = vcmp.ge.f32.partialorder %v5296, 0.0
    %vm5329 = vcmp.ge.f32.partialorder %v5297, 0.0
    %vm5330 = vcmp.ge.f32.partialorder %v5298, 0.0
    %vm5331 = vcmp.ge.f32.partialorder %v5299, 0.0
    %vm5332 = vcmp.ge.f32.partialorder %v5300, 0.0
    %vm5333 = vcmp.ge.f32.partialorder %v5301, 0.0
    %vm5334 = vcmp.ge.f32.partialorder %v5302, 0.0
    %vm5335 = vcmp.ge.f32.partialorder %v5303, 0.0
    %vm5336 = vcmp.ge.f32.partialorder %v5304, 0.0
    %vm5337 = vcmp.ge.f32.partialorder %v5305, 0.0
    %vm5338 = vcmp.ge.f32.partialorder %v5306, 0.0
    %vm5339 = vcmp.ge.f32.partialorder %v5307, 0.0
    %vm5340 = vcmp.ge.f32.partialorder %v5308, 0.0
    %vm5341 = vcmp.ge.f32.partialorder %v5309, 0.0
    %vm5342 = vcmp.ge.f32.partialorder %v5310, 0.0
    %vm5343 = vcmp.ge.f32.partialorder %v5311, 0.0
    %vm5344 = vcmp.ge.f32.partialorder %v5312, 0.0
    %vm5345 = vcmp.ge.f32.partialorder %v5313, 0.0
    %vm5346 = vcmp.ge.f32.partialorder %v5314, 0.0
    %vm5347 = vcmp.ge.f32.partialorder %v5315, 0.0
    %vm5348 = vcmp.ge.f32.partialorder %v5316, 0.0
    %vm5349 = vcmp.ge.f32.partialorder %v5317, 0.0
    %vm5350 = vcmp.ge.f32.partialorder %v5318, 0.0
    %vm5351 = vcmp.ge.f32.partialorder %v5319, 0.0
    %vm5352 = vcmp.ge.f32.partialorder %v5320, 0.0
    %vm5353 = vcmp.ge.f32.partialorder %v5321, 0.0
    %vm5354 = vcmp.ge.f32.partialorder %v5322, 0.0
    %v5355 = vmul.f32 %v5291, 0.3
    %v5356 = vmul.f32 %v5292, 0.3
    %v5357 = vmul.f32 %v5293, 0.3
    %v5358 = vmul.f32 %v5294, 0.3
    %v5359 = vmul.f32 %v5295, 0.3
    %v5360 = vmul.f32 %v5296, 0.3
    %v5361 = vmul.f32 %v5297, 0.3
    %v5362 = vmul.f32 %v5298, 0.3
    %v5363 = vmul.f32 %v5299, 0.3
    %v5364 = vmul.f32 %v5300, 0.3
    %v5365 = vmul.f32 %v5301, 0.3
    %v5366 = vmul.f32 %v5302, 0.3
    %v5367 = vmul.f32 %v5303, 0.3
    %v5368 = vmul.f32 %v5304, 0.3
    %v5369 = vmul.f32 %v5305, 0.3
    %v5370 = vmul.f32 %v5306, 0.3
    %v5371 = vmul.f32 %v5307, 0.3
    %v5372 = vmul.f32 %v5308, 0.3
    %v5373 = vmul.f32 %v5309, 0.3
    %v5374 = vmul.f32 %v5310, 0.3
    %v5375 = vmul.f32 %v5311, 0.3
    %v5376 = vmul.f32 %v5312, 0.3
    %v5377 = vmul.f32 %v5313, 0.3
    %v5378 = vmul.f32 %v5314, 0.3
    %v5379 = vmul.f32 %v5315, 0.3
    %v5380 = vmul.f32 %v5316, 0.3
    %v5381 = vmul.f32 %v5317, 0.3
    %v5382 = vmul.f32 %v5318, 0.3
    %v5383 = vmul.f32 %v5319, 0.3
    %v5384 = vmul.f32 %v5320, 0.3
    %v5385 = vmul.f32 %v5321, 0.3
    %v5386 = vmul.f32 %v5322, 0.3
    %v5387 = vsel %vm5323, %v5291, %v5355
    %v5388 = vsel %vm5324, %v5292, %v5356
    %v5389 = vsel %vm5325, %v5293, %v5357
    %v5390 = vsel %vm5326, %v5294, %v5358
    %v5391 = vsel %vm5327, %v5295, %v5359
    %v5392 = vsel %vm5328, %v5296, %v5360
    %v5393 = vsel %vm5329, %v5297, %v5361
    %v5394 = vsel %vm5330, %v5298, %v5362
    %v5395 = vsel %vm5331, %v5299, %v5363
    %v5396 = vsel %vm5332, %v5300, %v5364
    %v5397 = vsel %vm5333, %v5301, %v5365
    %v5398 = vsel %vm5334, %v5302, %v5366
    %v5399 = vsel %vm5335, %v5303, %v5367
    %v5400 = vsel %vm5336, %v5304, %v5368
    %v5401 = vsel %vm5337, %v5305, %v5369
    %v5402 = vsel %vm5338, %v5306, %v5370
    %v5403 = vsel %vm5339, %v5307, %v5371
    %v5404 = vsel %vm5340, %v5308, %v5372
    %v5405 = vsel %vm5341, %v5309, %v5373
    %v5406 = vsel %vm5342, %v5310, %v5374
    %v5407 = vsel %vm5343, %v5311, %v5375
    %v5408 = vsel %vm5344, %v5312, %v5376
    %v5409 = vsel %vm5345, %v5313, %v5377
    %v5410 = vsel %vm5346, %v5314, %v5378
    %v5411 = vsel %vm5347, %v5315, %v5379
    %v5412 = vsel %vm5348, %v5316, %v5380
    %v5413 = vsel %vm5349, %v5317, %v5381
    %v5414 = vsel %vm5350, %v5318, %v5382
    %v5415 = vsel %vm5351, %v5319, %v5383
    %v5416 = vsel %vm5352, %v5320, %v5384
    %v5417 = vsel %vm5353, %v5321, %v5385
    %v5418 = vsel %vm5354, %v5322, %v5386
    %5451 = vrot.lane.b32.xlu0 %v5387, 127
    %v5452 = vpop.permute.xlu0 %5451
    %5453 = vrot.lane.b32.xlu0 %v5388, 127
    %v5454 = vpop.permute.xlu0 %5453
    %5455 = vrot.lane.b32.xlu0 %v5389, 127
    %v5456 = vpop.permute.xlu0 %5455
    %5457 = vrot.lane.b32.xlu0 %v5390, 127
    %v5458 = vpop.permute.xlu0 %5457
    %5459 = vrot.lane.b32.xlu0 %v5391, 127
    %v5460 = vpop.permute.xlu0 %5459
    %5461 = vrot.lane.b32.xlu0 %v5392, 127
    %v5462 = vpop.permute.xlu0 %5461
    %5463 = vrot.lane.b32.xlu0 %v5393, 127
    %v5464 = vpop.permute.xlu0 %5463
    %5465 = vrot.lane.b32.xlu0 %v5394, 127
    %v5466 = vpop.permute.xlu0 %5465
    %5467 = vrot.lane.b32.xlu0 %v5395, 127
    %v5468 = vpop.permute.xlu0 %5467
    %5469 = vrot.lane.b32.xlu0 %v5396, 127
    %v5470 = vpop.permute.xlu0 %5469
    %5471 = vrot.lane.b32.xlu0 %v5397, 127
    %v5472 = vpop.permute.xlu0 %5471
    %5473 = vrot.lane.b32.xlu0 %v5398, 127
    %v5474 = vpop.permute.xlu0 %5473
    %5475 = vrot.lane.b32.xlu0 %v5399, 127
    %v5476 = vpop.permute.xlu0 %5475
    %5477 = vrot.lane.b32.xlu0 %v5400, 127
    %v5478 = vpop.permute.xlu0 %5477
    %5479 = vrot.lane.b32.xlu0 %v5401, 127
    %v5480 = vpop.permute.xlu0 %5479
    %5481 = vrot.lane.b32.xlu0 %v5402, 127
    %v5482 = vpop.permute.xlu0 %5481
    %5483 = vrot.lane.b32.xlu0 %v5403, 127
    %v5484 = vpop.permute.xlu0 %5483
    %5485 = vrot.lane.b32.xlu0 %v5404, 127
    %v5486 = vpop.permute.xlu0 %5485
    %5487 = vrot.lane.b32.xlu0 %v5405, 127
    %v5488 = vpop.permute.xlu0 %5487
    %5489 = vrot.lane.b32.xlu0 %v5406, 127
    %v5490 = vpop.permute.xlu0 %5489
    %5491 = vrot.lane.b32.xlu0 %v5407, 127
    %v5492 = vpop.permute.xlu0 %5491
    %5493 = vrot.lane.b32.xlu0 %v5408, 127
    %v5494 = vpop.permute.xlu0 %5493
    %5495 = vrot.lane.b32.xlu0 %v5409, 127
    %v5496 = vpop.permute.xlu0 %5495
    %5497 = vrot.lane.b32.xlu0 %v5410, 127
    %v5498 = vpop.permute.xlu0 %5497
    %5499 = vrot.lane.b32.xlu0 %v5411, 127
    %v5500 = vpop.permute.xlu0 %5499
    %5501 = vrot.lane.b32.xlu0 %v5412, 127
    %v5502 = vpop.permute.xlu0 %5501
    %5503 = vrot.lane.b32.xlu0 %v5413, 127
    %v5504 = vpop.permute.xlu0 %5503
    %5505 = vrot.lane.b32.xlu0 %v5414, 127
    %v5506 = vpop.permute.xlu0 %5505
    %5507 = vrot.lane.b32.xlu0 %v5415, 127
    %v5508 = vpop.permute.xlu0 %5507
    %5509 = vrot.lane.b32.xlu0 %v5416, 127
    %v5510 = vpop.permute.xlu0 %5509
    %5511 = vrot.lane.b32.xlu0 %v5417, 127
    %v5512 = vpop.permute.xlu0 %5511
    %5513 = vrot.lane.b32.xlu0 %v5418, 127
    %v5514 = vpop.permute.xlu0 %5513
    %v5515 = vsel %vm116, %v5452, %v5454
    %v5516 = vsel %vm116, %v5454, %v5456
    %v5517 = vsel %vm116, %v5456, %v5458
    %v5518 = vsel %vm116, %v5458, %v5460
    %v5519 = vsel %vm116, %v5460, %v5462
    %v5520 = vsel %vm116, %v5462, %v5464
    %v5521 = vsel %vm116, %v5464, %v5466
    %v5522 = vsel %vm116, %v5468, %v5470
    %v5523 = vsel %vm116, %v5470, %v5472
    %v5524 = vsel %vm116, %v5472, %v5474
    %v5525 = vsel %vm116, %v5474, %v5476
    %v5526 = vsel %vm116, %v5476, %v5478
    %v5527 = vsel %vm116, %v5478, %v5480
    %v5528 = vsel %vm116, %v5480, %v5482
    %v5529 = vsel %vm116, %v5484, %v5486
    %v5530 = vsel %vm116, %v5486, %v5488
    %v5531 = vsel %vm116, %v5488, %v5490
    %v5532 = vsel %vm116, %v5490, %v5492
    %v5533 = vsel %vm116, %v5492, %v5494
    %v5534 = vsel %vm116, %v5494, %v5496
    %v5535 = vsel %vm116, %v5496, %v5498
    %v5536 = vsel %vm116, %v5500, %v5502
    %v5537 = vsel %vm116, %v5502, %v5504
    %v5538 = vsel %vm116, %v5504, %v5506
    %v5539 = vsel %vm116, %v5506, %v5508
    %v5540 = vsel %vm116, %v5508, %v5510
    %v5541 = vsel %vm116, %v5510, %v5512
    %v5542 = vsel %vm116, %v5512, %v5514
    %v5575 = vmax.f32 %v5387, %v5515
    %v5576 = vmax.f32 %v5388, %v5516
    %v5577 = vmax.f32 %v5389, %v5517
    %v5578 = vmax.f32 %v5390, %v5518
    %v5579 = vmax.f32 %v5391, %v5519
    %v5580 = vmax.f32 %v5392, %v5520
    %v5581 = vmax.f32 %v5393, %v5521
    %v5582 = vmax.f32 %v5394, %v5466
    %v5583 = vmax.f32 %v5395, %v5522
    %v5584 = vmax.f32 %v5396, %v5523
    %v5585 = vmax.f32 %v5397, %v5524
    %v5586 = vmax.f32 %v5398, %v5525
    %v5587 = vmax.f32 %v5399, %v5526
    %v5588 = vmax.f32 %v5400, %v5527
    %v5589 = vmax.f32 %v5401, %v5528
    %v5590 = vmax.f32 %v5402, %v5482
    %v5591 = vmax.f32 %v5403, %v5529
    %v5592 = vmax.f32 %v5404, %v5530
    %v5593 = vmax.f32 %v5405, %v5531
    %v5594 = vmax.f32 %v5406, %v5532
    %v5595 = vmax.f32 %v5407, %v5533
    %v5596 = vmax.f32 %v5408, %v5534
    %v5597 = vmax.f32 %v5409, %v5535
    %v5598 = vmax.f32 %v5410, %v5498
    %v5599 = vmax.f32 %v5411, %v5536
    %v5600 = vmax.f32 %v5412, %v5537
    %v5601 = vmax.f32 %v5413, %v5538
    %v5602 = vmax.f32 %v5414, %v5539
    %v5603 = vmax.f32 %v5415, %v5540
    %v5604 = vmax.f32 %v5416, %v5541
    %v5605 = vmax.f32 %v5417, %v5542
    %v5606 = vmax.f32 %v5418, %v5514
    %5639 = vrot.lane.b32.xlu0 %v5575, 126
    %v5640 = vpop.permute.xlu0 %5639
    %5641 = vrot.lane.b32.xlu0 %v5576, 126
    %v5642 = vpop.permute.xlu0 %5641
    %5643 = vrot.lane.b32.xlu0 %v5577, 126
    %v5644 = vpop.permute.xlu0 %5643
    %5645 = vrot.lane.b32.xlu0 %v5578, 126
    %v5646 = vpop.permute.xlu0 %5645
    %5647 = vrot.lane.b32.xlu0 %v5579, 126
    %v5648 = vpop.permute.xlu0 %5647
    %5649 = vrot.lane.b32.xlu0 %v5580, 126
    %v5650 = vpop.permute.xlu0 %5649
    %5651 = vrot.lane.b32.xlu0 %v5581, 126
    %v5652 = vpop.permute.xlu0 %5651
    %5653 = vrot.lane.b32.xlu0 %v5582, 126
    %v5654 = vpop.permute.xlu0 %5653
    %5655 = vrot.lane.b32.xlu0 %v5583, 126
    %v5656 = vpop.permute.xlu0 %5655
    %5657 = vrot.lane.b32.xlu0 %v5584, 126
    %v5658 = vpop.permute.xlu0 %5657
    %5659 = vrot.lane.b32.xlu0 %v5585, 126
    %v5660 = vpop.permute.xlu0 %5659
    %5661 = vrot.lane.b32.xlu0 %v5586, 126
    %v5662 = vpop.permute.xlu0 %5661
    %5663 = vrot.lane.b32.xlu0 %v5587, 126
    %v5664 = vpop.permute.xlu0 %5663
    %5665 = vrot.lane.b32.xlu0 %v5588, 126
    %v5666 = vpop.permute.xlu0 %5665
    %5667 = vrot.lane.b32.xlu0 %v5589, 126
    %v5668 = vpop.permute.xlu0 %5667
    %5669 = vrot.lane.b32.xlu0 %v5590, 126
    %v5670 = vpop.permute.xlu0 %5669
    %5671 = vrot.lane.b32.xlu0 %v5591, 126
    %v5672 = vpop.permute.xlu0 %5671
    %5673 = vrot.lane.b32.xlu0 %v5592, 126
    %v5674 = vpop.permute.xlu0 %5673
    %5675 = vrot.lane.b32.xlu0 %v5593, 126
    %v5676 = vpop.permute.xlu0 %5675
    %5677 = vrot.lane.b32.xlu0 %v5594, 126
    %v5678 = vpop.permute.xlu0 %5677
    %5679 = vrot.lane.b32.xlu0 %v5595, 126
    %v5680 = vpop.permute.xlu0 %5679
    %5681 = vrot.lane.b32.xlu0 %v5596, 126
    %v5682 = vpop.permute.xlu0 %5681
    %5683 = vrot.lane.b32.xlu0 %v5597, 126
    %v5684 = vpop.permute.xlu0 %5683
    %5685 = vrot.lane.b32.xlu0 %v5598, 126
    %v5686 = vpop.permute.xlu0 %5685
    %5687 = vrot.lane.b32.xlu0 %v5599, 126
    %v5688 = vpop.permute.xlu0 %5687
    %5689 = vrot.lane.b32.xlu0 %v5600, 126
    %v5690 = vpop.permute.xlu0 %5689
    %5691 = vrot.lane.b32.xlu0 %v5601, 126
    %v5692 = vpop.permute.xlu0 %5691
    %5693 = vrot.lane.b32.xlu0 %v5602, 126
    %v5694 = vpop.permute.xlu0 %5693
    %5695 = vrot.lane.b32.xlu0 %v5603, 126
    %v5696 = vpop.permute.xlu0 %5695
    %5697 = vrot.lane.b32.xlu0 %v5604, 126
    %v5698 = vpop.permute.xlu0 %5697
    %5699 = vrot.lane.b32.xlu0 %v5605, 126
    %v5700 = vpop.permute.xlu0 %5699
    %5701 = vrot.lane.b32.xlu0 %v5606, 126
    %v5702 = vpop.permute.xlu0 %5701
    %v5703 = vsel %vm179, %v5640, %v5642
    %v5704 = vsel %vm179, %v5642, %v5644
    %v5705 = vsel %vm179, %v5644, %v5646
    %v5706 = vsel %vm179, %v5646, %v5648
    %v5707 = vsel %vm179, %v5648, %v5650
    %v5708 = vsel %vm179, %v5650, %v5652
    %v5709 = vsel %vm179, %v5652, %v5654
    %v5710 = vsel %vm179, %v5656, %v5658
    %v5711 = vsel %vm179, %v5658, %v5660
    %v5712 = vsel %vm179, %v5660, %v5662
    %v5713 = vsel %vm179, %v5662, %v5664
    %v5714 = vsel %vm179, %v5664, %v5666
    %v5715 = vsel %vm179, %v5666, %v5668
    %v5716 = vsel %vm179, %v5668, %v5670
    %v5717 = vsel %vm179, %v5672, %v5674
    %v5718 = vsel %vm179, %v5674, %v5676
    %v5719 = vsel %vm179, %v5676, %v5678
    %v5720 = vsel %vm179, %v5678, %v5680
    %v5721 = vsel %vm179, %v5680, %v5682
    %v5722 = vsel %vm179, %v5682, %v5684
    %v5723 = vsel %vm179, %v5684, %v5686
    %v5724 = vsel %vm179, %v5688, %v5690
    %v5725 = vsel %vm179, %v5690, %v5692
    %v5726 = vsel %vm179, %v5692, %v5694
    %v5727 = vsel %vm179, %v5694, %v5696
    %v5728 = vsel %vm179, %v5696, %v5698
    %v5729 = vsel %vm179, %v5698, %v5700
    %v5730 = vsel %vm179, %v5700, %v5702
    %v5763 = vmax.f32 %v5575, %v5703
    %v5764 = vmax.f32 %v5576, %v5704
    %v5765 = vmax.f32 %v5577, %v5705
    %v5766 = vmax.f32 %v5578, %v5706
    %v5767 = vmax.f32 %v5579, %v5707
    %v5768 = vmax.f32 %v5580, %v5708
    %v5769 = vmax.f32 %v5581, %v5709
    %v5770 = vmax.f32 %v5582, %v5654
    %v5771 = vmax.f32 %v5583, %v5710
    %v5772 = vmax.f32 %v5584, %v5711
    %v5773 = vmax.f32 %v5585, %v5712
    %v5774 = vmax.f32 %v5586, %v5713
    %v5775 = vmax.f32 %v5587, %v5714
    %v5776 = vmax.f32 %v5588, %v5715
    %v5777 = vmax.f32 %v5589, %v5716
    %v5778 = vmax.f32 %v5590, %v5670
    %v5779 = vmax.f32 %v5591, %v5717
    %v5780 = vmax.f32 %v5592, %v5718
    %v5781 = vmax.f32 %v5593, %v5719
    %v5782 = vmax.f32 %v5594, %v5720
    %v5783 = vmax.f32 %v5595, %v5721
    %v5784 = vmax.f32 %v5596, %v5722
    %v5785 = vmax.f32 %v5597, %v5723
    %v5786 = vmax.f32 %v5598, %v5686
    %v5787 = vmax.f32 %v5599, %v5724
    %v5788 = vmax.f32 %v5600, %v5725
    %v5789 = vmax.f32 %v5601, %v5726
    %v5790 = vmax.f32 %v5602, %v5727
    %v5791 = vmax.f32 %v5603, %v5728
    %v5792 = vmax.f32 %v5604, %v5729
    %v5793 = vmax.f32 %v5605, %v5730
    %v5794 = vmax.f32 %v5606, %v5702
    %v5795 = vpack.c.bf16 %v5764, %v5763
    %v5796 = vpack.c.bf16 %v5766, %v5765
    %v5797 = vpack.c.bf16 %v5768, %v5767
    %v5798 = vpack.c.bf16 %v5770, %v5769
    %v5799 = vpack.c.bf16 %v5772, %v5771
    %v5800 = vpack.c.bf16 %v5774, %v5773
    %v5801 = vpack.c.bf16 %v5776, %v5775
    %v5802 = vpack.c.bf16 %v5778, %v5777
    %v5803 = vpack.c.bf16 %v5780, %v5779
    %v5804 = vpack.c.bf16 %v5782, %v5781
    %v5805 = vpack.c.bf16 %v5784, %v5783
    %v5806 = vpack.c.bf16 %v5786, %v5785
    %v5807 = vpack.c.bf16 %v5788, %v5787
    %v5808 = vpack.c.bf16 %v5790, %v5789
    %v5809 = vpack.c.bf16 %v5792, %v5791
    %v5810 = vpack.c.bf16 %v5794, %v5793
    %s5811 = scalar_lea.vmem [#allocation2], 128
    %5812 = vst [vmem:[%s5811] sm:$0xff] %v5795
    %5813 = vst [vmem:[%s5811 + $0x8] sm:$0xff] %v5796
    %5814 = vst [vmem:[%s5811 + $0x10] sm:$0xff] %v5797
    %5815 = vst.msk [vmem:[%s5811 + $0x18] sm:$0xff] %vm2928, %v5798
    %5816 = vst [vmem:[%s5811 + $0x20] sm:$0xff] %v5799
    %5817 = vst [vmem:[%s5811 + $0x28] sm:$0xff] %v5800
    %5818 = vst [vmem:[%s5811 + $0x30] sm:$0xff] %v5801
    %5819 = vst.msk [vmem:[%s5811 + $0x38] sm:$0xff] %vm2928, %v5802
    %5820 = vst [vmem:[%s5811 + $0x40] sm:$0xff] %v5803
    %5821 = vst [vmem:[%s5811 + $0x48] sm:$0xff] %v5804
    %5822 = vst [vmem:[%s5811 + $0x50] sm:$0xff] %v5805
    %5823 = vst.msk [vmem:[%s5811 + $0x58] sm:$0xff] %vm2928, %v5806
    %5824 = vst [vmem:[%s5811 + $0x60] sm:$0xff] %v5807
    %5825 = vst [vmem:[%s5811 + $0x68] sm:$0xff] %v5808
    %5826 = vst [vmem:[%s5811 + $0x70] sm:$0xff] %v5809
    %5827 = vst.msk [vmem:[%s5811 + $0x78] sm:$0xff] %vm2928, %v5810
    // Predicated region
    $region54: #{tpu_custom_call.1} parent=1 // pred_check
      _
    $region55: #{tpu_custom_call.1} parent=1 // pred_check_branch
      %5829 = sbr.rel (0) target = $region57
    $region56: #{tpu_custom_call.1} parent=1 // pred_region
      %5831 = vsyncadd [#allocation3], 0
      %s5832 = sshll.u32 [#allocation2], 4
      %s5833 = int_to_ptr.vmem [resolvable:$true] %s5832
      %s5834 = sshll.u32 %s13, 4
      %s5835 = int_to_ptr.hbm [resolvable:$true] %s5834
      %5840 = dma.vmem_to_hbm [thread:$0]  %s5833, 4096, %s5835, [#allocation3], 512, 512, 32
    $region57: #{tpu_custom_call.1} parent=1 // pred_fallthru
      _
    // Predicated region
    $region58: #{tpu_custom_call.1} parent=1 // pred_check
      _
    $region59: #{tpu_custom_call.1} parent=1 // pred_check_branch
      %5842 = sbr.rel (0) target = $region61
    $region60: #{tpu_custom_call.1} parent=1 // pred_region
      %5844 = dma.done [#allocation3], 4096
    $region61: #{tpu_custom_call.1} parent=1 // pred_fallthru
      _
    %5845 = vsyncpa [#allocation3], 1

</llo_original>
